<compile_context>
chip_gen: v7x
topology: tpu7x:2x2x1
jax: 0.10.0
libtpu: 0.0.40
codegen_flags: <defaults>
</compile_context>

<pallas_src>
import jax
import jax.numpy as jnp
from jax.experimental import pallas as pl
from jax.experimental.pallas import tpu as pltpu  # noqa: F401  (kept for TPU-specific extensions)

# --- small BERT-like config (bert-base shrunk) ------------------------------
B, S = 2, 8            # batch, sequence length
H = 32                 # hidden size
NH = 4                 # attention heads
DH = H // NH           # per-head dim
I = 64                 # FFN intermediate size
N_LAYERS = 2
VOCAB = 100
PAD_ID = 0             # tokenizer.pad_token_id
LN_EPS = 1e-12
Q_SCALE = float(DH) ** -0.5


def _layernorm(x, gamma, beta):
    mu = jnp.mean(x, axis=-1, keepdims=True)
    var = jnp.mean((x - mu) ** 2, axis=-1, keepdims=True)
    return (x - mu) * jax.lax.rsqrt(var + LN_EPS) * gamma + beta


# --- fused encoder kernel ----------------------------------------------------
def bert_encoder_kernel(emb_ref, mask_ref, eg_ref, eb_ref,
                        wqkv_ref, bqkv_ref, wo_ref, bo_ref,
                        g1_ref, be1_ref, w1_ref, b1_ref, w2_ref, b2_ref,
                        g2_ref, be2_ref, o_ref):
    f32 = jnp.float32
    bf16 = jnp.bfloat16
    BS = B * S

    # Embedding LayerNorm into the live residual stream (2-D [B*S, H]).
    x = _layernorm(emb_ref[...].astype(f32), eg_ref[...], eb_ref[...])

    # Additive pad mask, hoisted once: [B, S] -> [B, 1, 1, S].
    addm4 = mask_ref[...][:, None, None, :]

    # Static loop over layers (N_LAYERS=2); stacked weights selected with
    # cheap leading-dim ref indexing.
    for l in range(N_LAYERS):
        xb = x.astype(bf16)

        # --- fused QKV projection: one [B*S, H] x [H, 3H] MXU matmul -------
        qkv = jnp.dot(xb, wqkv_ref[l], preferred_element_type=f32) + bqkv_ref[l]
        q3 = (qkv[:, 0:H] * Q_SCALE).reshape(B, S, H).astype(bf16)   # scale after bias
        k3 = qkv[:, H:2 * H].reshape(B, S, H).astype(bf16)
        v3 = qkv[:, 2 * H:3 * H].reshape(B, S, H).astype(bf16)

        # --- attention scores for all heads, stacked -> ONE softmax --------
        s = jnp.stack(
            [jnp.einsum('bqd,bkd->bqk',
                        q3[:, :, h * DH:(h + 1) * DH],
                        k3[:, :, h * DH:(h + 1) * DH],
                        preferred_element_type=f32)
             for h in range(NH)], axis=1)                            # [B, NH, S, S]
        s = s + addm4
        s = s - jnp.max(s, axis=-1, keepdims=True)
        p = jnp.exp(s)
        p = p * pl.reciprocal(jnp.sum(p, axis=-1, keepdims=True), approx=True)
        pb = p.astype(bf16)

        # --- per-head context, merged along hidden, ONE fused Wo matmul ----
        ctx = jnp.concatenate(
            [jnp.einsum('bqk,bkd->bqd', pb[:, h],
                        v3[:, :, h * DH:(h + 1) * DH],
                        preferred_element_type=f32)
             for h in range(NH)], axis=-1)                           # [B, S, H]
        attn = jnp.dot(ctx.reshape(BS, H).astype(bf16), wo_ref[l],
                       preferred_element_type=f32) + bo_ref[l]

        x1 = _layernorm(x + attn, g1_ref[l], be1_ref[l])             # post-LN #1

        # --- feed-forward ---------------------------------------------------
        hid = jnp.dot(x1.astype(bf16), w1_ref[l],
                      preferred_element_type=f32) + b1_ref[l]
        hid = jax.nn.gelu(hid, approximate=True)                     # tanh GELU -> EUP
        ffn = jnp.dot(hid.astype(bf16), w2_ref[l],
                      preferred_element_type=f32) + b2_ref[l]
        x = _layernorm(x1 + ffn, g2_ref[l], be2_ref[l])              # post-LN #2

    # TODO(synk): at scaled-up S/H, pack the writeback lane-dense (last dim a
    # multiple of 128) to avoid masked vst; at [16, 32] the win is negligible.
    o_ref[...] = x.astype(o_ref.dtype)


# --- wrapper -----------------------------------------------------------------
def bert_encoder(emb2d, addmask, p):
    # Grid-less pallas_call: all operands are tiny (<64 KiB total) and live as
    # whole arrays in VMEM; the layer loop runs inside the kernel.
    return pl.pallas_call(
        bert_encoder_kernel,
        out_shape=jax.ShapeDtypeStruct((B * S, H), jnp.float32),
    )(emb2d, addmask, p['emb_ln_g'], p['emb_ln_b'],
      p['wqkv'], p['bqkv'], p['wo'], p['bo'],
      p['ln1_g'], p['ln1_b'], p['w1'], p['b1'], p['w2'], p['b2'],
      p['ln2_g'], p['ln2_b'])


def init_params(key):
    ks = jax.random.split(key, 10)
    scale = 0.02
    L = N_LAYERS

    def nrm(k, shape):
        return scale * jax.random.normal(k, shape, dtype=jnp.float32)

    wq = nrm(ks[3], (L, H, H))
    wk = nrm(ks[4], (L, H, H))
    wv = nrm(ks[5], (L, H, H))
    wqkv = jnp.concatenate([wq, wk, wv], axis=-1)        # fused [L, H, 3H]

    return {
        'word_emb': nrm(ks[0], (VOCAB, H)),
        'pos_emb':  nrm(ks[1], (S, H)),
        'type_emb': nrm(ks[2], (2, H)),
        'emb_ln_g': jnp.ones((1, H), jnp.float32),
        'emb_ln_b': jnp.zeros((1, H), jnp.float32),
        'wqkv': wqkv.astype(jnp.bfloat16),
        'bqkv': jnp.zeros((L, 1, 3 * H), jnp.float32),
        'wo': nrm(ks[6], (L, H, H)).astype(jnp.bfloat16),
        'bo': jnp.zeros((L, 1, H), jnp.float32),
        'ln1_g': jnp.ones((L, 1, H), jnp.float32),
        'ln1_b': jnp.zeros((L, 1, H), jnp.float32),
        'w1': nrm(ks[7], (L, H, I)).astype(jnp.bfloat16),
        'b1': jnp.zeros((L, 1, I), jnp.float32),
        'w2': nrm(ks[8], (L, I, H)).astype(jnp.bfloat16),
        'b2': jnp.zeros((L, 1, H), jnp.float32),
        'ln2_g': jnp.ones((L, 1, H), jnp.float32),
        'ln2_b': jnp.zeros((L, 1, H), jnp.float32),
    }


def _embed(tokens, params):
    # TODO(synk): embedding-table gather stays as plain JAX glue (no clean
    # Pallas equivalent needed for a gather at this size).
    return (jnp.take(params['word_emb'], tokens, axis=0)
            + params['pos_emb'][None, :, :]
            + params['type_emb'][0][None, None, :])                 # [B, S, H]


@jax.jit
def bert_forward(tokens, params):
    # attention_mask = (tokens != pad_token_id).float(); additive form for scores
    valid = (tokens != PAD_ID).astype(jnp.float32)                   # [B, S]
    addmask = (1.0 - valid) * jnp.float32(-10000.0)                  # [B, S]
    emb2d = _embed(tokens, params).reshape(B * S, H)                 # flatten outside (free)
    out2d = bert_encoder(emb2d, addmask, params)                     # [B*S, H]
    return out2d.reshape(B, S, H)                                    # last_hidden_state


def bert_reference(tokens, params):
    """Pure-JAX f32 reference mirroring the kernel math (exact softmax div)."""
    valid = (tokens != PAD_ID).astype(jnp.float32)
    addmask = (1.0 - valid) * jnp.float32(-10000.0)
    x = _embed(tokens, params).reshape(B * S, H)
    x = _layernorm(x, params['emb_ln_g'], params['emb_ln_b'])
    addm4 = addmask[:, None, None, :]
    for l in range(N_LAYERS):
        wqkv = params['wqkv'][l].astype(jnp.float32)
        qkv = x @ wqkv + params['bqkv'][l]
        q = (qkv[:, 0:H] * Q_SCALE).reshape(B, S, NH, DH)
        k = qkv[:, H:2 * H].reshape(B, S, NH, DH)
        v = qkv[:, 2 * H:3 * H].reshape(B, S, NH, DH)
        s = jnp.einsum('bqhd,bkhd->bhqk', q, k) + addm4
        p = jax.nn.softmax(s, axis=-1)
        ctx = jnp.einsum('bhqk,bkhd->bqhd', p, v).reshape(B * S, H)
        attn = ctx @ params['wo'][l].astype(jnp.float32) + params['bo'][l]
        x1 = _layernorm(x + attn, params['ln1_g'][l], params['ln1_b'][l])
        hid = jax.nn.gelu(x1 @ params['w1'][l].astype(jnp.float32)
                          + params['b1'][l], approximate=True)
        ffn = hid @ params['w2'][l].astype(jnp.float32) + params['b2'][l]
        x = _layernorm(x1 + ffn, params['ln2_g'][l], params['ln2_b'][l])
    return x.reshape(B, S, H)


if __name__ == "__main__":
    key = jax.random.PRNGKey(0)
    pkey, tkey = jax.random.split(key)
    params = init_params(pkey)

    # deterministic token ids with some PAD positions (so the mask matters)
    tokens = jax.random.randint(tkey, (B, S), 1, VOCAB, dtype=jnp.int32)
    tokens = tokens.at[1, 6:].set(PAD_ID)

    embds = bert_forward(tokens, params)
    jax.block_until_ready(embds)
    assert embds.shape == (B, S, H) and embds.dtype == jnp.float32
    assert bool(jnp.all(jnp.isfinite(embds)))

    ref = bert_reference(tokens, params)
    err = float(jnp.max(jnp.abs(embds - ref)))
    assert err < 0.1, f"kernel deviates from f32 reference: max|diff|={err}"

    print("KERNEL_OK")
</pallas_src>

<mosaic_0001>
module attributes {stable_mosaic.version = 11 : i64} {
  func.func @bert_encoder_kernel(%arg0: memref<16x32xf32, #tpu.memory_space<vmem>>, %arg1: memref<2x8xf32, #tpu.memory_space<vmem>>, %arg2: memref<1x32xf32, #tpu.memory_space<vmem>>, %arg3: memref<1x32xf32, #tpu.memory_space<vmem>>, %arg4: memref<2x32x96xbf16, #tpu.memory_space<vmem>>, %arg5: memref<2x1x96xf32, #tpu.memory_space<vmem>>, %arg6: memref<2x32x32xbf16, #tpu.memory_space<vmem>>, %arg7: memref<2x1x32xf32, #tpu.memory_space<vmem>>, %arg8: memref<2x1x32xf32, #tpu.memory_space<vmem>>, %arg9: memref<2x1x32xf32, #tpu.memory_space<vmem>>, %arg10: memref<2x32x64xbf16, #tpu.memory_space<vmem>>, %arg11: memref<2x1x64xf32, #tpu.memory_space<vmem>>, %arg12: memref<2x64x32xbf16, #tpu.memory_space<vmem>>, %arg13: memref<2x1x32xf32, #tpu.memory_space<vmem>>, %arg14: memref<2x1x32xf32, #tpu.memory_space<vmem>>, %arg15: memref<2x1x32xf32, #tpu.memory_space<vmem>>, %arg16: memref<16x32xf32, #tpu.memory_space<vmem>>) attributes {dimension_semantics = [], scalar_prefetch = 0 : i64, scratch_operands = 0 : i64, tpu.core_type = #tpu.core_type<tc>} {
    %c0 = arith.constant 0 : index
    %c0_0 = arith.constant 0 : index
    %0 = vector.load %arg0[%c0, %c0_0] : memref<16x32xf32, #tpu.memory_space<vmem>>, vector<16x32xf32>
    %c0_1 = arith.constant 0 : index
    %c0_2 = arith.constant 0 : index
    %1 = vector.load %arg2[%c0_1, %c0_2] : memref<1x32xf32, #tpu.memory_space<vmem>>, vector<1x32xf32>
    %c0_3 = arith.constant 0 : index
    %c0_4 = arith.constant 0 : index
    %2 = vector.load %arg3[%c0_3, %c0_4] : memref<1x32xf32, #tpu.memory_space<vmem>>, vector<1x32xf32>
    %cst = arith.constant dense<0.000000e+00> : vector<16xf32>
    %3 = vector.multi_reduction <add>, %0, %cst [1] : vector<16x32xf32> to vector<16xf32>
    %4 = vector.shape_cast %3 : vector<16xf32> to vector<16x1xf32>
    %cst_5 = arith.constant 3.200000e+01 : f32
    %5 = vector.broadcast %cst_5 : f32 to vector<16x1xf32>
    %6 = arith.divf %4, %5 : vector<16x1xf32>
    %7 = vector.broadcast %6 : vector<16x1xf32> to vector<16x32xf32>
    %8 = arith.subf %0, %7 : vector<16x32xf32>
    %9 = arith.mulf %8, %8 : vector<16x32xf32>
    %cst_6 = arith.constant dense<0.000000e+00> : vector<16xf32>
    %10 = vector.multi_reduction <add>, %9, %cst_6 [1] : vector<16x32xf32> to vector<16xf32>
    %11 = vector.shape_cast %10 : vector<16xf32> to vector<16x1xf32>
    %cst_7 = arith.constant 3.200000e+01 : f32
    %12 = vector.broadcast %cst_7 : f32 to vector<16x1xf32>
    %13 = arith.divf %11, %12 : vector<16x1xf32>
    %14 = vector.broadcast %6 : vector<16x1xf32> to vector<16x32xf32>
    %15 = arith.subf %0, %14 : vector<16x32xf32>
    %cst_8 = arith.constant 9.99999996E-13 : f32
    %16 = vector.broadcast %cst_8 : f32 to vector<16x1xf32>
    %17 = arith.addf %13, %16 : vector<16x1xf32>
    %18 = math.rsqrt %17 : vector<16x1xf32>
    %19 = vector.broadcast %18 : vector<16x1xf32> to vector<16x32xf32>
    %20 = arith.mulf %15, %19 : vector<16x32xf32>
    %21 = vector.broadcast %1 : vector<1x32xf32> to vector<16x32xf32>
    %22 = arith.mulf %20, %21 : vector<16x32xf32>
    %23 = vector.broadcast %2 : vector<1x32xf32> to vector<16x32xf32>
    %24 = arith.addf %22, %23 : vector<16x32xf32>
    %c0_9 = arith.constant 0 : index
    %c0_10 = arith.constant 0 : index
    %25 = vector.load %arg1[%c0_9, %c0_10] : memref<2x8xf32, #tpu.memory_space<vmem>>, vector<2x8xf32>
    %26 = vector.shape_cast %25 : vector<2x8xf32> to vector<2x1x1x8xf32>
    %27 = arith.truncf %24 : vector<16x32xf32> to vector<16x32xbf16>
    %c0_11 = arith.constant 0 : index
    %c0_12 = arith.constant 0 : index
    %c0_13 = arith.constant 0 : index
    %28 = vector.load %arg4[%c0_11, %c0_12, %c0_13] : memref<2x32x96xbf16, #tpu.memory_space<vmem>>, vector<1x32x96xbf16>
    %29 = vector.shape_cast %28 : vector<1x32x96xbf16> to vector<32x96xbf16>
    %cst_14 = arith.constant dense<0.000000e+00> : vector<16x96xf32>
    %30 = tpu.matmul %27, %29, %cst_14 {dimension_numbers = #tpu.dot_dimension_numbers<[1], [0], [0], [1], [0, 0, 1, 1], [], []>} : vector<16x32xbf16>, vector<32x96xbf16>, vector<16x96xf32> -> vector<16x96xf32>
    %c0_15 = arith.constant 0 : index
    %c0_16 = arith.constant 0 : index
    %c0_17 = arith.constant 0 : index
    %31 = vector.load %arg5[%c0_15, %c0_16, %c0_17] : memref<2x1x96xf32, #tpu.memory_space<vmem>>, vector<1x1x96xf32>
    %32 = vector.shape_cast %31 : vector<1x1x96xf32> to vector<1x96xf32>
    %33 = vector.broadcast %32 : vector<1x96xf32> to vector<16x96xf32>
    %34 = arith.addf %30, %33 : vector<16x96xf32>
    %35 = vector.extract_strided_slice %34 {offsets = [0, 0], sizes = [16, 32], strides = [1, 1]} : vector<16x96xf32> to vector<16x32xf32>
    %cst_18 = arith.constant 0.353553385 : f32
    %36 = vector.broadcast %cst_18 : f32 to vector<16x32xf32>
    %37 = arith.mulf %35, %36 : vector<16x32xf32>
    %38 = vector.shape_cast %37 : vector<16x32xf32> to vector<2x8x32xf32>
    %39 = arith.truncf %38 : vector<2x8x32xf32> to vector<2x8x32xbf16>
    %40 = vector.extract_strided_slice %34 {offsets = [0, 32], sizes = [16, 32], strides = [1, 1]} : vector<16x96xf32> to vector<16x32xf32>
    %41 = vector.shape_cast %40 : vector<16x32xf32> to vector<2x8x32xf32>
    %42 = arith.truncf %41 : vector<2x8x32xf32> to vector<2x8x32xbf16>
    %43 = vector.extract_strided_slice %34 {offsets = [0, 64], sizes = [16, 32], strides = [1, 1]} : vector<16x96xf32> to vector<16x32xf32>
    %44 = vector.shape_cast %43 : vector<16x32xf32> to vector<2x8x32xf32>
    %45 = arith.truncf %44 : vector<2x8x32xf32> to vector<2x8x32xbf16>
    %46 = vector.extract_strided_slice %39 {offsets = [0, 0, 0], sizes = [2, 8, 8], strides = [1, 1, 1]} : vector<2x8x32xbf16> to vector<2x8x8xbf16>
    %47 = vector.extract_strided_slice %42 {offsets = [0, 0, 0], sizes = [2, 8, 8], strides = [1, 1, 1]} : vector<2x8x32xbf16> to vector<2x8x8xbf16>
    "tpu.trace_start"() <{level = 10 : i32, message = "bqd,bkd->bqk"}> : () -> ()
    %cst_19 = arith.constant dense<0.000000e+00> : vector<2x8x8xf32>
    %48 = tpu.matmul %46, %47, %cst_19 {dimension_numbers = #tpu.dot_dimension_numbers<[2], [2], [1], [1], [0, 0, 0, 1, 1, 1], [0], [0]>} : vector<2x8x8xbf16>, vector<2x8x8xbf16>, vector<2x8x8xf32> -> vector<2x8x8xf32>
    "tpu.trace_stop"() : () -> ()
    %49 = vector.extract_strided_slice %39 {offsets = [0, 0, 8], sizes = [2, 8, 8], strides = [1, 1, 1]} : vector<2x8x32xbf16> to vector<2x8x8xbf16>
    %50 = vector.extract_strided_slice %42 {offsets = [0, 0, 8], sizes = [2, 8, 8], strides = [1, 1, 1]} : vector<2x8x32xbf16> to vector<2x8x8xbf16>
    "tpu.trace_start"() <{level = 10 : i32, message = "bqd,bkd->bqk"}> : () -> ()
    %cst_20 = arith.constant dense<0.000000e+00> : vector<2x8x8xf32>
    %51 = tpu.matmul %49, %50, %cst_20 {dimension_numbers = #tpu.dot_dimension_numbers<[2], [2], [1], [1], [0, 0, 0, 1, 1, 1], [0], [0]>} : vector<2x8x8xbf16>, vector<2x8x8xbf16>, vector<2x8x8xf32> -> vector<2x8x8xf32>
    "tpu.trace_stop"() : () -> ()
    %52 = vector.extract_strided_slice %39 {offsets = [0, 0, 16], sizes = [2, 8, 8], strides = [1, 1, 1]} : vector<2x8x32xbf16> to vector<2x8x8xbf16>
    %53 = vector.extract_strided_slice %42 {offsets = [0, 0, 16], sizes = [2, 8, 8], strides = [1, 1, 1]} : vector<2x8x32xbf16> to vector<2x8x8xbf16>
    "tpu.trace_start"() <{level = 10 : i32, message = "bqd,bkd->bqk"}> : () -> ()
    %cst_21 = arith.constant dense<0.000000e+00> : vector<2x8x8xf32>
    %54 = tpu.matmul %52, %53, %cst_21 {dimension_numbers = #tpu.dot_dimension_numbers<[2], [2], [1], [1], [0, 0, 0, 1, 1, 1], [0], [0]>} : vector<2x8x8xbf16>, vector<2x8x8xbf16>, vector<2x8x8xf32> -> vector<2x8x8xf32>
    "tpu.trace_stop"() : () -> ()
    %55 = vector.extract_strided_slice %39 {offsets = [0, 0, 24], sizes = [2, 8, 8], strides = [1, 1, 1]} : vector<2x8x32xbf16> to vector<2x8x8xbf16>
    %56 = vector.extract_strided_slice %42 {offsets = [0, 0, 24], sizes = [2, 8, 8], strides = [1, 1, 1]} : vector<2x8x32xbf16> to vector<2x8x8xbf16>
    "tpu.trace_start"() <{level = 10 : i32, message = "bqd,bkd->bqk"}> : () -> ()
    %cst_22 = arith.constant dense<0.000000e+00> : vector<2x8x8xf32>
    %57 = tpu.matmul %55, %56, %cst_22 {dimension_numbers = #tpu.dot_dimension_numbers<[2], [2], [1], [1], [0, 0, 0, 1, 1, 1], [0], [0]>} : vector<2x8x8xbf16>, vector<2x8x8xbf16>, vector<2x8x8xf32> -> vector<2x8x8xf32>
    "tpu.trace_stop"() : () -> ()
    %58 = vector.shape_cast %48 : vector<2x8x8xf32> to vector<2x1x8x8xf32>
    %59 = vector.shape_cast %51 : vector<2x8x8xf32> to vector<2x1x8x8xf32>
    %60 = vector.shape_cast %54 : vector<2x8x8xf32> to vector<2x1x8x8xf32>
    %61 = vector.shape_cast %57 : vector<2x8x8xf32> to vector<2x1x8x8xf32>
    %62 = tpu.concatenate %58, %59, %60, %61 in 1 : vector<2x1x8x8xf32>, vector<2x1x8x8xf32>, vector<2x1x8x8xf32>, vector<2x1x8x8xf32> -> vector<2x4x8x8xf32>
    %63 = vector.broadcast %26 : vector<2x1x1x8xf32> to vector<2x4x8x8xf32>
    %64 = arith.addf %62, %63 : vector<2x4x8x8xf32>
    %cst_23 = arith.constant dense<0xFF800000> : vector<2x4x8xf32>
    %65 = vector.multi_reduction <maximumf>, %64, %cst_23 [3] : vector<2x4x8x8xf32> to vector<2x4x8xf32>
    %66 = vector.shape_cast %65 : vector<2x4x8xf32> to vector<2x4x8x1xf32>
    %67 = vector.broadcast %66 : vector<2x4x8x1xf32> to vector<2x4x8x8xf32>
    %68 = arith.subf %64, %67 : vector<2x4x8x8xf32>
    %69 = math.exp %68 : vector<2x4x8x8xf32>
    %cst_24 = arith.constant dense<0.000000e+00> : vector<2x4x8xf32>
    %70 = vector.multi_reduction <add>, %69, %cst_24 [3] : vector<2x4x8x8xf32> to vector<2x4x8xf32>
    %71 = vector.shape_cast %70 : vector<2x4x8xf32> to vector<2x4x8x1xf32>
    %72 = tpu.reciprocal %71 {approx = true} : vector<2x4x8x1xf32> -> vector<2x4x8x1xf32>
    %73 = vector.broadcast %72 : vector<2x4x8x1xf32> to vector<2x4x8x8xf32>
    %74 = arith.mulf %69, %73 : vector<2x4x8x8xf32>
    %75 = arith.truncf %74 : vector<2x4x8x8xf32> to vector<2x4x8x8xbf16>
    %76 = vector.extract_strided_slice %75 {offsets = [0, 0, 0, 0], sizes = [2, 1, 8, 8], strides = [1, 1, 1, 1]} : vector<2x4x8x8xbf16> to vector<2x1x8x8xbf16>
    %77 = vector.shape_cast %76 : vector<2x1x8x8xbf16> to vector<2x8x8xbf16>
    %78 = vector.extract_strided_slice %45 {offsets = [0, 0, 0], sizes = [2, 8, 8], strides = [1, 1, 1]} : vector<2x8x32xbf16> to vector<2x8x8xbf16>
    "tpu.trace_start"() <{level = 10 : i32, message = "bqk,bkd->bqd"}> : () -> ()
    %cst_25 = arith.constant dense<0.000000e+00> : vector<2x8x8xf32>
    %79 = tpu.matmul %77, %78, %cst_25 {dimension_numbers = #tpu.dot_dimension_numbers<[2], [1], [1], [2], [0, 0, 0, 1, 1, 2], [0], [0]>} : vector<2x8x8xbf16>, vector<2x8x8xbf16>, vector<2x8x8xf32> -> vector<2x8x8xf32>
    "tpu.trace_stop"() : () -> ()
    %80 = vector.extract_strided_slice %75 {offsets = [0, 1, 0, 0], sizes = [2, 1, 8, 8], strides = [1, 1, 1, 1]} : vector<2x4x8x8xbf16> to vector<2x1x8x8xbf16>
    %81 = vector.shape_cast %80 : vector<2x1x8x8xbf16> to vector<2x8x8xbf16>
    %82 = vector.extract_strided_slice %45 {offsets = [0, 0, 8], sizes = [2, 8, 8], strides = [1, 1, 1]} : vector<2x8x32xbf16> to vector<2x8x8xbf16>
    "tpu.trace_start"() <{level = 10 : i32, message = "bqk,bkd->bqd"}> : () -> ()
    %cst_26 = arith.constant dense<0.000000e+00> : vector<2x8x8xf32>
    %83 = tpu.matmul %81, %82, %cst_26 {dimension_numbers = #tpu.dot_dimension_numbers<[2], [1], [1], [2], [0, 0, 0, 1, 1, 2], [0], [0]>} : vector<2x8x8xbf16>, vector<2x8x8xbf16>, vector<2x8x8xf32> -> vector<2x8x8xf32>
    "tpu.trace_stop"() : () -> ()
    %84 = vector.extract_strided_slice %75 {offsets = [0, 2, 0, 0], sizes = [2, 1, 8, 8], strides = [1, 1, 1, 1]} : vector<2x4x8x8xbf16> to vector<2x1x8x8xbf16>
    %85 = vector.shape_cast %84 : vector<2x1x8x8xbf16> to vector<2x8x8xbf16>
    %86 = vector.extract_strided_slice %45 {offsets = [0, 0, 16], sizes = [2, 8, 8], strides = [1, 1, 1]} : vector<2x8x32xbf16> to vector<2x8x8xbf16>
    "tpu.trace_start"() <{level = 10 : i32, message = "bqk,bkd->bqd"}> : () -> ()
    %cst_27 = arith.constant dense<0.000000e+00> : vector<2x8x8xf32>
    %87 = tpu.matmul %85, %86, %cst_27 {dimension_numbers = #tpu.dot_dimension_numbers<[2], [1], [1], [2], [0, 0, 0, 1, 1, 2], [0], [0]>} : vector<2x8x8xbf16>, vector<2x8x8xbf16>, vector<2x8x8xf32> -> vector<2x8x8xf32>
    "tpu.trace_stop"() : () -> ()
    %88 = vector.extract_strided_slice %75 {offsets = [0, 3, 0, 0], sizes = [2, 1, 8, 8], strides = [1, 1, 1, 1]} : vector<2x4x8x8xbf16> to vector<2x1x8x8xbf16>
    %89 = vector.shape_cast %88 : vector<2x1x8x8xbf16> to vector<2x8x8xbf16>
    %90 = vector.extract_strided_slice %45 {offsets = [0, 0, 24], sizes = [2, 8, 8], strides = [1, 1, 1]} : vector<2x8x32xbf16> to vector<2x8x8xbf16>
    "tpu.trace_start"() <{level = 10 : i32, message = "bqk,bkd->bqd"}> : () -> ()
    %cst_28 = arith.constant dense<0.000000e+00> : vector<2x8x8xf32>
    %91 = tpu.matmul %89, %90, %cst_28 {dimension_numbers = #tpu.dot_dimension_numbers<[2], [1], [1], [2], [0, 0, 0, 1, 1, 2], [0], [0]>} : vector<2x8x8xbf16>, vector<2x8x8xbf16>, vector<2x8x8xf32> -> vector<2x8x8xf32>
    "tpu.trace_stop"() : () -> ()
    %92 = tpu.concatenate %79, %83, %87, %91 in 2 : vector<2x8x8xf32>, vector<2x8x8xf32>, vector<2x8x8xf32>, vector<2x8x8xf32> -> vector<2x8x32xf32>
    %93 = vector.shape_cast %92 : vector<2x8x32xf32> to vector<16x32xf32>
    %94 = arith.truncf %93 : vector<16x32xf32> to vector<16x32xbf16>
    %c0_29 = arith.constant 0 : index
    %c0_30 = arith.constant 0 : index
    %c0_31 = arith.constant 0 : index
    %95 = vector.load %arg6[%c0_29, %c0_30, %c0_31] : memref<2x32x32xbf16, #tpu.memory_space<vmem>>, vector<1x32x32xbf16>
    %96 = vector.shape_cast %95 : vector<1x32x32xbf16> to vector<32x32xbf16>
    %cst_32 = arith.constant dense<0.000000e+00> : vector<16x32xf32>
    %97 = tpu.matmul %94, %96, %cst_32 {dimension_numbers = #tpu.dot_dimension_numbers<[1], [0], [0], [1], [0, 0, 1, 1], [], []>} : vector<16x32xbf16>, vector<32x32xbf16>, vector<16x32xf32> -> vector<16x32xf32>
    %c0_33 = arith.constant 0 : index
    %c0_34 = arith.constant 0 : index
    %c0_35 = arith.constant 0 : index
    %98 = vector.load %arg7[%c0_33, %c0_34, %c0_35] : memref<2x1x32xf32, #tpu.memory_space<vmem>>, vector<1x1x32xf32>
    %99 = vector.shape_cast %98 : vector<1x1x32xf32> to vector<1x32xf32>
    %100 = vector.broadcast %99 : vector<1x32xf32> to vector<16x32xf32>
    %101 = arith.addf %97, %100 : vector<16x32xf32>
    %102 = arith.addf %24, %101 : vector<16x32xf32>
    %c0_36 = arith.constant 0 : index
    %c0_37 = arith.constant 0 : index
    %c0_38 = arith.constant 0 : index
    %103 = vector.load %arg8[%c0_36, %c0_37, %c0_38] : memref<2x1x32xf32, #tpu.memory_space<vmem>>, vector<1x1x32xf32>
    %104 = vector.shape_cast %103 : vector<1x1x32xf32> to vector<1x32xf32>
    %c0_39 = arith.constant 0 : index
    %c0_40 = arith.constant 0 : index
    %c0_41 = arith.constant 0 : index
    %105 = vector.load %arg9[%c0_39, %c0_40, %c0_41] : memref<2x1x32xf32, #tpu.memory_space<vmem>>, vector<1x1x32xf32>
    %106 = vector.shape_cast %105 : vector<1x1x32xf32> to vector<1x32xf32>
    %cst_42 = arith.constant dense<0.000000e+00> : vector<16xf32>
    %107 = vector.multi_reduction <add>, %102, %cst_42 [1] : vector<16x32xf32> to vector<16xf32>
    %108 = vector.shape_cast %107 : vector<16xf32> to vector<16x1xf32>
    %cst_43 = arith.constant 3.200000e+01 : f32
    %109 = vector.broadcast %cst_43 : f32 to vector<16x1xf32>
    %110 = arith.divf %108, %109 : vector<16x1xf32>
    %111 = vector.broadcast %110 : vector<16x1xf32> to vector<16x32xf32>
    %112 = arith.subf %102, %111 : vector<16x32xf32>
    %113 = arith.mulf %112, %112 : vector<16x32xf32>
    %cst_44 = arith.constant dense<0.000000e+00> : vector<16xf32>
    %114 = vector.multi_reduction <add>, %113, %cst_44 [1] : vector<16x32xf32> to vector<16xf32>
    %115 = vector.shape_cast %114 : vector<16xf32> to vector<16x1xf32>
    %cst_45 = arith.constant 3.200000e+01 : f32
    %116 = vector.broadcast %cst_45 : f32 to vector<16x1xf32>
    %117 = arith.divf %115, %116 : vector<16x1xf32>
    %118 = vector.broadcast %110 : vector<16x1xf32> to vector<16x32xf32>
    %119 = arith.subf %102, %118 : vector<16x32xf32>
    %cst_46 = arith.constant 9.99999996E-13 : f32
    %120 = vector.broadcast %cst_46 : f32 to vector<16x1xf32>
    %121 = arith.addf %117, %120 : vector<16x1xf32>
    %122 = math.rsqrt %121 : vector<16x1xf32>
    %123 = vector.broadcast %122 : vector<16x1xf32> to vector<16x32xf32>
    %124 = arith.mulf %119, %123 : vector<16x32xf32>
    %125 = vector.broadcast %104 : vector<1x32xf32> to vector<16x32xf32>
    %126 = arith.mulf %124, %125 : vector<16x32xf32>
    %127 = vector.broadcast %106 : vector<1x32xf32> to vector<16x32xf32>
    %128 = arith.addf %126, %127 : vector<16x32xf32>
    %129 = arith.truncf %128 : vector<16x32xf32> to vector<16x32xbf16>
    %c0_47 = arith.constant 0 : index
    %c0_48 = arith.constant 0 : index
    %c0_49 = arith.constant 0 : index
    %130 = vector.load %arg10[%c0_47, %c0_48, %c0_49] : memref<2x32x64xbf16, #tpu.memory_space<vmem>>, vector<1x32x64xbf16>
    %131 = vector.shape_cast %130 : vector<1x32x64xbf16> to vector<32x64xbf16>
    %cst_50 = arith.constant dense<0.000000e+00> : vector<16x64xf32>
    %132 = tpu.matmul %129, %131, %cst_50 {dimension_numbers = #tpu.dot_dimension_numbers<[1], [0], [0], [1], [0, 0, 1, 1], [], []>} : vector<16x32xbf16>, vector<32x64xbf16>, vector<16x64xf32> -> vector<16x64xf32>
    %c0_51 = arith.constant 0 : index
    %c0_52 = arith.constant 0 : index
    %c0_53 = arith.constant 0 : index
    %133 = vector.load %arg11[%c0_51, %c0_52, %c0_53] : memref<2x1x64xf32, #tpu.memory_space<vmem>>, vector<1x1x64xf32>
    %134 = vector.shape_cast %133 : vector<1x1x64xf32> to vector<1x64xf32>
    %135 = vector.broadcast %134 : vector<1x64xf32> to vector<16x64xf32>
    %136 = arith.addf %132, %135 : vector<16x64xf32>
    %137 = arith.mulf %136, %136 : vector<16x64xf32>
    %138 = arith.mulf %136, %137 : vector<16x64xf32>
    %cst_54 = arith.constant 4.471500e-02 : f32
    %139 = vector.broadcast %cst_54 : f32 to vector<16x64xf32>
    %140 = arith.mulf %139, %138 : vector<16x64xf32>
    %141 = arith.addf %136, %140 : vector<16x64xf32>
    %cst_55 = arith.constant 0.797884583 : f32
    %142 = vector.broadcast %cst_55 : f32 to vector<16x64xf32>
    %143 = arith.mulf %142, %141 : vector<16x64xf32>
    %144 = math.tanh %143 : vector<16x64xf32>
    %cst_56 = arith.constant 1.000000e+00 : f32
    %145 = vector.broadcast %cst_56 : f32 to vector<16x64xf32>
    %146 = arith.addf %145, %144 : vector<16x64xf32>
    %cst_57 = arith.constant 5.000000e-01 : f32
    %147 = vector.broadcast %cst_57 : f32 to vector<16x64xf32>
    %148 = arith.mulf %147, %146 : vector<16x64xf32>
    %149 = arith.mulf %136, %148 : vector<16x64xf32>
    %150 = arith.truncf %149 : vector<16x64xf32> to vector<16x64xbf16>
    %c0_58 = arith.constant 0 : index
    %c0_59 = arith.constant 0 : index
    %c0_60 = arith.constant 0 : index
    %151 = vector.load %arg12[%c0_58, %c0_59, %c0_60] : memref<2x64x32xbf16, #tpu.memory_space<vmem>>, vector<1x64x32xbf16>
    %152 = vector.shape_cast %151 : vector<1x64x32xbf16> to vector<64x32xbf16>
    %cst_61 = arith.constant dense<0.000000e+00> : vector<16x32xf32>
    %153 = tpu.matmul %150, %152, %cst_61 {dimension_numbers = #tpu.dot_dimension_numbers<[1], [0], [0], [1], [0, 0, 1, 1], [], []>} : vector<16x64xbf16>, vector<64x32xbf16>, vector<16x32xf32> -> vector<16x32xf32>
    %c0_62 = arith.constant 0 : index
    %c0_63 = arith.constant 0 : index
    %c0_64 = arith.constant 0 : index
    %154 = vector.load %arg13[%c0_62, %c0_63, %c0_64] : memref<2x1x32xf32, #tpu.memory_space<vmem>>, vector<1x1x32xf32>
    %155 = vector.shape_cast %154 : vector<1x1x32xf32> to vector<1x32xf32>
    %156 = vector.broadcast %155 : vector<1x32xf32> to vector<16x32xf32>
    %157 = arith.addf %153, %156 : vector<16x32xf32>
    %158 = arith.addf %128, %157 : vector<16x32xf32>
    %c0_65 = arith.constant 0 : index
    %c0_66 = arith.constant 0 : index
    %c0_67 = arith.constant 0 : index
    %159 = vector.load %arg14[%c0_65, %c0_66, %c0_67] : memref<2x1x32xf32, #tpu.memory_space<vmem>>, vector<1x1x32xf32>
    %160 = vector.shape_cast %159 : vector<1x1x32xf32> to vector<1x32xf32>
    %c0_68 = arith.constant 0 : index
    %c0_69 = arith.constant 0 : index
    %c0_70 = arith.constant 0 : index
    %161 = vector.load %arg15[%c0_68, %c0_69, %c0_70] : memref<2x1x32xf32, #tpu.memory_space<vmem>>, vector<1x1x32xf32>
    %162 = vector.shape_cast %161 : vector<1x1x32xf32> to vector<1x32xf32>
    %cst_71 = arith.constant dense<0.000000e+00> : vector<16xf32>
    %163 = vector.multi_reduction <add>, %158, %cst_71 [1] : vector<16x32xf32> to vector<16xf32>
    %164 = vector.shape_cast %163 : vector<16xf32> to vector<16x1xf32>
    %cst_72 = arith.constant 3.200000e+01 : f32
    %165 = vector.broadcast %cst_72 : f32 to vector<16x1xf32>
    %166 = arith.divf %164, %165 : vector<16x1xf32>
    %167 = vector.broadcast %166 : vector<16x1xf32> to vector<16x32xf32>
    %168 = arith.subf %158, %167 : vector<16x32xf32>
    %169 = arith.mulf %168, %168 : vector<16x32xf32>
    %cst_73 = arith.constant dense<0.000000e+00> : vector<16xf32>
    %170 = vector.multi_reduction <add>, %169, %cst_73 [1] : vector<16x32xf32> to vector<16xf32>
    %171 = vector.shape_cast %170 : vector<16xf32> to vector<16x1xf32>
    %cst_74 = arith.constant 3.200000e+01 : f32
    %172 = vector.broadcast %cst_74 : f32 to vector<16x1xf32>
    %173 = arith.divf %171, %172 : vector<16x1xf32>
    %174 = vector.broadcast %166 : vector<16x1xf32> to vector<16x32xf32>
    %175 = arith.subf %158, %174 : vector<16x32xf32>
    %cst_75 = arith.constant 9.99999996E-13 : f32
    %176 = vector.broadcast %cst_75 : f32 to vector<16x1xf32>
    %177 = arith.addf %173, %176 : vector<16x1xf32>
    %178 = math.rsqrt %177 : vector<16x1xf32>
    %179 = vector.broadcast %178 : vector<16x1xf32> to vector<16x32xf32>
    %180 = arith.mulf %175, %179 : vector<16x32xf32>
    %181 = vector.broadcast %160 : vector<1x32xf32> to vector<16x32xf32>
    %182 = arith.mulf %180, %181 : vector<16x32xf32>
    %183 = vector.broadcast %162 : vector<1x32xf32> to vector<16x32xf32>
    %184 = arith.addf %182, %183 : vector<16x32xf32>
    %185 = arith.truncf %184 : vector<16x32xf32> to vector<16x32xbf16>
    %c1 = arith.constant 1 : index
    %c0_76 = arith.constant 0 : index
    %c0_77 = arith.constant 0 : index
    %186 = vector.load %arg4[%c1, %c0_76, %c0_77] : memref<2x32x96xbf16, #tpu.memory_space<vmem>>, vector<1x32x96xbf16>
    %187 = vector.shape_cast %186 : vector<1x32x96xbf16> to vector<32x96xbf16>
    %cst_78 = arith.constant dense<0.000000e+00> : vector<16x96xf32>
    %188 = tpu.matmul %185, %187, %cst_78 {dimension_numbers = #tpu.dot_dimension_numbers<[1], [0], [0], [1], [0, 0, 1, 1], [], []>} : vector<16x32xbf16>, vector<32x96xbf16>, vector<16x96xf32> -> vector<16x96xf32>
    %c1_79 = arith.constant 1 : index
    %c0_80 = arith.constant 0 : index
    %c0_81 = arith.constant 0 : index
    %189 = vector.load %arg5[%c1_79, %c0_80, %c0_81] : memref<2x1x96xf32, #tpu.memory_space<vmem>>, vector<1x1x96xf32>
    %190 = vector.shape_cast %189 : vector<1x1x96xf32> to vector<1x96xf32>
    %191 = vector.broadcast %190 : vector<1x96xf32> to vector<16x96xf32>
    %192 = arith.addf %188, %191 : vector<16x96xf32>
    %193 = vector.extract_strided_slice %192 {offsets = [0, 0], sizes = [16, 32], strides = [1, 1]} : vector<16x96xf32> to vector<16x32xf32>
    %cst_82 = arith.constant 0.353553385 : f32
    %194 = vector.broadcast %cst_82 : f32 to vector<16x32xf32>
    %195 = arith.mulf %193, %194 : vector<16x32xf32>
    %196 = vector.shape_cast %195 : vector<16x32xf32> to vector<2x8x32xf32>
    %197 = arith.truncf %196 : vector<2x8x32xf32> to vector<2x8x32xbf16>
    %198 = vector.extract_strided_slice %192 {offsets = [0, 32], sizes = [16, 32], strides = [1, 1]} : vector<16x96xf32> to vector<16x32xf32>
    %199 = vector.shape_cast %198 : vector<16x32xf32> to vector<2x8x32xf32>
    %200 = arith.truncf %199 : vector<2x8x32xf32> to vector<2x8x32xbf16>
    %201 = vector.extract_strided_slice %192 {offsets = [0, 64], sizes = [16, 32], strides = [1, 1]} : vector<16x96xf32> to vector<16x32xf32>
    %202 = vector.shape_cast %201 : vector<16x32xf32> to vector<2x8x32xf32>
    %203 = arith.truncf %202 : vector<2x8x32xf32> to vector<2x8x32xbf16>
    %204 = vector.extract_strided_slice %197 {offsets = [0, 0, 0], sizes = [2, 8, 8], strides = [1, 1, 1]} : vector<2x8x32xbf16> to vector<2x8x8xbf16>
    %205 = vector.extract_strided_slice %200 {offsets = [0, 0, 0], sizes = [2, 8, 8], strides = [1, 1, 1]} : vector<2x8x32xbf16> to vector<2x8x8xbf16>
    "tpu.trace_start"() <{level = 10 : i32, message = "bqd,bkd->bqk"}> : () -> ()
    %cst_83 = arith.constant dense<0.000000e+00> : vector<2x8x8xf32>
    %206 = tpu.matmul %204, %205, %cst_83 {dimension_numbers = #tpu.dot_dimension_numbers<[2], [2], [1], [1], [0, 0, 0, 1, 1, 1], [0], [0]>} : vector<2x8x8xbf16>, vector<2x8x8xbf16>, vector<2x8x8xf32> -> vector<2x8x8xf32>
    "tpu.trace_stop"() : () -> ()
    %207 = vector.extract_strided_slice %197 {offsets = [0, 0, 8], sizes = [2, 8, 8], strides = [1, 1, 1]} : vector<2x8x32xbf16> to vector<2x8x8xbf16>
    %208 = vector.extract_strided_slice %200 {offsets = [0, 0, 8], sizes = [2, 8, 8], strides = [1, 1, 1]} : vector<2x8x32xbf16> to vector<2x8x8xbf16>
    "tpu.trace_start"() <{level = 10 : i32, message = "bqd,bkd->bqk"}> : () -> ()
    %cst_84 = arith.constant dense<0.000000e+00> : vector<2x8x8xf32>
    %209 = tpu.matmul %207, %208, %cst_84 {dimension_numbers = #tpu.dot_dimension_numbers<[2], [2], [1], [1], [0, 0, 0, 1, 1, 1], [0], [0]>} : vector<2x8x8xbf16>, vector<2x8x8xbf16>, vector<2x8x8xf32> -> vector<2x8x8xf32>
    "tpu.trace_stop"() : () -> ()
    %210 = vector.extract_strided_slice %197 {offsets = [0, 0, 16], sizes = [2, 8, 8], strides = [1, 1, 1]} : vector<2x8x32xbf16> to vector<2x8x8xbf16>
    %211 = vector.extract_strided_slice %200 {offsets = [0, 0, 16], sizes = [2, 8, 8], strides = [1, 1, 1]} : vector<2x8x32xbf16> to vector<2x8x8xbf16>
    "tpu.trace_start"() <{level = 10 : i32, message = "bqd,bkd->bqk"}> : () -> ()
    %cst_85 = arith.constant dense<0.000000e+00> : vector<2x8x8xf32>
    %212 = tpu.matmul %210, %211, %cst_85 {dimension_numbers = #tpu.dot_dimension_numbers<[2], [2], [1], [1], [0, 0, 0, 1, 1, 1], [0], [0]>} : vector<2x8x8xbf16>, vector<2x8x8xbf16>, vector<2x8x8xf32> -> vector<2x8x8xf32>
    "tpu.trace_stop"() : () -> ()
    %213 = vector.extract_strided_slice %197 {offsets = [0, 0, 24], sizes = [2, 8, 8], strides = [1, 1, 1]} : vector<2x8x32xbf16> to vector<2x8x8xbf16>
    %214 = vector.extract_strided_slice %200 {offsets = [0, 0, 24], sizes = [2, 8, 8], strides = [1, 1, 1]} : vector<2x8x32xbf16> to vector<2x8x8xbf16>
    "tpu.trace_start"() <{level = 10 : i32, message = "bqd,bkd->bqk"}> : () -> ()
    %cst_86 = arith.constant dense<0.000000e+00> : vector<2x8x8xf32>
    %215 = tpu.matmul %213, %214, %cst_86 {dimension_numbers = #tpu.dot_dimension_numbers<[2], [2], [1], [1], [0, 0, 0, 1, 1, 1], [0], [0]>} : vector<2x8x8xbf16>, vector<2x8x8xbf16>, vector<2x8x8xf32> -> vector<2x8x8xf32>
    "tpu.trace_stop"() : () -> ()
    %216 = vector.shape_cast %206 : vector<2x8x8xf32> to vector<2x1x8x8xf32>
    %217 = vector.shape_cast %209 : vector<2x8x8xf32> to vector<2x1x8x8xf32>
    %218 = vector.shape_cast %212 : vector<2x8x8xf32> to vector<2x1x8x8xf32>
    %219 = vector.shape_cast %215 : vector<2x8x8xf32> to vector<2x1x8x8xf32>
    %220 = tpu.concatenate %216, %217, %218, %219 in 1 : vector<2x1x8x8xf32>, vector<2x1x8x8xf32>, vector<2x1x8x8xf32>, vector<2x1x8x8xf32> -> vector<2x4x8x8xf32>
    %221 = vector.broadcast %26 : vector<2x1x1x8xf32> to vector<2x4x8x8xf32>
    %222 = arith.addf %220, %221 : vector<2x4x8x8xf32>
    %cst_87 = arith.constant dense<0xFF800000> : vector<2x4x8xf32>
    %223 = vector.multi_reduction <maximumf>, %222, %cst_87 [3] : vector<2x4x8x8xf32> to vector<2x4x8xf32>
    %224 = vector.shape_cast %223 : vector<2x4x8xf32> to vector<2x4x8x1xf32>
    %225 = vector.broadcast %224 : vector<2x4x8x1xf32> to vector<2x4x8x8xf32>
    %226 = arith.subf %222, %225 : vector<2x4x8x8xf32>
    %227 = math.exp %226 : vector<2x4x8x8xf32>
    %cst_88 = arith.constant dense<0.000000e+00> : vector<2x4x8xf32>
    %228 = vector.multi_reduction <add>, %227, %cst_88 [3] : vector<2x4x8x8xf32> to vector<2x4x8xf32>
    %229 = vector.shape_cast %228 : vector<2x4x8xf32> to vector<2x4x8x1xf32>
    %230 = tpu.reciprocal %229 {approx = true} : vector<2x4x8x1xf32> -> vector<2x4x8x1xf32>
    %231 = vector.broadcast %230 : vector<2x4x8x1xf32> to vector<2x4x8x8xf32>
    %232 = arith.mulf %227, %231 : vector<2x4x8x8xf32>
    %233 = arith.truncf %232 : vector<2x4x8x8xf32> to vector<2x4x8x8xbf16>
    %234 = vector.extract_strided_slice %233 {offsets = [0, 0, 0, 0], sizes = [2, 1, 8, 8], strides = [1, 1, 1, 1]} : vector<2x4x8x8xbf16> to vector<2x1x8x8xbf16>
    %235 = vector.shape_cast %234 : vector<2x1x8x8xbf16> to vector<2x8x8xbf16>
    %236 = vector.extract_strided_slice %203 {offsets = [0, 0, 0], sizes = [2, 8, 8], strides = [1, 1, 1]} : vector<2x8x32xbf16> to vector<2x8x8xbf16>
    "tpu.trace_start"() <{level = 10 : i32, message = "bqk,bkd->bqd"}> : () -> ()
    %cst_89 = arith.constant dense<0.000000e+00> : vector<2x8x8xf32>
    %237 = tpu.matmul %235, %236, %cst_89 {dimension_numbers = #tpu.dot_dimension_numbers<[2], [1], [1], [2], [0, 0, 0, 1, 1, 2], [0], [0]>} : vector<2x8x8xbf16>, vector<2x8x8xbf16>, vector<2x8x8xf32> -> vector<2x8x8xf32>
    "tpu.trace_stop"() : () -> ()
    %238 = vector.extract_strided_slice %233 {offsets = [0, 1, 0, 0], sizes = [2, 1, 8, 8], strides = [1, 1, 1, 1]} : vector<2x4x8x8xbf16> to vector<2x1x8x8xbf16>
    %239 = vector.shape_cast %238 : vector<2x1x8x8xbf16> to vector<2x8x8xbf16>
    %240 = vector.extract_strided_slice %203 {offsets = [0, 0, 8], sizes = [2, 8, 8], strides = [1, 1, 1]} : vector<2x8x32xbf16> to vector<2x8x8xbf16>
    "tpu.trace_start"() <{level = 10 : i32, message = "bqk,bkd->bqd"}> : () -> ()
    %cst_90 = arith.constant dense<0.000000e+00> : vector<2x8x8xf32>
    %241 = tpu.matmul %239, %240, %cst_90 {dimension_numbers = #tpu.dot_dimension_numbers<[2], [1], [1], [2], [0, 0, 0, 1, 1, 2], [0], [0]>} : vector<2x8x8xbf16>, vector<2x8x8xbf16>, vector<2x8x8xf32> -> vector<2x8x8xf32>
    "tpu.trace_stop"() : () -> ()
    %242 = vector.extract_strided_slice %233 {offsets = [0, 2, 0, 0], sizes = [2, 1, 8, 8], strides = [1, 1, 1, 1]} : vector<2x4x8x8xbf16> to vector<2x1x8x8xbf16>
    %243 = vector.shape_cast %242 : vector<2x1x8x8xbf16> to vector<2x8x8xbf16>
    %244 = vector.extract_strided_slice %203 {offsets = [0, 0, 16], sizes = [2, 8, 8], strides = [1, 1, 1]} : vector<2x8x32xbf16> to vector<2x8x8xbf16>
    "tpu.trace_start"() <{level = 10 : i32, message = "bqk,bkd->bqd"}> : () -> ()
    %cst_91 = arith.constant dense<0.000000e+00> : vector<2x8x8xf32>
    %245 = tpu.matmul %243, %244, %cst_91 {dimension_numbers = #tpu.dot_dimension_numbers<[2], [1], [1], [2], [0, 0, 0, 1, 1, 2], [0], [0]>} : vector<2x8x8xbf16>, vector<2x8x8xbf16>, vector<2x8x8xf32> -> vector<2x8x8xf32>
    "tpu.trace_stop"() : () -> ()
    %246 = vector.extract_strided_slice %233 {offsets = [0, 3, 0, 0], sizes = [2, 1, 8, 8], strides = [1, 1, 1, 1]} : vector<2x4x8x8xbf16> to vector<2x1x8x8xbf16>
    %247 = vector.shape_cast %246 : vector<2x1x8x8xbf16> to vector<2x8x8xbf16>
    %248 = vector.extract_strided_slice %203 {offsets = [0, 0, 24], sizes = [2, 8, 8], strides = [1, 1, 1]} : vector<2x8x32xbf16> to vector<2x8x8xbf16>
    "tpu.trace_start"() <{level = 10 : i32, message = "bqk,bkd->bqd"}> : () -> ()
    %cst_92 = arith.constant dense<0.000000e+00> : vector<2x8x8xf32>
    %249 = tpu.matmul %247, %248, %cst_92 {dimension_numbers = #tpu.dot_dimension_numbers<[2], [1], [1], [2], [0, 0, 0, 1, 1, 2], [0], [0]>} : vector<2x8x8xbf16>, vector<2x8x8xbf16>, vector<2x8x8xf32> -> vector<2x8x8xf32>
    "tpu.trace_stop"() : () -> ()
    %250 = tpu.concatenate %237, %241, %245, %249 in 2 : vector<2x8x8xf32>, vector<2x8x8xf32>, vector<2x8x8xf32>, vector<2x8x8xf32> -> vector<2x8x32xf32>
    %251 = vector.shape_cast %250 : vector<2x8x32xf32> to vector<16x32xf32>
    %252 = arith.truncf %251 : vector<16x32xf32> to vector<16x32xbf16>
    %c1_93 = arith.constant 1 : index
    %c0_94 = arith.constant 0 : index
    %c0_95 = arith.constant 0 : index
    %253 = vector.load %arg6[%c1_93, %c0_94, %c0_95] : memref<2x32x32xbf16, #tpu.memory_space<vmem>>, vector<1x32x32xbf16>
    %254 = vector.shape_cast %253 : vector<1x32x32xbf16> to vector<32x32xbf16>
    %cst_96 = arith.constant dense<0.000000e+00> : vector<16x32xf32>
    %255 = tpu.matmul %252, %254, %cst_96 {dimension_numbers = #tpu.dot_dimension_numbers<[1], [0], [0], [1], [0, 0, 1, 1], [], []>} : vector<16x32xbf16>, vector<32x32xbf16>, vector<16x32xf32> -> vector<16x32xf32>
    %c1_97 = arith.constant 1 : index
    %c0_98 = arith.constant 0 : index
    %c0_99 = arith.constant 0 : index
    %256 = vector.load %arg7[%c1_97, %c0_98, %c0_99] : memref<2x1x32xf32, #tpu.memory_space<vmem>>, vector<1x1x32xf32>
    %257 = vector.shape_cast %256 : vector<1x1x32xf32> to vector<1x32xf32>
    %258 = vector.broadcast %257 : vector<1x32xf32> to vector<16x32xf32>
    %259 = arith.addf %255, %258 : vector<16x32xf32>
    %260 = arith.addf %184, %259 : vector<16x32xf32>
    %c1_100 = arith.constant 1 : index
    %c0_101 = arith.constant 0 : index
    %c0_102 = arith.constant 0 : index
    %261 = vector.load %arg8[%c1_100, %c0_101, %c0_102] : memref<2x1x32xf32, #tpu.memory_space<vmem>>, vector<1x1x32xf32>
    %262 = vector.shape_cast %261 : vector<1x1x32xf32> to vector<1x32xf32>
    %c1_103 = arith.constant 1 : index
    %c0_104 = arith.constant 0 : index
    %c0_105 = arith.constant 0 : index
    %263 = vector.load %arg9[%c1_103, %c0_104, %c0_105] : memref<2x1x32xf32, #tpu.memory_space<vmem>>, vector<1x1x32xf32>
    %264 = vector.shape_cast %263 : vector<1x1x32xf32> to vector<1x32xf32>
    %cst_106 = arith.constant dense<0.000000e+00> : vector<16xf32>
    %265 = vector.multi_reduction <add>, %260, %cst_106 [1] : vector<16x32xf32> to vector<16xf32>
    %266 = vector.shape_cast %265 : vector<16xf32> to vector<16x1xf32>
    %cst_107 = arith.constant 3.200000e+01 : f32
    %267 = vector.broadcast %cst_107 : f32 to vector<16x1xf32>
    %268 = arith.divf %266, %267 : vector<16x1xf32>
    %269 = vector.broadcast %268 : vector<16x1xf32> to vector<16x32xf32>
    %270 = arith.subf %260, %269 : vector<16x32xf32>
    %271 = arith.mulf %270, %270 : vector<16x32xf32>
    %cst_108 = arith.constant dense<0.000000e+00> : vector<16xf32>
    %272 = vector.multi_reduction <add>, %271, %cst_108 [1] : vector<16x32xf32> to vector<16xf32>
    %273 = vector.shape_cast %272 : vector<16xf32> to vector<16x1xf32>
    %cst_109 = arith.constant 3.200000e+01 : f32
    %274 = vector.broadcast %cst_109 : f32 to vector<16x1xf32>
    %275 = arith.divf %273, %274 : vector<16x1xf32>
    %276 = vector.broadcast %268 : vector<16x1xf32> to vector<16x32xf32>
    %277 = arith.subf %260, %276 : vector<16x32xf32>
    %cst_110 = arith.constant 9.99999996E-13 : f32
    %278 = vector.broadcast %cst_110 : f32 to vector<16x1xf32>
    %279 = arith.addf %275, %278 : vector<16x1xf32>
    %280 = math.rsqrt %279 : vector<16x1xf32>
    %281 = vector.broadcast %280 : vector<16x1xf32> to vector<16x32xf32>
    %282 = arith.mulf %277, %281 : vector<16x32xf32>
    %283 = vector.broadcast %262 : vector<1x32xf32> to vector<16x32xf32>
    %284 = arith.mulf %282, %283 : vector<16x32xf32>
    %285 = vector.broadcast %264 : vector<1x32xf32> to vector<16x32xf32>
    %286 = arith.addf %284, %285 : vector<16x32xf32>
    %287 = arith.truncf %286 : vector<16x32xf32> to vector<16x32xbf16>
    %c1_111 = arith.constant 1 : index
    %c0_112 = arith.constant 0 : index
    %c0_113 = arith.constant 0 : index
    %288 = vector.load %arg10[%c1_111, %c0_112, %c0_113] : memref<2x32x64xbf16, #tpu.memory_space<vmem>>, vector<1x32x64xbf16>
    %289 = vector.shape_cast %288 : vector<1x32x64xbf16> to vector<32x64xbf16>
    %cst_114 = arith.constant dense<0.000000e+00> : vector<16x64xf32>
    %290 = tpu.matmul %287, %289, %cst_114 {dimension_numbers = #tpu.dot_dimension_numbers<[1], [0], [0], [1], [0, 0, 1, 1], [], []>} : vector<16x32xbf16>, vector<32x64xbf16>, vector<16x64xf32> -> vector<16x64xf32>
    %c1_115 = arith.constant 1 : index
    %c0_116 = arith.constant 0 : index
    %c0_117 = arith.constant 0 : index
    %291 = vector.load %arg11[%c1_115, %c0_116, %c0_117] : memref<2x1x64xf32, #tpu.memory_space<vmem>>, vector<1x1x64xf32>
    %292 = vector.shape_cast %291 : vector<1x1x64xf32> to vector<1x64xf32>
    %293 = vector.broadcast %292 : vector<1x64xf32> to vector<16x64xf32>
    %294 = arith.addf %290, %293 : vector<16x64xf32>
    %295 = arith.mulf %294, %294 : vector<16x64xf32>
    %296 = arith.mulf %294, %295 : vector<16x64xf32>
    %cst_118 = arith.constant 4.471500e-02 : f32
    %297 = vector.broadcast %cst_118 : f32 to vector<16x64xf32>
    %298 = arith.mulf %297, %296 : vector<16x64xf32>
    %299 = arith.addf %294, %298 : vector<16x64xf32>
    %cst_119 = arith.constant 0.797884583 : f32
    %300 = vector.broadcast %cst_119 : f32 to vector<16x64xf32>
    %301 = arith.mulf %300, %299 : vector<16x64xf32>
    %302 = math.tanh %301 : vector<16x64xf32>
    %cst_120 = arith.constant 1.000000e+00 : f32
    %303 = vector.broadcast %cst_120 : f32 to vector<16x64xf32>
    %304 = arith.addf %303, %302 : vector<16x64xf32>
    %cst_121 = arith.constant 5.000000e-01 : f32
    %305 = vector.broadcast %cst_121 : f32 to vector<16x64xf32>
    %306 = arith.mulf %305, %304 : vector<16x64xf32>
    %307 = arith.mulf %294, %306 : vector<16x64xf32>
    %308 = arith.truncf %307 : vector<16x64xf32> to vector<16x64xbf16>
    %c1_122 = arith.constant 1 : index
    %c0_123 = arith.constant 0 : index
    %c0_124 = arith.constant 0 : index
    %309 = vector.load %arg12[%c1_122, %c0_123, %c0_124] : memref<2x64x32xbf16, #tpu.memory_space<vmem>>, vector<1x64x32xbf16>
    %310 = vector.shape_cast %309 : vector<1x64x32xbf16> to vector<64x32xbf16>
    %cst_125 = arith.constant dense<0.000000e+00> : vector<16x32xf32>
    %311 = tpu.matmul %308, %310, %cst_125 {dimension_numbers = #tpu.dot_dimension_numbers<[1], [0], [0], [1], [0, 0, 1, 1], [], []>} : vector<16x64xbf16>, vector<64x32xbf16>, vector<16x32xf32> -> vector<16x32xf32>
    %c1_126 = arith.constant 1 : index
    %c0_127 = arith.constant 0 : index
    %c0_128 = arith.constant 0 : index
    %312 = vector.load %arg13[%c1_126, %c0_127, %c0_128] : memref<2x1x32xf32, #tpu.memory_space<vmem>>, vector<1x1x32xf32>
    %313 = vector.shape_cast %312 : vector<1x1x32xf32> to vector<1x32xf32>
    %314 = vector.broadcast %313 : vector<1x32xf32> to vector<16x32xf32>
    %315 = arith.addf %311, %314 : vector<16x32xf32>
    %316 = arith.addf %286, %315 : vector<16x32xf32>
    %c1_129 = arith.constant 1 : index
    %c0_130 = arith.constant 0 : index
    %c0_131 = arith.constant 0 : index
    %317 = vector.load %arg14[%c1_129, %c0_130, %c0_131] : memref<2x1x32xf32, #tpu.memory_space<vmem>>, vector<1x1x32xf32>
    %318 = vector.shape_cast %317 : vector<1x1x32xf32> to vector<1x32xf32>
    %c1_132 = arith.constant 1 : index
    %c0_133 = arith.constant 0 : index
    %c0_134 = arith.constant 0 : index
    %319 = vector.load %arg15[%c1_132, %c0_133, %c0_134] : memref<2x1x32xf32, #tpu.memory_space<vmem>>, vector<1x1x32xf32>
    %320 = vector.shape_cast %319 : vector<1x1x32xf32> to vector<1x32xf32>
    %cst_135 = arith.constant dense<0.000000e+00> : vector<16xf32>
    %321 = vector.multi_reduction <add>, %316, %cst_135 [1] : vector<16x32xf32> to vector<16xf32>
    %322 = vector.shape_cast %321 : vector<16xf32> to vector<16x1xf32>
    %cst_136 = arith.constant 3.200000e+01 : f32
    %323 = vector.broadcast %cst_136 : f32 to vector<16x1xf32>
    %324 = arith.divf %322, %323 : vector<16x1xf32>
    %325 = vector.broadcast %324 : vector<16x1xf32> to vector<16x32xf32>
    %326 = arith.subf %316, %325 : vector<16x32xf32>
    %327 = arith.mulf %326, %326 : vector<16x32xf32>
    %cst_137 = arith.constant dense<0.000000e+00> : vector<16xf32>
    %328 = vector.multi_reduction <add>, %327, %cst_137 [1] : vector<16x32xf32> to vector<16xf32>
    %329 = vector.shape_cast %328 : vector<16xf32> to vector<16x1xf32>
    %cst_138 = arith.constant 3.200000e+01 : f32
    %330 = vector.broadcast %cst_138 : f32 to vector<16x1xf32>
    %331 = arith.divf %329, %330 : vector<16x1xf32>
    %332 = vector.broadcast %324 : vector<16x1xf32> to vector<16x32xf32>
    %333 = arith.subf %316, %332 : vector<16x32xf32>
    %cst_139 = arith.constant 9.99999996E-13 : f32
    %334 = vector.broadcast %cst_139 : f32 to vector<16x1xf32>
    %335 = arith.addf %331, %334 : vector<16x1xf32>
    %336 = math.rsqrt %335 : vector<16x1xf32>
    %337 = vector.broadcast %336 : vector<16x1xf32> to vector<16x32xf32>
    %338 = arith.mulf %333, %337 : vector<16x32xf32>
    %339 = vector.broadcast %318 : vector<1x32xf32> to vector<16x32xf32>
    %340 = arith.mulf %338, %339 : vector<16x32xf32>
    %341 = vector.broadcast %320 : vector<1x32xf32> to vector<16x32xf32>
    %342 = arith.addf %340, %341 : vector<16x32xf32>
    %c0_140 = arith.constant 0 : index
    %c0_141 = arith.constant 0 : index
    %343 = vector.load %arg16[%c0_140, %c0_141] : memref<16x32xf32, #tpu.memory_space<vmem>>, vector<16x32xf32>
    tpu.vector_store %arg16[%c0_140, %c0_141], %342 {strides = array<i32>} : memref<16x32xf32, #tpu.memory_space<vmem>>, vector<16x32xf32>,
    return
  }
}

</mosaic_0001>

<llo_original>
// kernel: bert_forward.1
$region0: #{bert_forward.1}
  #allocation0 [shape = 'u32[]', space=smem, size = 0x4, offset = 0x4, fixed_abs, tag = 'smem constant byte address 0x4 - core index']
  #allocation1 [shape = 'u32[144,128]{1,0:T(1,128)}', space=vmem, size = 0x12000, scoped, tag = 'internal scratch']
  %s0 = inlined_call_operand.vmem [shape: f32[16,32], index: 0, kind: input, shape index: {}]
  %s1 = inlined_call_operand.vmem [shape: f32[2,8], index: 1, kind: input, shape index: {}]
  %s2 = inlined_call_operand.vmem [shape: f32[1,32], index: 2, kind: input, shape index: {}]
  %s3 = inlined_call_operand.vmem [shape: f32[1,32], index: 3, kind: input, shape index: {}]
  %s4 = inlined_call_operand.vmem [shape: bf16[2,32,96], index: 4, kind: input, shape index: {}]
  %s5 = inlined_call_operand.vmem [shape: f32[2,1,96], index: 5, kind: input, shape index: {}]
  %s6 = inlined_call_operand.vmem [shape: bf16[2,32,32], index: 6, kind: input, shape index: {}]
  %s7 = inlined_call_operand.vmem [shape: f32[2,1,32], index: 7, kind: input, shape index: {}]
  %s8 = inlined_call_operand.vmem [shape: f32[2,1,32], index: 8, kind: input, shape index: {}]
  %s9 = inlined_call_operand.vmem [shape: f32[2,1,32], index: 9, kind: input, shape index: {}]
  %s10 = inlined_call_operand.vmem [shape: bf16[2,32,64], index: 10, kind: input, shape index: {}]
  %s11 = inlined_call_operand.vmem [shape: f32[2,1,64], index: 11, kind: input, shape index: {}]
  %s12 = inlined_call_operand.vmem [shape: bf16[2,64,32], index: 12, kind: input, shape index: {}]
  %s13 = inlined_call_operand.vmem [shape: f32[2,1,32], index: 13, kind: input, shape index: {}]
  %s14 = inlined_call_operand.vmem [shape: f32[2,1,32], index: 14, kind: input, shape index: {}]
  %s15 = inlined_call_operand.vmem [shape: f32[2,1,32], index: 15, kind: input, shape index: {}]
  %s16 = inlined_call_operand.hbm [shape: f32[16,32], index: 16, kind: output, shape index: {}]
  %s17 = sld [smem:[#allocation0]]
  $region74: #{bert_forward.1} parent=0
    _
  %s19 = ssub.s32 1, %s17
  %s20 = scalar_select 0, %s19, %s17
  $region1: #{bert_forward.1} parent=0
    #allocation2 [shape = 'u8[8192]{0}', space=vmem, size = 0x2000, scoped, tag = 'output window, operand 0, single buffered']
    #allocation3 [shape = 's32[1]{0}', space=sflag, size = 0x4, scoped, tag = 'scoped memory for bert_forward.1']
    %21 = vsyncpa [#allocation3], 0
    // Predicated region
    $region2: #{bert_forward.1} parent=1 // pred_check
      _
    $region3: #{bert_forward.1} parent=1 // pred_check_branch
      %23 = sbr.rel (0) target = $region5
    $region4: #{bert_forward.1} parent=1 // pred_region
      _
    $region5: #{bert_forward.1} parent=1 // pred_fallthru
      _
    // Predicated region
    $region6: #{bert_forward.1} parent=1 // pred_check
      _
    $region7: #{bert_forward.1} parent=1 // pred_check_branch
      %25 = sbr.rel (0) target = $region9
    $region8: #{bert_forward.1} parent=1 // pred_region
      _
    $region9: #{bert_forward.1} parent=1 // pred_fallthru
      _
    // Predicated region
    $region10: #{bert_forward.1} parent=1 // pred_check
      _
    $region11: #{bert_forward.1} parent=1 // pred_check_branch
      %27 = sbr.rel (0) target = $region13
    $region12: #{bert_forward.1} parent=1 // pred_region
      _
    $region13: #{bert_forward.1} parent=1 // pred_fallthru
      _
    // Predicated region
    $region14: #{bert_forward.1} parent=1 // pred_check
      _
    $region15: #{bert_forward.1} parent=1 // pred_check_branch
      %29 = sbr.rel (0) target = $region17
    $region16: #{bert_forward.1} parent=1 // pred_region
      _
    $region17: #{bert_forward.1} parent=1 // pred_fallthru
      _
    // Predicated region
    $region18: #{bert_forward.1} parent=1 // pred_check
      _
    $region19: #{bert_forward.1} parent=1 // pred_check_branch
      %31 = sbr.rel (0) target = $region21
    $region20: #{bert_forward.1} parent=1 // pred_region
      _
    $region21: #{bert_forward.1} parent=1 // pred_fallthru
      _
    // Predicated region
    $region22: #{bert_forward.1} parent=1 // pred_check
      _
    $region23: #{bert_forward.1} parent=1 // pred_check_branch
      %33 = sbr.rel (0) target = $region25
    $region24: #{bert_forward.1} parent=1 // pred_region
      _
    $region25: #{bert_forward.1} parent=1 // pred_fallthru
      _
    // Predicated region
    $region26: #{bert_forward.1} parent=1 // pred_check
      _
    $region27: #{bert_forward.1} parent=1 // pred_check_branch
      %35 = sbr.rel (0) target = $region29
    $region28: #{bert_forward.1} parent=1 // pred_region
      _
    $region29: #{bert_forward.1} parent=1 // pred_fallthru
      _
    // Predicated region
    $region30: #{bert_forward.1} parent=1 // pred_check
      _
    $region31: #{bert_forward.1} parent=1 // pred_check_branch
      %37 = sbr.rel (0) target = $region33
    $region32: #{bert_forward.1} parent=1 // pred_region
      _
    $region33: #{bert_forward.1} parent=1 // pred_fallthru
      _
    // Predicated region
    $region34: #{bert_forward.1} parent=1 // pred_check
      _
    $region35: #{bert_forward.1} parent=1 // pred_check_branch
      %39 = sbr.rel (0) target = $region37
    $region36: #{bert_forward.1} parent=1 // pred_region
      _
    $region37: #{bert_forward.1} parent=1 // pred_fallthru
      _
    // Predicated region
    $region38: #{bert_forward.1} parent=1 // pred_check
      _
    $region39: #{bert_forward.1} parent=1 // pred_check_branch
      %41 = sbr.rel (0) target = $region41
    $region40: #{bert_forward.1} parent=1 // pred_region
      _
    $region41: #{bert_forward.1} parent=1 // pred_fallthru
      _
    // Predicated region
    $region42: #{bert_forward.1} parent=1 // pred_check
      _
    $region43: #{bert_forward.1} parent=1 // pred_check_branch
      %43 = sbr.rel (0) target = $region45
    $region44: #{bert_forward.1} parent=1 // pred_region
      _
    $region45: #{bert_forward.1} parent=1 // pred_fallthru
      _
    // Predicated region
    $region46: #{bert_forward.1} parent=1 // pred_check
      _
    $region47: #{bert_forward.1} parent=1 // pred_check_branch
      %45 = sbr.rel (0) target = $region49
    $region48: #{bert_forward.1} parent=1 // pred_region
      _
    $region49: #{bert_forward.1} parent=1 // pred_fallthru
      _
    // Predicated region
    $region50: #{bert_forward.1} parent=1 // pred_check
      _
    $region51: #{bert_forward.1} parent=1 // pred_check_branch
      %47 = sbr.rel (0) target = $region53
    $region52: #{bert_forward.1} parent=1 // pred_region
      _
    $region53: #{bert_forward.1} parent=1 // pred_fallthru
      _
    // Predicated region
    $region54: #{bert_forward.1} parent=1 // pred_check
      _
    $region55: #{bert_forward.1} parent=1 // pred_check_branch
      %49 = sbr.rel (0) target = $region57
    $region56: #{bert_forward.1} parent=1 // pred_region
      _
    $region57: #{bert_forward.1} parent=1 // pred_fallthru
      _
    // Predicated region
    $region58: #{bert_forward.1} parent=1 // pred_check
      _
    $region59: #{bert_forward.1} parent=1 // pred_check_branch
      %51 = sbr.rel (0) target = $region61
    $region60: #{bert_forward.1} parent=1 // pred_region
      _
    $region61: #{bert_forward.1} parent=1 // pred_fallthru
      _
    // Predicated region
    $region62: #{bert_forward.1} parent=1 // pred_check
      _
    $region63: #{bert_forward.1} parent=1 // pred_check_branch
      %53 = sbr.rel (0) target = $region65
    $region64: #{bert_forward.1} parent=1 // pred_region
      _
    $region65: #{bert_forward.1} parent=1 // pred_fallthru
      _
    %v55 = vld [vmem:[%s0] sm:$0xff]
    %v56 = vld [vmem:[%s0 + $0x8] sm:$0xff]
    %v57 = vld [vmem:[%s2] sm:$0x1]
    %v58 = vld [vmem:[%s3] sm:$0x1]
    %vm59 = vcmask 261120
    %v60 = vsel %vm59, %v55, 0.0
    %61 = vadd.xlane.f32.xlu0 %v60
    %v62 = vpop.xlane.xlu0 %61
    %v63 = vsel %vm59, %v56, 0.0
    %64 = vadd.xlane.f32.xlu0 %v63
    %v65 = vpop.xlane.xlu0 %64
    %v66 = vrcp.pop 32.0
    %v67 = vmul.f32 %v62, %v66
    %v68 = vmul.f32 %v65, %v66
    %v69 = vsub.f32 %v55, %v67
    %v70 = vsub.f32 %v56, %v68
    %v71 = vmul.f32 %v69, %v69
    %v72 = vmul.f32 %v70, %v70
    %v73 = vsel %vm59, %v71, 0.0
    %74 = vadd.xlane.f32.xlu0 %v73
    %v75 = vpop.xlane.xlu0 %74
    %v76 = vsel %vm59, %v72, 0.0
    %77 = vadd.xlane.f32.xlu0 %v76
    %v78 = vpop.xlane.xlu0 %77
    %v79 = vmul.f32 %v75, %v66
    %v80 = vmul.f32 %v78, %v66
    %v81 = vadd.f32 %v79, 1e-12
    %v82 = vadd.f32 %v80, 1e-12
    %v83 = vrsqrt.pop %v81
    %v84 = vrsqrt.pop %v82
    %v85 = vmul.f32 %v69, %v83
    %v86 = vmul.f32 %v70, %v84
    %v88 = vlaneseq
    %v89 = vshrl.u32 %v88, 7
    %v90 = vsub.s32 0, %v89
    %v91 = vrot.slane %v57, %v90
    %v93 = vmul.f32 %v85, %v91
    %v94 = vmul.f32 %v86, %v91
    %v96 = vlaneseq
    %v97 = vshrl.u32 %v96, 7
    %v98 = vsub.s32 0, %v97
    %v99 = vrot.slane %v58, %v98
    %v101 = vadd.f32 %v93, %v99
    %v102 = vadd.f32 %v94, %v99
    %v103 = vld [vmem:[%s1] sm:$0x3]
    %v106 = vunpack.c.l.s4 1966171168
    %v107 = vunpack.c.0.s8 %v106
    %v108 = vlaneseq
    %v109 = vshrl.u32 %v108, 7
    %v110 = vsub.s32 %v107, %v109
    %v111 = vrot.slane %v103, %v110
    %v112 = vcombine.high %v111, %v111
    %v114 = vunpack.c.l.s4 1966171168
    %v115 = vunpack.c.0.s8 %v114
    %v116 = vlaneseq
    %v117 = vshrl.u32 %v116, 7
    %v118 = vsub.s32 %v115, %v117
    %v119 = vrot.slane %v111, %v118
    %v121 = vunpack.c.l.s4 1966171168
    %v122 = vunpack.c.0.s8 %v121
    %v123 = vlaneseq
    %v124 = vshrl.u32 %v123, 7
    %v125 = vsub.s32 %v122, %v124
    %v126 = vrot.slane %v112, %v125
    %v127 = vpack.c.bf16 %v102, %v101
    %v128 = vld [vmem:[%s4] sm:$0xf]
    %v129 = vld [vmem:[%s4 + $0x4] sm:$0xf]
    %v130 = vld [vmem:[%s4 + $0x8] sm:$0xf]
    %v131 = vld [vmem:[%s4 + $0xc] sm:$0xf]
    %v132 = vld [vmem:[%s5] sm:$0x1]
    %v134 = vlaneseq
    %v135 = vshrl.u32 %v134, 7
    %v136 = vsub.s32 0, %v135
    %v137 = vrot.slane %v132, %v136
    %v143 = vunpack.c.l.b16 %v128
    %v144 = vunpack.c.l.b16 %v129
    %v145 = vunpack.c.l.b16 %v130
    %v146 = vunpack.c.l.b16 %v131
    %v147 = vpack.c.b16 %v144, %v143
    %v148 = vpack.c.b16 %v146, %v145
    %v152 = vsel %vm59, %v127, 0
    %154 = vmatprep.subr.bf16.mxu0 0
    %155 = vmatpush1.bf16.msra.mxu0 %v147
    %156 = vmatprep.subr.bf16.mxu0 0
    %157 = vmatpush1.bf16.msra.mxu0 %v148
    %158 = vmatprep.subr.bf16.mxu0 0
    %159 = vmatpush1.bf16.msra.mxu0 0
    %160 = vmatprep.subr.bf16.mxu0 0
    %161 = vmatpush1.bf16.msra.mxu0 0
    %162 = vmatprep.subr.bf16.mxu0 0
    %163 = vmatpush1.bf16.msra.mxu0 0
    %164 = vmatprep.subr.bf16.mxu0 0
    %165 = vmatpush1.bf16.msra.mxu0 0
    %166 = vmatprep.subr.bf16.mxu0 0
    %167 = vmatpush1.bf16.msra.mxu0 0
    %168 = vmatprep.subr.bf16.mxu0 0
    %169 = vmatpush1.bf16.msra.mxu0 0
    %170 = vmatprep.subr.bf16.mxu0 0
    %171 = vmatpush1.bf16.msra.mxu0 0
    %172 = vmatprep.subr.bf16.mxu0 0
    %173 = vmatpush1.bf16.msra.mxu0 0
    %174 = vmatprep.subr.bf16.mxu0 0
    %175 = vmatpush1.bf16.msra.mxu0 0
    %176 = vmatprep.subr.bf16.mxu0 0
    %177 = vmatpush1.bf16.msra.mxu0 0
    %178 = vmatprep.subr.bf16.mxu0 0
    %179 = vmatpush1.bf16.msra.mxu0 0
    %180 = vmatprep.subr.bf16.mxu0 0
    %181 = vmatpush1.bf16.msra.mxu0 0
    %182 = vmatprep.subr.bf16.mxu0 0
    %183 = vmatpush1.bf16.msra.mxu0 0
    %184 = vmatprep.subr.bf16.mxu0 0
    %185 = vmatpush1.bf16.msra.mxu0 0
    %186 = vmatprep.mubr.bf16.mxu0 0
    %187 = vmatmul.mubr.bf16.gmra.mrb[0].mxu0 %v152
    %v188 = vpop.f32.mrb[0].mxu0
    %v189 = vadd.f32 %v137, %v188
    %v190 = vpop.f32.mrb[0].mxu0
    %v191 = vpop.f32.mrb[0].mxu0
    %v192 = vadd.f32 %v137, %v191
    %v193 = vpop.f32.mrb[0].mxu0
    %194 = vdwg.mxu0
    %v195 = vmul.f32 %v189, 0.35355338
    %v196 = vmul.f32 %v192, 0.35355338
    %v197 = vpack.c.bf16 %v195, %v195
    %v198 = vpack.c.bf16 %v196, %v196
    %v199 = vpack.c.bf16 %v189, %v189
    %v200 = vpack.c.bf16 %v192, %v192
    %202 = vrot.lane.b32.xlu0 %v199, 96
    %v203 = vpop.permute.xlu0 %202
    %vm204 = vcmask 64512
    %v206 = vsel %vm204, %v197, 0
    %v209 = vsel %vm204, %v203, 0
    %211 = vmatprep.subr.bf16.mxu0 0
    %212 = vmatpush1.bf16.xpose.msra.mxu0 %v209
    %213 = vmatprep.subr.bf16.mxu0 0
    %214 = vmatpush1.bf16.xpose.msra.mxu0 0
    %215 = vmatprep.subr.bf16.mxu0 0
    %216 = vmatpush1.bf16.xpose.msra.mxu0 0
    %217 = vmatprep.subr.bf16.mxu0 0
    %218 = vmatpush1.bf16.xpose.msra.mxu0 0
    %219 = vmatprep.subr.bf16.mxu0 0
    %220 = vmatpush1.bf16.xpose.msra.mxu0 0
    %221 = vmatprep.subr.bf16.mxu0 0
    %222 = vmatpush1.bf16.xpose.msra.mxu0 0
    %223 = vmatprep.subr.bf16.mxu0 0
    %224 = vmatpush1.bf16.xpose.msra.mxu0 0
    %225 = vmatprep.subr.bf16.mxu0 0
    %226 = vmatpush1.bf16.xpose.msra.mxu0 0
    %227 = vmatprep.subr.bf16.mxu0 0
    %228 = vmatpush1.bf16.xpose.msra.mxu0 0
    %229 = vmatprep.subr.bf16.mxu0 0
    %230 = vmatpush1.bf16.xpose.msra.mxu0 0
    %231 = vmatprep.subr.bf16.mxu0 0
    %232 = vmatpush1.bf16.xpose.msra.mxu0 0
    %233 = vmatprep.subr.bf16.mxu0 0
    %234 = vmatpush1.bf16.xpose.msra.mxu0 0
    %235 = vmatprep.subr.bf16.mxu0 0
    %236 = vmatpush1.bf16.xpose.msra.mxu0 0
    %237 = vmatprep.subr.bf16.mxu0 0
    %238 = vmatpush1.bf16.xpose.msra.mxu0 0
    %239 = vmatprep.subr.bf16.mxu0 0
    %240 = vmatpush1.bf16.xpose.msra.mxu0 0
    %241 = vmatprep.subr.bf16.mxu0 0
    %242 = vmatpush1.bf16.xpose.msra.mxu0 0
    %243 = vmatprep.mubr.bf16.mxu0 0
    %244 = vmatmul.mubr.bf16.gmra.mrb[0].mxu0 %v206
    %v245 = vpop.f32.mrb[0].mxu0
    %v246 = vadd.f32 0.0, %v245
    %v247 = vpop.f32.mrb[0].mxu0
    %v248 = vpop.f32.mrb[0].mxu0
    %v249 = vpop.f32.mrb[0].mxu0
    %250 = vdwg.mxu0
    %252 = vrot.lane.b32.xlu0 %v200, 96
    %v253 = vpop.permute.xlu0 %252
    %v255 = vsel %vm204, %v198, 0
    %v258 = vsel %vm204, %v253, 0
    %260 = vmatprep.subr.bf16.mxu0 0
    %261 = vmatpush1.bf16.xpose.msra.mxu0 %v258
    %262 = vmatprep.subr.bf16.mxu0 0
    %263 = vmatpush1.bf16.xpose.msra.mxu0 0
    %264 = vmatprep.subr.bf16.mxu0 0
    %265 = vmatpush1.bf16.xpose.msra.mxu0 0
    %266 = vmatprep.subr.bf16.mxu0 0
    %267 = vmatpush1.bf16.xpose.msra.mxu0 0
    %268 = vmatprep.subr.bf16.mxu0 0
    %269 = vmatpush1.bf16.xpose.msra.mxu0 0
    %270 = vmatprep.subr.bf16.mxu0 0
    %271 = vmatpush1.bf16.xpose.msra.mxu0 0
    %272 = vmatprep.subr.bf16.mxu0 0
    %273 = vmatpush1.bf16.xpose.msra.mxu0 0
    %274 = vmatprep.subr.bf16.mxu0 0
    %275 = vmatpush1.bf16.xpose.msra.mxu0 0
    %276 = vmatprep.subr.bf16.mxu0 0
    %277 = vmatpush1.bf16.xpose.msra.mxu0 0
    %278 = vmatprep.subr.bf16.mxu0 0
    %279 = vmatpush1.bf16.xpose.msra.mxu0 0
    %280 = vmatprep.subr.bf16.mxu0 0
    %281 = vmatpush1.bf16.xpose.msra.mxu0 0
    %282 = vmatprep.subr.bf16.mxu0 0
    %283 = vmatpush1.bf16.xpose.msra.mxu0 0
    %284 = vmatprep.subr.bf16.mxu0 0
    %285 = vmatpush1.bf16.xpose.msra.mxu0 0
    %286 = vmatprep.subr.bf16.mxu0 0
    %287 = vmatpush1.bf16.xpose.msra.mxu0 0
    %288 = vmatprep.subr.bf16.mxu0 0
    %289 = vmatpush1.bf16.xpose.msra.mxu0 0
    %290 = vmatprep.subr.bf16.mxu0 0
    %291 = vmatpush1.bf16.xpose.msra.mxu0 0
    %292 = vmatprep.mubr.bf16.mxu0 0
    %293 = vmatmul.mubr.bf16.gmra.mrb[0].mxu0 %v255
    %v294 = vpop.f32.mrb[0].mxu0
    %v295 = vadd.f32 0.0, %v294
    %v296 = vpop.f32.mrb[0].mxu0
    %v297 = vpop.f32.mrb[0].mxu0
    %v298 = vpop.f32.mrb[0].mxu0
    %299 = vdwg.mxu0
    %301 = vrot.lane.b32.xlu0 %v197, 120
    %v302 = vpop.permute.xlu0 %301
    %303 = vrot.lane.b32.xlu0 %v199, 88
    %v304 = vpop.permute.xlu0 %303
    %v306 = vsel %vm204, %v302, 0
    %v309 = vsel %vm204, %v304, 0
    %311 = vmatprep.subr.bf16.mxu0 0
    %312 = vmatpush1.bf16.xpose.msra.mxu0 %v309
    %313 = vmatprep.subr.bf16.mxu0 0
    %314 = vmatpush1.bf16.xpose.msra.mxu0 0
    %315 = vmatprep.subr.bf16.mxu0 0
    %316 = vmatpush1.bf16.xpose.msra.mxu0 0
    %317 = vmatprep.subr.bf16.mxu0 0
    %318 = vmatpush1.bf16.xpose.msra.mxu0 0
    %319 = vmatprep.subr.bf16.mxu0 0
    %320 = vmatpush1.bf16.xpose.msra.mxu0 0
    %321 = vmatprep.subr.bf16.mxu0 0
    %322 = vmatpush1.bf16.xpose.msra.mxu0 0
    %323 = vmatprep.subr.bf16.mxu0 0
    %324 = vmatpush1.bf16.xpose.msra.mxu0 0
    %325 = vmatprep.subr.bf16.mxu0 0
    %326 = vmatpush1.bf16.xpose.msra.mxu0 0
    %327 = vmatprep.subr.bf16.mxu0 0
    %328 = vmatpush1.bf16.xpose.msra.mxu0 0
    %329 = vmatprep.subr.bf16.mxu0 0
    %330 = vmatpush1.bf16.xpose.msra.mxu0 0
    %331 = vmatprep.subr.bf16.mxu0 0
    %332 = vmatpush1.bf16.xpose.msra.mxu0 0
    %333 = vmatprep.subr.bf16.mxu0 0
    %334 = vmatpush1.bf16.xpose.msra.mxu0 0
    %335 = vmatprep.subr.bf16.mxu0 0
    %336 = vmatpush1.bf16.xpose.msra.mxu0 0
    %337 = vmatprep.subr.bf16.mxu0 0
    %338 = vmatpush1.bf16.xpose.msra.mxu0 0
    %339 = vmatprep.subr.bf16.mxu0 0
    %340 = vmatpush1.bf16.xpose.msra.mxu0 0
    %341 = vmatprep.subr.bf16.mxu0 0
    %342 = vmatpush1.bf16.xpose.msra.mxu0 0
    %343 = vmatprep.mubr.bf16.mxu0 0
    %344 = vmatmul.mubr.bf16.gmra.mrb[0].mxu0 %v306
    %v345 = vpop.f32.mrb[0].mxu0
    %v346 = vadd.f32 0.0, %v345
    %v347 = vpop.f32.mrb[0].mxu0
    %v348 = vpop.f32.mrb[0].mxu0
    %v349 = vpop.f32.mrb[0].mxu0
    %350 = vdwg.mxu0
    %352 = vrot.lane.b32.xlu0 %v198, 120
    %v353 = vpop.permute.xlu0 %352
    %354 = vrot.lane.b32.xlu0 %v200, 88
    %v355 = vpop.permute.xlu0 %354
    %v357 = vsel %vm204, %v353, 0
    %v360 = vsel %vm204, %v355, 0
    %362 = vmatprep.subr.bf16.mxu0 0
    %363 = vmatpush1.bf16.xpose.msra.mxu0 %v360
    %364 = vmatprep.subr.bf16.mxu0 0
    %365 = vmatpush1.bf16.xpose.msra.mxu0 0
    %366 = vmatprep.subr.bf16.mxu0 0
    %367 = vmatpush1.bf16.xpose.msra.mxu0 0
    %368 = vmatprep.subr.bf16.mxu0 0
    %369 = vmatpush1.bf16.xpose.msra.mxu0 0
    %370 = vmatprep.subr.bf16.mxu0 0
    %371 = vmatpush1.bf16.xpose.msra.mxu0 0
    %372 = vmatprep.subr.bf16.mxu0 0
    %373 = vmatpush1.bf16.xpose.msra.mxu0 0
    %374 = vmatprep.subr.bf16.mxu0 0
    %375 = vmatpush1.bf16.xpose.msra.mxu0 0
    %376 = vmatprep.subr.bf16.mxu0 0
    %377 = vmatpush1.bf16.xpose.msra.mxu0 0
    %378 = vmatprep.subr.bf16.mxu0 0
    %379 = vmatpush1.bf16.xpose.msra.mxu0 0
    %380 = vmatprep.subr.bf16.mxu0 0
    %381 = vmatpush1.bf16.xpose.msra.mxu0 0
    %382 = vmatprep.subr.bf16.mxu0 0
    %383 = vmatpush1.bf16.xpose.msra.mxu0 0
    %384 = vmatprep.subr.bf16.mxu0 0
    %385 = vmatpush1.bf16.xpose.msra.mxu0 0
    %386 = vmatprep.subr.bf16.mxu0 0
    %387 = vmatpush1.bf16.xpose.msra.mxu0 0
    %388 = vmatprep.subr.bf16.mxu0 0
    %389 = vmatpush1.bf16.xpose.msra.mxu0 0
    %390 = vmatprep.subr.bf16.mxu0 0
    %391 = vmatpush1.bf16.xpose.msra.mxu0 0
    %392 = vmatprep.subr.bf16.mxu0 0
    %393 = vmatpush1.bf16.xpose.msra.mxu0 0
    %394 = vmatprep.mubr.bf16.mxu0 0
    %395 = vmatmul.mubr.bf16.gmra.mrb[0].mxu0 %v357
    %v396 = vpop.f32.mrb[0].mxu0
    %v397 = vadd.f32 0.0, %v396
    %v398 = vpop.f32.mrb[0].mxu0
    %v399 = vpop.f32.mrb[0].mxu0
    %v400 = vpop.f32.mrb[0].mxu0
    %401 = vdwg.mxu0
    %402 = vrot.lane.b32.xlu0 %v197, 112
    %v403 = vpop.permute.xlu0 %402
    %404 = vrot.lane.b32.xlu0 %v199, 80
    %v405 = vpop.permute.xlu0 %404
    %v407 = vsel %vm204, %v403, 0
    %v410 = vsel %vm204, %v405, 0
    %412 = vmatprep.subr.bf16.mxu0 0
    %413 = vmatpush1.bf16.xpose.msra.mxu0 %v410
    %414 = vmatprep.subr.bf16.mxu0 0
    %415 = vmatpush1.bf16.xpose.msra.mxu0 0
    %416 = vmatprep.subr.bf16.mxu0 0
    %417 = vmatpush1.bf16.xpose.msra.mxu0 0
    %418 = vmatprep.subr.bf16.mxu0 0
    %419 = vmatpush1.bf16.xpose.msra.mxu0 0
    %420 = vmatprep.subr.bf16.mxu0 0
    %421 = vmatpush1.bf16.xpose.msra.mxu0 0
    %422 = vmatprep.subr.bf16.mxu0 0
    %423 = vmatpush1.bf16.xpose.msra.mxu0 0
    %424 = vmatprep.subr.bf16.mxu0 0
    %425 = vmatpush1.bf16.xpose.msra.mxu0 0
    %426 = vmatprep.subr.bf16.mxu0 0
    %427 = vmatpush1.bf16.xpose.msra.mxu0 0
    %428 = vmatprep.subr.bf16.mxu0 0
    %429 = vmatpush1.bf16.xpose.msra.mxu0 0
    %430 = vmatprep.subr.bf16.mxu0 0
    %431 = vmatpush1.bf16.xpose.msra.mxu0 0
    %432 = vmatprep.subr.bf16.mxu0 0
    %433 = vmatpush1.bf16.xpose.msra.mxu0 0
    %434 = vmatprep.subr.bf16.mxu0 0
    %435 = vmatpush1.bf16.xpose.msra.mxu0 0
    %436 = vmatprep.subr.bf16.mxu0 0
    %437 = vmatpush1.bf16.xpose.msra.mxu0 0
    %438 = vmatprep.subr.bf16.mxu0 0
    %439 = vmatpush1.bf16.xpose.msra.mxu0 0
    %440 = vmatprep.subr.bf16.mxu0 0
    %441 = vmatpush1.bf16.xpose.msra.mxu0 0
    %442 = vmatprep.subr.bf16.mxu0 0
    %443 = vmatpush1.bf16.xpose.msra.mxu0 0
    %444 = vmatprep.mubr.bf16.mxu0 0
    %445 = vmatmul.mubr.bf16.gmra.mrb[0].mxu0 %v407
    %v446 = vpop.f32.mrb[0].mxu0
    %v447 = vadd.f32 0.0, %v446
    %v448 = vpop.f32.mrb[0].mxu0
    %v449 = vpop.f32.mrb[0].mxu0
    %v450 = vpop.f32.mrb[0].mxu0
    %451 = vdwg.mxu0
    %452 = vrot.lane.b32.xlu0 %v198, 112
    %v453 = vpop.permute.xlu0 %452
    %454 = vrot.lane.b32.xlu0 %v200, 80
    %v455 = vpop.permute.xlu0 %454
    %v457 = vsel %vm204, %v453, 0
    %v460 = vsel %vm204, %v455, 0
    %462 = vmatprep.subr.bf16.mxu0 0
    %463 = vmatpush1.bf16.xpose.msra.mxu0 %v460
    %464 = vmatprep.subr.bf16.mxu0 0
    %465 = vmatpush1.bf16.xpose.msra.mxu0 0
    %466 = vmatprep.subr.bf16.mxu0 0
    %467 = vmatpush1.bf16.xpose.msra.mxu0 0
    %468 = vmatprep.subr.bf16.mxu0 0
    %469 = vmatpush1.bf16.xpose.msra.mxu0 0
    %470 = vmatprep.subr.bf16.mxu0 0
    %471 = vmatpush1.bf16.xpose.msra.mxu0 0
    %472 = vmatprep.subr.bf16.mxu0 0
    %473 = vmatpush1.bf16.xpose.msra.mxu0 0
    %474 = vmatprep.subr.bf16.mxu0 0
    %475 = vmatpush1.bf16.xpose.msra.mxu0 0
    %476 = vmatprep.subr.bf16.mxu0 0
    %477 = vmatpush1.bf16.xpose.msra.mxu0 0
    %478 = vmatprep.subr.bf16.mxu0 0
    %479 = vmatpush1.bf16.xpose.msra.mxu0 0
    %480 = vmatprep.subr.bf16.mxu0 0
    %481 = vmatpush1.bf16.xpose.msra.mxu0 0
    %482 = vmatprep.subr.bf16.mxu0 0
    %483 = vmatpush1.bf16.xpose.msra.mxu0 0
    %484 = vmatprep.subr.bf16.mxu0 0
    %485 = vmatpush1.bf16.xpose.msra.mxu0 0
    %486 = vmatprep.subr.bf16.mxu0 0
    %487 = vmatpush1.bf16.xpose.msra.mxu0 0
    %488 = vmatprep.subr.bf16.mxu0 0
    %489 = vmatpush1.bf16.xpose.msra.mxu0 0
    %490 = vmatprep.subr.bf16.mxu0 0
    %491 = vmatpush1.bf16.xpose.msra.mxu0 0
    %492 = vmatprep.subr.bf16.mxu0 0
    %493 = vmatpush1.bf16.xpose.msra.mxu0 0
    %494 = vmatprep.mubr.bf16.mxu0 0
    %495 = vmatmul.mubr.bf16.gmra.mrb[0].mxu0 %v457
    %v496 = vpop.f32.mrb[0].mxu0
    %v497 = vadd.f32 0.0, %v496
    %v498 = vpop.f32.mrb[0].mxu0
    %v499 = vpop.f32.mrb[0].mxu0
    %v500 = vpop.f32.mrb[0].mxu0
    %501 = vdwg.mxu0
    %502 = vrot.lane.b32.xlu0 %v197, 104
    %v503 = vpop.permute.xlu0 %502
    %504 = vrot.lane.b32.xlu0 %v199, 72
    %v505 = vpop.permute.xlu0 %504
    %v507 = vsel %vm204, %v503, 0
    %v510 = vsel %vm204, %v505, 0
    %512 = vmatprep.subr.bf16.mxu0 0
    %513 = vmatpush1.bf16.xpose.msra.mxu0 %v510
    %514 = vmatprep.subr.bf16.mxu0 0
    %515 = vmatpush1.bf16.xpose.msra.mxu0 0
    %516 = vmatprep.subr.bf16.mxu0 0
    %517 = vmatpush1.bf16.xpose.msra.mxu0 0
    %518 = vmatprep.subr.bf16.mxu0 0
    %519 = vmatpush1.bf16.xpose.msra.mxu0 0
    %520 = vmatprep.subr.bf16.mxu0 0
    %521 = vmatpush1.bf16.xpose.msra.mxu0 0
    %522 = vmatprep.subr.bf16.mxu0 0
    %523 = vmatpush1.bf16.xpose.msra.mxu0 0
    %524 = vmatprep.subr.bf16.mxu0 0
    %525 = vmatpush1.bf16.xpose.msra.mxu0 0
    %526 = vmatprep.subr.bf16.mxu0 0
    %527 = vmatpush1.bf16.xpose.msra.mxu0 0
    %528 = vmatprep.subr.bf16.mxu0 0
    %529 = vmatpush1.bf16.xpose.msra.mxu0 0
    %530 = vmatprep.subr.bf16.mxu0 0
    %531 = vmatpush1.bf16.xpose.msra.mxu0 0
    %532 = vmatprep.subr.bf16.mxu0 0
    %533 = vmatpush1.bf16.xpose.msra.mxu0 0
    %534 = vmatprep.subr.bf16.mxu0 0
    %535 = vmatpush1.bf16.xpose.msra.mxu0 0
    %536 = vmatprep.subr.bf16.mxu0 0
    %537 = vmatpush1.bf16.xpose.msra.mxu0 0
    %538 = vmatprep.subr.bf16.mxu0 0
    %539 = vmatpush1.bf16.xpose.msra.mxu0 0
    %540 = vmatprep.subr.bf16.mxu0 0
    %541 = vmatpush1.bf16.xpose.msra.mxu0 0
    %542 = vmatprep.subr.bf16.mxu0 0
    %543 = vmatpush1.bf16.xpose.msra.mxu0 0
    %544 = vmatprep.mubr.bf16.mxu0 0
    %545 = vmatmul.mubr.bf16.gmra.mrb[0].mxu0 %v507
    %v546 = vpop.f32.mrb[0].mxu0
    %v547 = vadd.f32 0.0, %v546
    %v548 = vpop.f32.mrb[0].mxu0
    %v549 = vpop.f32.mrb[0].mxu0
    %v550 = vpop.f32.mrb[0].mxu0
    %551 = vdwg.mxu0
    %552 = vrot.lane.b32.xlu0 %v198, 104
    %v553 = vpop.permute.xlu0 %552
    %554 = vrot.lane.b32.xlu0 %v200, 72
    %v555 = vpop.permute.xlu0 %554
    %v557 = vsel %vm204, %v553, 0
    %v560 = vsel %vm204, %v555, 0
    %562 = vmatprep.subr.bf16.mxu0 0
    %563 = vmatpush1.bf16.xpose.msra.mxu0 %v560
    %564 = vmatprep.subr.bf16.mxu0 0
    %565 = vmatpush1.bf16.xpose.msra.mxu0 0
    %566 = vmatprep.subr.bf16.mxu0 0
    %567 = vmatpush1.bf16.xpose.msra.mxu0 0
    %568 = vmatprep.subr.bf16.mxu0 0
    %569 = vmatpush1.bf16.xpose.msra.mxu0 0
    %570 = vmatprep.subr.bf16.mxu0 0
    %571 = vmatpush1.bf16.xpose.msra.mxu0 0
    %572 = vmatprep.subr.bf16.mxu0 0
    %573 = vmatpush1.bf16.xpose.msra.mxu0 0
    %574 = vmatprep.subr.bf16.mxu0 0
    %575 = vmatpush1.bf16.xpose.msra.mxu0 0
    %576 = vmatprep.subr.bf16.mxu0 0
    %577 = vmatpush1.bf16.xpose.msra.mxu0 0
    %578 = vmatprep.subr.bf16.mxu0 0
    %579 = vmatpush1.bf16.xpose.msra.mxu0 0
    %580 = vmatprep.subr.bf16.mxu0 0
    %581 = vmatpush1.bf16.xpose.msra.mxu0 0
    %582 = vmatprep.subr.bf16.mxu0 0
    %583 = vmatpush1.bf16.xpose.msra.mxu0 0
    %584 = vmatprep.subr.bf16.mxu0 0
    %585 = vmatpush1.bf16.xpose.msra.mxu0 0
    %586 = vmatprep.subr.bf16.mxu0 0
    %587 = vmatpush1.bf16.xpose.msra.mxu0 0
    %588 = vmatprep.subr.bf16.mxu0 0
    %589 = vmatpush1.bf16.xpose.msra.mxu0 0
    %590 = vmatprep.subr.bf16.mxu0 0
    %591 = vmatpush1.bf16.xpose.msra.mxu0 0
    %592 = vmatprep.subr.bf16.mxu0 0
    %593 = vmatpush1.bf16.xpose.msra.mxu0 0
    %594 = vmatprep.mubr.bf16.mxu0 0
    %595 = vmatmul.mubr.bf16.gmra.mrb[0].mxu0 %v557
    %v596 = vpop.f32.mrb[0].mxu0
    %v597 = vadd.f32 0.0, %v596
    %v598 = vpop.f32.mrb[0].mxu0
    %v599 = vpop.f32.mrb[0].mxu0
    %v600 = vpop.f32.mrb[0].mxu0
    %601 = vdwg.mxu0
    %v602 = vlaneseq
    %v603 = vshrl.u32 %v602, 7
    %v604 = vsub.s32 0, %v603
    %v605 = vrot.slane %v119, %v604
    %v606 = vlaneseq
    %v607 = vshrl.u32 %v606, 7
    %v608 = vsub.s32 0, %v607
    %v609 = vrot.slane %v126, %v608
    %v612 = vadd.f32 %v246, %v605
    %v613 = vadd.f32 %v346, %v605
    %v614 = vadd.f32 %v447, %v605
    %v615 = vadd.f32 %v547, %v605
    %v616 = vadd.f32 %v295, %v609
    %v617 = vadd.f32 %v397, %v609
    %v618 = vadd.f32 %v497, %v609
    %v619 = vadd.f32 %v597, %v609
    %v620 = vsel %vm204, %v612, -inf
    %621 = vmax.xlane.f32.xlu0 %v620
    %v622 = vpop.xlane.xlu0 %621
    %v623 = vsel %vm204, %v613, -inf
    %624 = vmax.xlane.f32.xlu0 %v623
    %v625 = vpop.xlane.xlu0 %624
    %v626 = vsel %vm204, %v614, -inf
    %627 = vmax.xlane.f32.xlu0 %v626
    %v628 = vpop.xlane.xlu0 %627
    %v629 = vsel %vm204, %v615, -inf
    %630 = vmax.xlane.f32.xlu0 %v629
    %v631 = vpop.xlane.xlu0 %630
    %v632 = vsel %vm204, %v616, -inf
    %633 = vmax.xlane.f32.xlu0 %v632
    %v634 = vpop.xlane.xlu0 %633
    %v635 = vsel %vm204, %v617, -inf
    %636 = vmax.xlane.f32.xlu0 %v635
    %v637 = vpop.xlane.xlu0 %636
    %v638 = vsel %vm204, %v618, -inf
    %639 = vmax.xlane.f32.xlu0 %v638
    %v640 = vpop.xlane.xlu0 %639
    %v641 = vsel %vm204, %v619, -inf
    %642 = vmax.xlane.f32.xlu0 %v641
    %v643 = vpop.xlane.xlu0 %642
    %v644 = vsub.f32 %v612, %v622
    %v645 = vsub.f32 %v613, %v625
    %v646 = vsub.f32 %v614, %v628
    %v647 = vsub.f32 %v615, %v631
    %v648 = vsub.f32 %v616, %v634
    %v649 = vsub.f32 %v617, %v637
    %v650 = vsub.f32 %v618, %v640
    %v651 = vsub.f32 %v619, %v643
    %v652 = vmul.f32 %v644, 1.442695
    %v653 = vpow.pop %v652
    %v654 = vmul.f32 %v645, 1.442695
    %v655 = vpow.pop %v654
    %v656 = vmul.f32 %v646, 1.442695
    %v657 = vpow.pop %v656
    %v658 = vmul.f32 %v647, 1.442695
    %v659 = vpow.pop %v658
    %v660 = vmul.f32 %v648, 1.442695
    %v661 = vpow.pop %v660
    %v662 = vmul.f32 %v649, 1.442695
    %v663 = vpow.pop %v662
    %v664 = vmul.f32 %v650, 1.442695
    %v665 = vpow.pop %v664
    %v666 = vmul.f32 %v651, 1.442695
    %v667 = vpow.pop %v666
    %v668 = vsel %vm204, %v653, 0.0
    %669 = vadd.xlane.f32.xlu0 %v668
    %v670 = vpop.xlane.xlu0 %669
    %v671 = vsel %vm204, %v655, 0.0
    %672 = vadd.xlane.f32.xlu0 %v671
    %v673 = vpop.xlane.xlu0 %672
    %v674 = vsel %vm204, %v657, 0.0
    %675 = vadd.xlane.f32.xlu0 %v674
    %v676 = vpop.xlane.xlu0 %675
    %v677 = vsel %vm204, %v659, 0.0
    %678 = vadd.xlane.f32.xlu0 %v677
    %v679 = vpop.xlane.xlu0 %678
    %v680 = vsel %vm204, %v661, 0.0
    %681 = vadd.xlane.f32.xlu0 %v680
    %v682 = vpop.xlane.xlu0 %681
    %v683 = vsel %vm204, %v663, 0.0
    %684 = vadd.xlane.f32.xlu0 %v683
    %v685 = vpop.xlane.xlu0 %684
    %v686 = vsel %vm204, %v665, 0.0
    %687 = vadd.xlane.f32.xlu0 %v686
    %v688 = vpop.xlane.xlu0 %687
    %v689 = vsel %vm204, %v667, 0.0
    %690 = vadd.xlane.f32.xlu0 %v689
    %v691 = vpop.xlane.xlu0 %690
    %v692 = vrcp.pop %v670
    %v693 = vrcp.pop %v673
    %v694 = vrcp.pop %v676
    %v695 = vrcp.pop %v679
    %v696 = vrcp.pop %v682
    %v697 = vrcp.pop %v685
    %v698 = vrcp.pop %v688
    %v699 = vrcp.pop %v691
    %v700 = vmul.f32 %v653, %v692
    %v701 = vmul.f32 %v655, %v693
    %v702 = vmul.f32 %v657, %v694
    %v703 = vmul.f32 %v659, %v695
    %v704 = vmul.f32 %v661, %v696
    %v705 = vmul.f32 %v663, %v697
    %v706 = vmul.f32 %v665, %v698
    %v707 = vmul.f32 %v667, %v699
    %v708 = vpack.c.bf16 %v700, %v700
    %v709 = vpack.c.bf16 %v701, %v701
    %v710 = vpack.c.bf16 %v702, %v702
    %v711 = vpack.c.bf16 %v703, %v703
    %v712 = vpack.c.bf16 %v704, %v704
    %v713 = vpack.c.bf16 %v705, %v705
    %v714 = vpack.c.bf16 %v706, %v706
    %v715 = vpack.c.bf16 %v707, %v707
    %716 = vrot.lane.b32.xlu0 %v199, 64
    %v717 = vpop.permute.xlu0 %716
    %v719 = vsel %vm204, %v708, 0
    %vm721 = vcmask 1043456
    %v723 = vsel %vm721, %v717, 0
    %725 = vmatprep.subr.bf16.mxu0 0
    %726 = vmatpush1.bf16.msra.mxu0 %v723
    %727 = vmatprep.subr.bf16.mxu0 0
    %728 = vmatpush1.bf16.msra.mxu0 0
    %729 = vmatprep.subr.bf16.mxu0 0
    %730 = vmatpush1.bf16.msra.mxu0 0
    %731 = vmatprep.subr.bf16.mxu0 0
    %732 = vmatpush1.bf16.msra.mxu0 0
    %733 = vmatprep.subr.bf16.mxu0 0
    %734 = vmatpush1.bf16.msra.mxu0 0
    %735 = vmatprep.subr.bf16.mxu0 0
    %736 = vmatpush1.bf16.msra.mxu0 0
    %737 = vmatprep.subr.bf16.mxu0 0
    %738 = vmatpush1.bf16.msra.mxu0 0
    %739 = vmatprep.subr.bf16.mxu0 0
    %740 = vmatpush1.bf16.msra.mxu0 0
    %741 = vmatprep.subr.bf16.mxu0 0
    %742 = vmatpush1.bf16.msra.mxu0 0
    %743 = vmatprep.subr.bf16.mxu0 0
    %744 = vmatpush1.bf16.msra.mxu0 0
    %745 = vmatprep.subr.bf16.mxu0 0
    %746 = vmatpush1.bf16.msra.mxu0 0
    %747 = vmatprep.subr.bf16.mxu0 0
    %748 = vmatpush1.bf16.msra.mxu0 0
    %749 = vmatprep.subr.bf16.mxu0 0
    %750 = vmatpush1.bf16.msra.mxu0 0
    %751 = vmatprep.subr.bf16.mxu0 0
    %752 = vmatpush1.bf16.msra.mxu0 0
    %753 = vmatprep.subr.bf16.mxu0 0
    %754 = vmatpush1.bf16.msra.mxu0 0
    %755 = vmatprep.subr.bf16.mxu0 0
    %756 = vmatpush1.bf16.msra.mxu0 0
    %757 = vmatprep.mubr.bf16.mxu0 0
    %758 = vmatmul.mubr.bf16.gmra.mrb[0].mxu0 %v719
    %v759 = vpop.f32.mrb[0].mxu0
    %v760 = vadd.f32 0.0, %v759
    %v761 = vpop.f32.mrb[0].mxu0
    %v762 = vpop.f32.mrb[0].mxu0
    %v763 = vpop.f32.mrb[0].mxu0
    %764 = vdwg.mxu0
    %765 = vrot.lane.b32.xlu0 %v200, 64
    %v766 = vpop.permute.xlu0 %765
    %v768 = vsel %vm204, %v712, 0
    %v771 = vsel %vm721, %v766, 0
    %773 = vmatprep.subr.bf16.mxu0 0
    %774 = vmatpush1.bf16.msra.mxu0 %v771
    %775 = vmatprep.subr.bf16.mxu0 0
    %776 = vmatpush1.bf16.msra.mxu0 0
    %777 = vmatprep.subr.bf16.mxu0 0
    %778 = vmatpush1.bf16.msra.mxu0 0
    %779 = vmatprep.subr.bf16.mxu0 0
    %780 = vmatpush1.bf16.msra.mxu0 0
    %781 = vmatprep.subr.bf16.mxu0 0
    %782 = vmatpush1.bf16.msra.mxu0 0
    %783 = vmatprep.subr.bf16.mxu0 0
    %784 = vmatpush1.bf16.msra.mxu0 0
    %785 = vmatprep.subr.bf16.mxu0 0
    %786 = vmatpush1.bf16.msra.mxu0 0
    %787 = vmatprep.subr.bf16.mxu0 0
    %788 = vmatpush1.bf16.msra.mxu0 0
    %789 = vmatprep.subr.bf16.mxu0 0
    %790 = vmatpush1.bf16.msra.mxu0 0
    %791 = vmatprep.subr.bf16.mxu0 0
    %792 = vmatpush1.bf16.msra.mxu0 0
    %793 = vmatprep.subr.bf16.mxu0 0
    %794 = vmatpush1.bf16.msra.mxu0 0
    %795 = vmatprep.subr.bf16.mxu0 0
    %796 = vmatpush1.bf16.msra.mxu0 0
    %797 = vmatprep.subr.bf16.mxu0 0
    %798 = vmatpush1.bf16.msra.mxu0 0
    %799 = vmatprep.subr.bf16.mxu0 0
    %800 = vmatpush1.bf16.msra.mxu0 0
    %801 = vmatprep.subr.bf16.mxu0 0
    %802 = vmatpush1.bf16.msra.mxu0 0
    %803 = vmatprep.subr.bf16.mxu0 0
    %804 = vmatpush1.bf16.msra.mxu0 0
    %805 = vmatprep.mubr.bf16.mxu0 0
    %806 = vmatmul.mubr.bf16.gmra.mrb[0].mxu0 %v768
    %v807 = vpop.f32.mrb[0].mxu0
    %v808 = vadd.f32 0.0, %v807
    %v809 = vpop.f32.mrb[0].mxu0
    %v810 = vpop.f32.mrb[0].mxu0
    %v811 = vpop.f32.mrb[0].mxu0
    %812 = vdwg.mxu0
    %813 = vrot.lane.b32.xlu0 %v199, 56
    %v814 = vpop.permute.xlu0 %813
    %v816 = vsel %vm204, %v709, 0
    %v819 = vsel %vm721, %v814, 0
    %821 = vmatprep.subr.bf16.mxu0 0
    %822 = vmatpush1.bf16.msra.mxu0 %v819
    %823 = vmatprep.subr.bf16.mxu0 0
    %824 = vmatpush1.bf16.msra.mxu0 0
    %825 = vmatprep.subr.bf16.mxu0 0
    %826 = vmatpush1.bf16.msra.mxu0 0
    %827 = vmatprep.subr.bf16.mxu0 0
    %828 = vmatpush1.bf16.msra.mxu0 0
    %829 = vmatprep.subr.bf16.mxu0 0
    %830 = vmatpush1.bf16.msra.mxu0 0
    %831 = vmatprep.subr.bf16.mxu0 0
    %832 = vmatpush1.bf16.msra.mxu0 0
    %833 = vmatprep.subr.bf16.mxu0 0
    %834 = vmatpush1.bf16.msra.mxu0 0
    %835 = vmatprep.subr.bf16.mxu0 0
    %836 = vmatpush1.bf16.msra.mxu0 0
    %837 = vmatprep.subr.bf16.mxu0 0
    %838 = vmatpush1.bf16.msra.mxu0 0
    %839 = vmatprep.subr.bf16.mxu0 0
    %840 = vmatpush1.bf16.msra.mxu0 0
    %841 = vmatprep.subr.bf16.mxu0 0
    %842 = vmatpush1.bf16.msra.mxu0 0
    %843 = vmatprep.subr.bf16.mxu0 0
    %844 = vmatpush1.bf16.msra.mxu0 0
    %845 = vmatprep.subr.bf16.mxu0 0
    %846 = vmatpush1.bf16.msra.mxu0 0
    %847 = vmatprep.subr.bf16.mxu0 0
    %848 = vmatpush1.bf16.msra.mxu0 0
    %849 = vmatprep.subr.bf16.mxu0 0
    %850 = vmatpush1.bf16.msra.mxu0 0
    %851 = vmatprep.subr.bf16.mxu0 0
    %852 = vmatpush1.bf16.msra.mxu0 0
    %853 = vmatprep.mubr.bf16.mxu0 0
    %854 = vmatmul.mubr.bf16.gmra.mrb[0].mxu0 %v816
    %v855 = vpop.f32.mrb[0].mxu0
    %v856 = vadd.f32 0.0, %v855
    %v857 = vpop.f32.mrb[0].mxu0
    %v858 = vpop.f32.mrb[0].mxu0
    %v859 = vpop.f32.mrb[0].mxu0
    %860 = vdwg.mxu0
    %861 = vrot.lane.b32.xlu0 %v200, 56
    %v862 = vpop.permute.xlu0 %861
    %v864 = vsel %vm204, %v713, 0
    %v867 = vsel %vm721, %v862, 0
    %869 = vmatprep.subr.bf16.mxu0 0
    %870 = vmatpush1.bf16.msra.mxu0 %v867
    %871 = vmatprep.subr.bf16.mxu0 0
    %872 = vmatpush1.bf16.msra.mxu0 0
    %873 = vmatprep.subr.bf16.mxu0 0
    %874 = vmatpush1.bf16.msra.mxu0 0
    %875 = vmatprep.subr.bf16.mxu0 0
    %876 = vmatpush1.bf16.msra.mxu0 0
    %877 = vmatprep.subr.bf16.mxu0 0
    %878 = vmatpush1.bf16.msra.mxu0 0
    %879 = vmatprep.subr.bf16.mxu0 0
    %880 = vmatpush1.bf16.msra.mxu0 0
    %881 = vmatprep.subr.bf16.mxu0 0
    %882 = vmatpush1.bf16.msra.mxu0 0
    %883 = vmatprep.subr.bf16.mxu0 0
    %884 = vmatpush1.bf16.msra.mxu0 0
    %885 = vmatprep.subr.bf16.mxu0 0
    %886 = vmatpush1.bf16.msra.mxu0 0
    %887 = vmatprep.subr.bf16.mxu0 0
    %888 = vmatpush1.bf16.msra.mxu0 0
    %889 = vmatprep.subr.bf16.mxu0 0
    %890 = vmatpush1.bf16.msra.mxu0 0
    %891 = vmatprep.subr.bf16.mxu0 0
    %892 = vmatpush1.bf16.msra.mxu0 0
    %893 = vmatprep.subr.bf16.mxu0 0
    %894 = vmatpush1.bf16.msra.mxu0 0
    %895 = vmatprep.subr.bf16.mxu0 0
    %896 = vmatpush1.bf16.msra.mxu0 0
    %897 = vmatprep.subr.bf16.mxu0 0
    %898 = vmatpush1.bf16.msra.mxu0 0
    %899 = vmatprep.subr.bf16.mxu0 0
    %900 = vmatpush1.bf16.msra.mxu0 0
    %901 = vmatprep.mubr.bf16.mxu0 0
    %902 = vmatmul.mubr.bf16.gmra.mrb[0].mxu0 %v864
    %v903 = vpop.f32.mrb[0].mxu0
    %v904 = vadd.f32 0.0, %v903
    %v905 = vpop.f32.mrb[0].mxu0
    %v906 = vpop.f32.mrb[0].mxu0
    %v907 = vpop.f32.mrb[0].mxu0
    %908 = vdwg.mxu0
    %909 = vrot.lane.b32.xlu0 %v199, 48
    %v910 = vpop.permute.xlu0 %909
    %v912 = vsel %vm204, %v710, 0
    %v915 = vsel %vm721, %v910, 0
    %917 = vmatprep.subr.bf16.mxu0 0
    %918 = vmatpush1.bf16.msra.mxu0 %v915
    %919 = vmatprep.subr.bf16.mxu0 0
    %920 = vmatpush1.bf16.msra.mxu0 0
    %921 = vmatprep.subr.bf16.mxu0 0
    %922 = vmatpush1.bf16.msra.mxu0 0
    %923 = vmatprep.subr.bf16.mxu0 0
    %924 = vmatpush1.bf16.msra.mxu0 0
    %925 = vmatprep.subr.bf16.mxu0 0
    %926 = vmatpush1.bf16.msra.mxu0 0
    %927 = vmatprep.subr.bf16.mxu0 0
    %928 = vmatpush1.bf16.msra.mxu0 0
    %929 = vmatprep.subr.bf16.mxu0 0
    %930 = vmatpush1.bf16.msra.mxu0 0
    %931 = vmatprep.subr.bf16.mxu0 0
    %932 = vmatpush1.bf16.msra.mxu0 0
    %933 = vmatprep.subr.bf16.mxu0 0
    %934 = vmatpush1.bf16.msra.mxu0 0
    %935 = vmatprep.subr.bf16.mxu0 0
    %936 = vmatpush1.bf16.msra.mxu0 0
    %937 = vmatprep.subr.bf16.mxu0 0
    %938 = vmatpush1.bf16.msra.mxu0 0
    %939 = vmatprep.subr.bf16.mxu0 0
    %940 = vmatpush1.bf16.msra.mxu0 0
    %941 = vmatprep.subr.bf16.mxu0 0
    %942 = vmatpush1.bf16.msra.mxu0 0
    %943 = vmatprep.subr.bf16.mxu0 0
    %944 = vmatpush1.bf16.msra.mxu0 0
    %945 = vmatprep.subr.bf16.mxu0 0
    %946 = vmatpush1.bf16.msra.mxu0 0
    %947 = vmatprep.subr.bf16.mxu0 0
    %948 = vmatpush1.bf16.msra.mxu0 0
    %949 = vmatprep.mubr.bf16.mxu0 0
    %950 = vmatmul.mubr.bf16.gmra.mrb[0].mxu0 %v912
    %v951 = vpop.f32.mrb[0].mxu0
    %v952 = vadd.f32 0.0, %v951
    %v953 = vpop.f32.mrb[0].mxu0
    %v954 = vpop.f32.mrb[0].mxu0
    %v955 = vpop.f32.mrb[0].mxu0
    %956 = vdwg.mxu0
    %957 = vrot.lane.b32.xlu0 %v200, 48
    %v958 = vpop.permute.xlu0 %957
    %v960 = vsel %vm204, %v714, 0
    %v963 = vsel %vm721, %v958, 0
    %965 = vmatprep.subr.bf16.mxu0 0
    %966 = vmatpush1.bf16.msra.mxu0 %v963
    %967 = vmatprep.subr.bf16.mxu0 0
    %968 = vmatpush1.bf16.msra.mxu0 0
    %969 = vmatprep.subr.bf16.mxu0 0
    %970 = vmatpush1.bf16.msra.mxu0 0
    %971 = vmatprep.subr.bf16.mxu0 0
    %972 = vmatpush1.bf16.msra.mxu0 0
    %973 = vmatprep.subr.bf16.mxu0 0
    %974 = vmatpush1.bf16.msra.mxu0 0
    %975 = vmatprep.subr.bf16.mxu0 0
    %976 = vmatpush1.bf16.msra.mxu0 0
    %977 = vmatprep.subr.bf16.mxu0 0
    %978 = vmatpush1.bf16.msra.mxu0 0
    %979 = vmatprep.subr.bf16.mxu0 0
    %980 = vmatpush1.bf16.msra.mxu0 0
    %981 = vmatprep.subr.bf16.mxu0 0
    %982 = vmatpush1.bf16.msra.mxu0 0
    %983 = vmatprep.subr.bf16.mxu0 0
    %984 = vmatpush1.bf16.msra.mxu0 0
    %985 = vmatprep.subr.bf16.mxu0 0
    %986 = vmatpush1.bf16.msra.mxu0 0
    %987 = vmatprep.subr.bf16.mxu0 0
    %988 = vmatpush1.bf16.msra.mxu0 0
    %989 = vmatprep.subr.bf16.mxu0 0
    %990 = vmatpush1.bf16.msra.mxu0 0
    %991 = vmatprep.subr.bf16.mxu0 0
    %992 = vmatpush1.bf16.msra.mxu0 0
    %993 = vmatprep.subr.bf16.mxu0 0
    %994 = vmatpush1.bf16.msra.mxu0 0
    %995 = vmatprep.subr.bf16.mxu0 0
    %996 = vmatpush1.bf16.msra.mxu0 0
    %997 = vmatprep.mubr.bf16.mxu0 0
    %998 = vmatmul.mubr.bf16.gmra.mrb[0].mxu0 %v960
    %v999 = vpop.f32.mrb[0].mxu0
    %v1000 = vadd.f32 0.0, %v999
    %v1001 = vpop.f32.mrb[0].mxu0
    %v1002 = vpop.f32.mrb[0].mxu0
    %v1003 = vpop.f32.mrb[0].mxu0
    %1004 = vdwg.mxu0
    %1005 = vrot.lane.b32.xlu0 %v199, 40
    %v1006 = vpop.permute.xlu0 %1005
    %v1008 = vsel %vm204, %v711, 0
    %v1011 = vsel %vm721, %v1006, 0
    %1013 = vmatprep.subr.bf16.mxu0 0
    %1014 = vmatpush1.bf16.msra.mxu0 %v1011
    %1015 = vmatprep.subr.bf16.mxu0 0
    %1016 = vmatpush1.bf16.msra.mxu0 0
    %1017 = vmatprep.subr.bf16.mxu0 0
    %1018 = vmatpush1.bf16.msra.mxu0 0
    %1019 = vmatprep.subr.bf16.mxu0 0
    %1020 = vmatpush1.bf16.msra.mxu0 0
    %1021 = vmatprep.subr.bf16.mxu0 0
    %1022 = vmatpush1.bf16.msra.mxu0 0
    %1023 = vmatprep.subr.bf16.mxu0 0
    %1024 = vmatpush1.bf16.msra.mxu0 0
    %1025 = vmatprep.subr.bf16.mxu0 0
    %1026 = vmatpush1.bf16.msra.mxu0 0
    %1027 = vmatprep.subr.bf16.mxu0 0
    %1028 = vmatpush1.bf16.msra.mxu0 0
    %1029 = vmatprep.subr.bf16.mxu0 0
    %1030 = vmatpush1.bf16.msra.mxu0 0
    %1031 = vmatprep.subr.bf16.mxu0 0
    %1032 = vmatpush1.bf16.msra.mxu0 0
    %1033 = vmatprep.subr.bf16.mxu0 0
    %1034 = vmatpush1.bf16.msra.mxu0 0
    %1035 = vmatprep.subr.bf16.mxu0 0
    %1036 = vmatpush1.bf16.msra.mxu0 0
    %1037 = vmatprep.subr.bf16.mxu0 0
    %1038 = vmatpush1.bf16.msra.mxu0 0
    %1039 = vmatprep.subr.bf16.mxu0 0
    %1040 = vmatpush1.bf16.msra.mxu0 0
    %1041 = vmatprep.subr.bf16.mxu0 0
    %1042 = vmatpush1.bf16.msra.mxu0 0
    %1043 = vmatprep.subr.bf16.mxu0 0
    %1044 = vmatpush1.bf16.msra.mxu0 0
    %1045 = vmatprep.mubr.bf16.mxu0 0
    %1046 = vmatmul.mubr.bf16.gmra.mrb[0].mxu0 %v1008
    %v1047 = vpop.f32.mrb[0].mxu0
    %v1048 = vadd.f32 0.0, %v1047
    %v1049 = vpop.f32.mrb[0].mxu0
    %v1050 = vpop.f32.mrb[0].mxu0
    %v1051 = vpop.f32.mrb[0].mxu0
    %1052 = vdwg.mxu0
    %1053 = vrot.lane.b32.xlu0 %v200, 40
    %v1054 = vpop.permute.xlu0 %1053
    %v1056 = vsel %vm204, %v715, 0
    %v1059 = vsel %vm721, %v1054, 0
    %1061 = vmatprep.subr.bf16.mxu0 0
    %1062 = vmatpush1.bf16.msra.mxu0 %v1059
    %1063 = vmatprep.subr.bf16.mxu0 0
    %1064 = vmatpush1.bf16.msra.mxu0 0
    %1065 = vmatprep.subr.bf16.mxu0 0
    %1066 = vmatpush1.bf16.msra.mxu0 0
    %1067 = vmatprep.subr.bf16.mxu0 0
    %1068 = vmatpush1.bf16.msra.mxu0 0
    %1069 = vmatprep.subr.bf16.mxu0 0
    %1070 = vmatpush1.bf16.msra.mxu0 0
    %1071 = vmatprep.subr.bf16.mxu0 0
    %1072 = vmatpush1.bf16.msra.mxu0 0
    %1073 = vmatprep.subr.bf16.mxu0 0
    %1074 = vmatpush1.bf16.msra.mxu0 0
    %1075 = vmatprep.subr.bf16.mxu0 0
    %1076 = vmatpush1.bf16.msra.mxu0 0
    %1077 = vmatprep.subr.bf16.mxu0 0
    %1078 = vmatpush1.bf16.msra.mxu0 0
    %1079 = vmatprep.subr.bf16.mxu0 0
    %1080 = vmatpush1.bf16.msra.mxu0 0
    %1081 = vmatprep.subr.bf16.mxu0 0
    %1082 = vmatpush1.bf16.msra.mxu0 0
    %1083 = vmatprep.subr.bf16.mxu0 0
    %1084 = vmatpush1.bf16.msra.mxu0 0
    %1085 = vmatprep.subr.bf16.mxu0 0
    %1086 = vmatpush1.bf16.msra.mxu0 0
    %1087 = vmatprep.subr.bf16.mxu0 0
    %1088 = vmatpush1.bf16.msra.mxu0 0
    %1089 = vmatprep.subr.bf16.mxu0 0
    %1090 = vmatpush1.bf16.msra.mxu0 0
    %1091 = vmatprep.subr.bf16.mxu0 0
    %1092 = vmatpush1.bf16.msra.mxu0 0
    %1093 = vmatprep.mubr.bf16.mxu0 0
    %1094 = vmatmul.mubr.bf16.gmra.mrb[0].mxu0 %v1056
    %v1095 = vpop.f32.mrb[0].mxu0
    %v1096 = vadd.f32 0.0, %v1095
    %v1097 = vpop.f32.mrb[0].mxu0
    %v1098 = vpop.f32.mrb[0].mxu0
    %v1099 = vpop.f32.mrb[0].mxu0
    %1100 = vdwg.mxu0
    %1103 = vrot.lane.b32.xlu0 %v856, 8
    %v1104 = vpop.permute.xlu0 %1103
    %1105 = vrot.lane.b32.xlu0 %v904, 8
    %v1106 = vpop.permute.xlu0 %1105
    %1111 = vrot.lane.b32.xlu0 %v952, 16
    %v1112 = vpop.permute.xlu0 %1111
    %1113 = vrot.lane.b32.xlu0 %v1000, 16
    %v1114 = vpop.permute.xlu0 %1113
    %1119 = vrot.lane.b32.xlu0 %v1048, 24
    %v1120 = vpop.permute.xlu0 %1119
    %1121 = vrot.lane.b32.xlu0 %v1096, 24
    %v1122 = vpop.permute.xlu0 %1121
    %v1125 = vsel %vm204, %v760, %v1104
    %v1126 = vsel %vm204, %v808, %v1106
    %vm1127 = vcmask 130048
    %v1128 = vsel %vm1127, %v1125, %v1112
    %v1129 = vsel %vm1127, %v1126, %v1114
    %vm1130 = vcmask 195584
    %v1131 = vsel %vm1130, %v1128, %v1120
    %v1132 = vsel %vm1130, %v1129, %v1122
    %v1133 = vpack.c.bf16 %v1132, %v1131
    %v1134 = vld [vmem:[%s6] sm:$0xf]
    %v1135 = vld [vmem:[%s6 + $0x4] sm:$0xf]
    %v1136 = vld [vmem:[%s6 + $0x8] sm:$0xf]
    %v1137 = vld [vmem:[%s6 + $0xc] sm:$0xf]
    %v1138 = vld [vmem:[%s7] sm:$0x1]
    %v1140 = vlaneseq
    %v1141 = vshrl.u32 %v1140, 7
    %v1142 = vsub.s32 0, %v1141
    %v1143 = vrot.slane %v1138, %v1142
    %v1149 = vunpack.c.l.b16 %v1134
    %v1150 = vunpack.c.l.b16 %v1135
    %v1151 = vunpack.c.l.b16 %v1136
    %v1152 = vunpack.c.l.b16 %v1137
    %v1153 = vpack.c.b16 %v1150, %v1149
    %v1154 = vpack.c.b16 %v1152, %v1151
    %v1158 = vsel %vm59, %v1133, 0
    %1160 = vmatprep.subr.bf16.mxu0 0
    %1161 = vmatpush1.bf16.msra.mxu0 %v1153
    %1162 = vmatprep.subr.bf16.mxu0 0
    %1163 = vmatpush1.bf16.msra.mxu0 %v1154
    %1164 = vmatprep.subr.bf16.mxu0 0
    %1165 = vmatpush1.bf16.msra.mxu0 0
    %1166 = vmatprep.subr.bf16.mxu0 0
    %1167 = vmatpush1.bf16.msra.mxu0 0
    %1168 = vmatprep.subr.bf16.mxu0 0
    %1169 = vmatpush1.bf16.msra.mxu0 0
    %1170 = vmatprep.subr.bf16.mxu0 0
    %1171 = vmatpush1.bf16.msra.mxu0 0
    %1172 = vmatprep.subr.bf16.mxu0 0
    %1173 = vmatpush1.bf16.msra.mxu0 0
    %1174 = vmatprep.subr.bf16.mxu0 0
    %1175 = vmatpush1.bf16.msra.mxu0 0
    %1176 = vmatprep.subr.bf16.mxu0 0
    %1177 = vmatpush1.bf16.msra.mxu0 0
    %1178 = vmatprep.subr.bf16.mxu0 0
    %1179 = vmatpush1.bf16.msra.mxu0 0
    %1180 = vmatprep.subr.bf16.mxu0 0
    %1181 = vmatpush1.bf16.msra.mxu0 0
    %1182 = vmatprep.subr.bf16.mxu0 0
    %1183 = vmatpush1.bf16.msra.mxu0 0
    %1184 = vmatprep.subr.bf16.mxu0 0
    %1185 = vmatpush1.bf16.msra.mxu0 0
    %1186 = vmatprep.subr.bf16.mxu0 0
    %1187 = vmatpush1.bf16.msra.mxu0 0
    %1188 = vmatprep.subr.bf16.mxu0 0
    %1189 = vmatpush1.bf16.msra.mxu0 0
    %1190 = vmatprep.subr.bf16.mxu0 0
    %1191 = vmatpush1.bf16.msra.mxu0 0
    %1192 = vmatprep.mubr.bf16.mxu0 0
    %1193 = vmatmul.mubr.bf16.gmra.mrb[0].mxu0 %v1158
    %v1194 = vpop.f32.mrb[0].mxu0
    %v1195 = vadd.f32 %v1143, %v1194
    %v1196 = vpop.f32.mrb[0].mxu0
    %v1197 = vpop.f32.mrb[0].mxu0
    %v1198 = vadd.f32 %v1143, %v1197
    %v1199 = vpop.f32.mrb[0].mxu0
    %1200 = vdwg.mxu0
    %v1201 = vadd.f32 %v101, %v1195
    %v1202 = vadd.f32 %v102, %v1198
    %v1203 = vld [vmem:[%s8] sm:$0x1]
    %v1204 = vld [vmem:[%s9] sm:$0x1]
    %v1205 = vsel %vm59, %v1201, 0.0
    %1206 = vadd.xlane.f32.xlu0 %v1205
    %v1207 = vpop.xlane.xlu0 %1206
    %v1208 = vsel %vm59, %v1202, 0.0
    %1209 = vadd.xlane.f32.xlu0 %v1208
    %v1210 = vpop.xlane.xlu0 %1209
    %v1211 = vmul.f32 %v1207, %v66
    %v1212 = vmul.f32 %v1210, %v66
    %v1213 = vsub.f32 %v1201, %v1211
    %v1214 = vsub.f32 %v1202, %v1212
    %v1215 = vmul.f32 %v1213, %v1213
    %v1216 = vmul.f32 %v1214, %v1214
    %v1217 = vsel %vm59, %v1215, 0.0
    %1218 = vadd.xlane.f32.xlu0 %v1217
    %v1219 = vpop.xlane.xlu0 %1218
    %v1220 = vsel %vm59, %v1216, 0.0
    %1221 = vadd.xlane.f32.xlu0 %v1220
    %v1222 = vpop.xlane.xlu0 %1221
    %v1223 = vmul.f32 %v1219, %v66
    %v1224 = vmul.f32 %v1222, %v66
    %v1225 = vadd.f32 %v1223, 1e-12
    %v1226 = vadd.f32 %v1224, 1e-12
    %v1227 = vrsqrt.pop %v1225
    %v1228 = vrsqrt.pop %v1226
    %v1229 = vmul.f32 %v1213, %v1227
    %v1230 = vmul.f32 %v1214, %v1228
    %v1232 = vlaneseq
    %v1233 = vshrl.u32 %v1232, 7
    %v1234 = vsub.s32 0, %v1233
    %v1235 = vrot.slane %v1203, %v1234
    %v1237 = vmul.f32 %v1229, %v1235
    %v1238 = vmul.f32 %v1230, %v1235
    %v1240 = vlaneseq
    %v1241 = vshrl.u32 %v1240, 7
    %v1242 = vsub.s32 0, %v1241
    %v1243 = vrot.slane %v1204, %v1242
    %v1245 = vadd.f32 %v1237, %v1243
    %v1246 = vadd.f32 %v1238, %v1243
    %v1247 = vpack.c.bf16 %v1246, %v1245
    %v1248 = vld [vmem:[%s10] sm:$0xf]
    %v1249 = vld [vmem:[%s10 + $0x4] sm:$0xf]
    %v1250 = vld [vmem:[%s10 + $0x8] sm:$0xf]
    %v1251 = vld [vmem:[%s10 + $0xc] sm:$0xf]
    %v1252 = vld [vmem:[%s11] sm:$0x1]
    %v1254 = vlaneseq
    %v1255 = vshrl.u32 %v1254, 7
    %v1256 = vsub.s32 0, %v1255
    %v1257 = vrot.slane %v1252, %v1256
    %v1263 = vunpack.c.l.b16 %v1248
    %v1264 = vunpack.c.l.b16 %v1249
    %v1265 = vunpack.c.l.b16 %v1250
    %v1266 = vunpack.c.l.b16 %v1251
    %v1267 = vpack.c.b16 %v1264, %v1263
    %v1268 = vpack.c.b16 %v1266, %v1265
    %v1272 = vsel %vm59, %v1247, 0
    %1274 = vmatprep.subr.bf16.mxu0 0
    %1275 = vmatpush1.bf16.msra.mxu0 %v1267
    %1276 = vmatprep.subr.bf16.mxu0 0
    %1277 = vmatpush1.bf16.msra.mxu0 %v1268
    %1278 = vmatprep.subr.bf16.mxu0 0
    %1279 = vmatpush1.bf16.msra.mxu0 0
    %1280 = vmatprep.subr.bf16.mxu0 0
    %1281 = vmatpush1.bf16.msra.mxu0 0
    %1282 = vmatprep.subr.bf16.mxu0 0
    %1283 = vmatpush1.bf16.msra.mxu0 0
    %1284 = vmatprep.subr.bf16.mxu0 0
    %1285 = vmatpush1.bf16.msra.mxu0 0
    %1286 = vmatprep.subr.bf16.mxu0 0
    %1287 = vmatpush1.bf16.msra.mxu0 0
    %1288 = vmatprep.subr.bf16.mxu0 0
    %1289 = vmatpush1.bf16.msra.mxu0 0
    %1290 = vmatprep.subr.bf16.mxu0 0
    %1291 = vmatpush1.bf16.msra.mxu0 0
    %1292 = vmatprep.subr.bf16.mxu0 0
    %1293 = vmatpush1.bf16.msra.mxu0 0
    %1294 = vmatprep.subr.bf16.mxu0 0
    %1295 = vmatpush1.bf16.msra.mxu0 0
    %1296 = vmatprep.subr.bf16.mxu0 0
    %1297 = vmatpush1.bf16.msra.mxu0 0
    %1298 = vmatprep.subr.bf16.mxu0 0
    %1299 = vmatpush1.bf16.msra.mxu0 0
    %1300 = vmatprep.subr.bf16.mxu0 0
    %1301 = vmatpush1.bf16.msra.mxu0 0
    %1302 = vmatprep.subr.bf16.mxu0 0
    %1303 = vmatpush1.bf16.msra.mxu0 0
    %1304 = vmatprep.subr.bf16.mxu0 0
    %1305 = vmatpush1.bf16.msra.mxu0 0
    %1306 = vmatprep.mubr.bf16.mxu0 0
    %1307 = vmatmul.mubr.bf16.gmra.mrb[0].mxu0 %v1272
    %v1308 = vpop.f32.mrb[0].mxu0
    %v1309 = vadd.f32 %v1257, %v1308
    %v1310 = vpop.f32.mrb[0].mxu0
    %v1311 = vpop.f32.mrb[0].mxu0
    %v1312 = vadd.f32 %v1257, %v1311
    %v1313 = vpop.f32.mrb[0].mxu0
    %1314 = vdwg.mxu0
    %v1315 = vmul.f32 %v1309, %v1309
    %v1316 = vmul.f32 %v1312, %v1312
    %v1317 = vmul.f32 %v1309, %v1315
    %v1318 = vmul.f32 %v1312, %v1316
    %v1319 = vmul.f32 %v1317, 0.044715
    %v1320 = vmul.f32 %v1318, 0.044715
    %v1321 = vadd.f32 %v1309, %v1319
    %v1322 = vadd.f32 %v1312, %v1320
    %v1323 = vmul.f32 %v1321, 0.7978846
    %v1324 = vmul.f32 %v1322, 0.7978846
    %v1325 = vtanh.pop %v1323
    %v1326 = vtanh.pop %v1324
    %v1327 = vadd.f32 %v1325, 1.0
    %v1328 = vadd.f32 %v1326, 1.0
    %v1329 = vmul.f32 %v1327, 0.5
    %v1330 = vmul.f32 %v1328, 0.5
    %v1331 = vmul.f32 %v1309, %v1329
    %v1332 = vmul.f32 %v1312, %v1330
    %v1333 = vpack.c.bf16 %v1332, %v1331
    %v1334 = vld [vmem:[%s12] sm:$0xf]
    %v1335 = vld [vmem:[%s12 + $0x4] sm:$0xf]
    %v1336 = vld [vmem:[%s12 + $0x8] sm:$0xf]
    %v1337 = vld [vmem:[%s12 + $0xc] sm:$0xf]
    %v1338 = vld [vmem:[%s12 + $0x10] sm:$0xf]
    %v1339 = vld [vmem:[%s12 + $0x14] sm:$0xf]
    %v1340 = vld [vmem:[%s12 + $0x18] sm:$0xf]
    %v1341 = vld [vmem:[%s12 + $0x1c] sm:$0xf]
    %v1342 = vld [vmem:[%s13] sm:$0x1]
    %v1344 = vlaneseq
    %v1345 = vshrl.u32 %v1344, 7
    %v1346 = vsub.s32 0, %v1345
    %v1347 = vrot.slane %v1342, %v1346
    %v1357 = vunpack.c.l.b16 %v1334
    %v1358 = vunpack.c.l.b16 %v1335
    %v1359 = vunpack.c.l.b16 %v1336
    %v1360 = vunpack.c.l.b16 %v1337
    %v1361 = vunpack.c.l.b16 %v1338
    %v1362 = vunpack.c.l.b16 %v1339
    %v1363 = vunpack.c.l.b16 %v1340
    %v1364 = vunpack.c.l.b16 %v1341
    %v1365 = vpack.c.b16 %v1358, %v1357
    %v1366 = vpack.c.b16 %v1360, %v1359
    %v1367 = vpack.c.b16 %v1362, %v1361
    %v1368 = vpack.c.b16 %v1364, %v1363
    %vm1373 = vcmask 523264
    %v1375 = vsel %vm1373, %v1333, 0
    %1377 = vmatprep.subr.bf16.mxu0 0
    %1378 = vmatpush1.bf16.msra.mxu0 %v1365
    %1379 = vmatprep.subr.bf16.mxu0 0
    %1380 = vmatpush1.bf16.msra.mxu0 %v1366
    %1381 = vmatprep.subr.bf16.mxu0 0
    %1382 = vmatpush1.bf16.msra.mxu0 %v1367
    %1383 = vmatprep.subr.bf16.mxu0 0
    %1384 = vmatpush1.bf16.msra.mxu0 %v1368
    %1385 = vmatprep.subr.bf16.mxu0 0
    %1386 = vmatpush1.bf16.msra.mxu0 0
    %1387 = vmatprep.subr.bf16.mxu0 0
    %1388 = vmatpush1.bf16.msra.mxu0 0
    %1389 = vmatprep.subr.bf16.mxu0 0
    %1390 = vmatpush1.bf16.msra.mxu0 0
    %1391 = vmatprep.subr.bf16.mxu0 0
    %1392 = vmatpush1.bf16.msra.mxu0 0
    %1393 = vmatprep.subr.bf16.mxu0 0
    %1394 = vmatpush1.bf16.msra.mxu0 0
    %1395 = vmatprep.subr.bf16.mxu0 0
    %1396 = vmatpush1.bf16.msra.mxu0 0
    %1397 = vmatprep.subr.bf16.mxu0 0
    %1398 = vmatpush1.bf16.msra.mxu0 0
    %1399 = vmatprep.subr.bf16.mxu0 0
    %1400 = vmatpush1.bf16.msra.mxu0 0
    %1401 = vmatprep.subr.bf16.mxu0 0
    %1402 = vmatpush1.bf16.msra.mxu0 0
    %1403 = vmatprep.subr.bf16.mxu0 0
    %1404 = vmatpush1.bf16.msra.mxu0 0
    %1405 = vmatprep.subr.bf16.mxu0 0
    %1406 = vmatpush1.bf16.msra.mxu0 0
    %1407 = vmatprep.subr.bf16.mxu0 0
    %1408 = vmatpush1.bf16.msra.mxu0 0
    %1409 = vmatprep.mubr.bf16.mxu0 0
    %1410 = vmatmul.mubr.bf16.gmra.mrb[0].mxu0 %v1375
    %v1411 = vpop.f32.mrb[0].mxu0
    %v1412 = vadd.f32 %v1347, %v1411
    %v1413 = vpop.f32.mrb[0].mxu0
    %v1414 = vpop.f32.mrb[0].mxu0
    %v1415 = vadd.f32 %v1347, %v1414
    %v1416 = vpop.f32.mrb[0].mxu0
    %1417 = vdwg.mxu0
    %v1418 = vadd.f32 %v1245, %v1412
    %v1419 = vadd.f32 %v1246, %v1415
    %v1420 = vld [vmem:[%s14] sm:$0x1]
    %v1421 = vld [vmem:[%s15] sm:$0x1]
    %v1422 = vsel %vm59, %v1418, 0.0
    %1423 = vadd.xlane.f32.xlu0 %v1422
    %v1424 = vpop.xlane.xlu0 %1423
    %v1425 = vsel %vm59, %v1419, 0.0
    %1426 = vadd.xlane.f32.xlu0 %v1425
    %v1427 = vpop.xlane.xlu0 %1426
    %v1428 = vmul.f32 %v1424, %v66
    %v1429 = vmul.f32 %v1427, %v66
    %v1430 = vsub.f32 %v1418, %v1428
    %v1431 = vsub.f32 %v1419, %v1429
    %v1432 = vmul.f32 %v1430, %v1430
    %v1433 = vmul.f32 %v1431, %v1431
    %v1434 = vsel %vm59, %v1432, 0.0
    %1435 = vadd.xlane.f32.xlu0 %v1434
    %v1436 = vpop.xlane.xlu0 %1435
    %v1437 = vsel %vm59, %v1433, 0.0
    %1438 = vadd.xlane.f32.xlu0 %v1437
    %v1439 = vpop.xlane.xlu0 %1438
    %v1440 = vmul.f32 %v1436, %v66
    %v1441 = vmul.f32 %v1439, %v66
    %v1442 = vadd.f32 %v1440, 1e-12
    %v1443 = vadd.f32 %v1441, 1e-12
    %v1444 = vrsqrt.pop %v1442
    %v1445 = vrsqrt.pop %v1443
    %v1446 = vmul.f32 %v1430, %v1444
    %v1447 = vmul.f32 %v1431, %v1445
    %v1449 = vlaneseq
    %v1450 = vshrl.u32 %v1449, 7
    %v1451 = vsub.s32 0, %v1450
    %v1452 = vrot.slane %v1420, %v1451
    %v1454 = vmul.f32 %v1446, %v1452
    %v1455 = vmul.f32 %v1447, %v1452
    %v1457 = vlaneseq
    %v1458 = vshrl.u32 %v1457, 7
    %v1459 = vsub.s32 0, %v1458
    %v1460 = vrot.slane %v1421, %v1459
    %v1462 = vadd.f32 %v1454, %v1460
    %v1463 = vadd.f32 %v1455, %v1460
    %v1464 = vpack.c.bf16 %v1463, %v1462
    %s1465 = scalar_lea.vmem %s4, 16
    %v1466 = vld [vmem:[%s1465] sm:$0xf]
    %v1467 = vld [vmem:[%s1465 + $0x4] sm:$0xf]
    %v1468 = vld [vmem:[%s1465 + $0x8] sm:$0xf]
    %v1469 = vld [vmem:[%s1465 + $0xc] sm:$0xf]
    %s1470 = scalar_lea.vmem %s5, 1
    %v1471 = vld [vmem:[%s1470] sm:$0x1]
    %v1473 = vlaneseq
    %v1474 = vshrl.u32 %v1473, 7
    %v1475 = vsub.s32 0, %v1474
    %v1476 = vrot.slane %v1471, %v1475
    %v1482 = vunpack.c.l.b16 %v1466
    %v1483 = vunpack.c.l.b16 %v1467
    %v1484 = vunpack.c.l.b16 %v1468
    %v1485 = vunpack.c.l.b16 %v1469
    %v1486 = vpack.c.b16 %v1483, %v1482
    %v1487 = vpack.c.b16 %v1485, %v1484
    %v1491 = vsel %vm59, %v1464, 0
    %1493 = vmatprep.subr.bf16.mxu0 0
    %1494 = vmatpush1.bf16.msra.mxu0 %v1486
    %1495 = vmatprep.subr.bf16.mxu0 0
    %1496 = vmatpush1.bf16.msra.mxu0 %v1487
    %1497 = vmatprep.subr.bf16.mxu0 0
    %1498 = vmatpush1.bf16.msra.mxu0 0
    %1499 = vmatprep.subr.bf16.mxu0 0
    %1500 = vmatpush1.bf16.msra.mxu0 0
    %1501 = vmatprep.subr.bf16.mxu0 0
    %1502 = vmatpush1.bf16.msra.mxu0 0
    %1503 = vmatprep.subr.bf16.mxu0 0
    %1504 = vmatpush1.bf16.msra.mxu0 0
    %1505 = vmatprep.subr.bf16.mxu0 0
    %1506 = vmatpush1.bf16.msra.mxu0 0
    %1507 = vmatprep.subr.bf16.mxu0 0
    %1508 = vmatpush1.bf16.msra.mxu0 0
    %1509 = vmatprep.subr.bf16.mxu0 0
    %1510 = vmatpush1.bf16.msra.mxu0 0
    %1511 = vmatprep.subr.bf16.mxu0 0
    %1512 = vmatpush1.bf16.msra.mxu0 0
    %1513 = vmatprep.subr.bf16.mxu0 0
    %1514 = vmatpush1.bf16.msra.mxu0 0
    %1515 = vmatprep.subr.bf16.mxu0 0
    %1516 = vmatpush1.bf16.msra.mxu0 0
    %1517 = vmatprep.subr.bf16.mxu0 0
    %1518 = vmatpush1.bf16.msra.mxu0 0
    %1519 = vmatprep.subr.bf16.mxu0 0
    %1520 = vmatpush1.bf16.msra.mxu0 0
    %1521 = vmatprep.subr.bf16.mxu0 0
    %1522 = vmatpush1.bf16.msra.mxu0 0
    %1523 = vmatprep.subr.bf16.mxu0 0
    %1524 = vmatpush1.bf16.msra.mxu0 0
    %1525 = vmatprep.mubr.bf16.mxu0 0
    %1526 = vmatmul.mubr.bf16.gmra.mrb[0].mxu0 %v1491
    %v1527 = vpop.f32.mrb[0].mxu0
    %v1528 = vadd.f32 %v1476, %v1527
    %v1529 = vpop.f32.mrb[0].mxu0
    %v1530 = vpop.f32.mrb[0].mxu0
    %v1531 = vadd.f32 %v1476, %v1530
    %v1532 = vpop.f32.mrb[0].mxu0
    %1533 = vdwg.mxu0
    %v1534 = vmul.f32 %v1528, 0.35355338
    %v1535 = vmul.f32 %v1531, 0.35355338
    %v1536 = vpack.c.bf16 %v1534, %v1534
    %v1537 = vpack.c.bf16 %v1535, %v1535
    %v1538 = vpack.c.bf16 %v1528, %v1528
    %v1539 = vpack.c.bf16 %v1531, %v1531
    %1541 = vrot.lane.b32.xlu0 %v1538, 96
    %v1542 = vpop.permute.xlu0 %1541
    %v1544 = vsel %vm204, %v1536, 0
    %v1547 = vsel %vm204, %v1542, 0
    %1549 = vmatprep.subr.bf16.mxu0 0
    %1550 = vmatpush1.bf16.xpose.msra.mxu0 %v1547
    %1551 = vmatprep.subr.bf16.mxu0 0
    %1552 = vmatpush1.bf16.xpose.msra.mxu0 0
    %1553 = vmatprep.subr.bf16.mxu0 0
    %1554 = vmatpush1.bf16.xpose.msra.mxu0 0
    %1555 = vmatprep.subr.bf16.mxu0 0
    %1556 = vmatpush1.bf16.xpose.msra.mxu0 0
    %1557 = vmatprep.subr.bf16.mxu0 0
    %1558 = vmatpush1.bf16.xpose.msra.mxu0 0
    %1559 = vmatprep.subr.bf16.mxu0 0
    %1560 = vmatpush1.bf16.xpose.msra.mxu0 0
    %1561 = vmatprep.subr.bf16.mxu0 0
    %1562 = vmatpush1.bf16.xpose.msra.mxu0 0
    %1563 = vmatprep.subr.bf16.mxu0 0
    %1564 = vmatpush1.bf16.xpose.msra.mxu0 0
    %1565 = vmatprep.subr.bf16.mxu0 0
    %1566 = vmatpush1.bf16.xpose.msra.mxu0 0
    %1567 = vmatprep.subr.bf16.mxu0 0
    %1568 = vmatpush1.bf16.xpose.msra.mxu0 0
    %1569 = vmatprep.subr.bf16.mxu0 0
    %1570 = vmatpush1.bf16.xpose.msra.mxu0 0
    %1571 = vmatprep.subr.bf16.mxu0 0
    %1572 = vmatpush1.bf16.xpose.msra.mxu0 0
    %1573 = vmatprep.subr.bf16.mxu0 0
    %1574 = vmatpush1.bf16.xpose.msra.mxu0 0
    %1575 = vmatprep.subr.bf16.mxu0 0
    %1576 = vmatpush1.bf16.xpose.msra.mxu0 0
    %1577 = vmatprep.subr.bf16.mxu0 0
    %1578 = vmatpush1.bf16.xpose.msra.mxu0 0
    %1579 = vmatprep.subr.bf16.mxu0 0
    %1580 = vmatpush1.bf16.xpose.msra.mxu0 0
    %1581 = vmatprep.mubr.bf16.mxu0 0
    %1582 = vmatmul.mubr.bf16.gmra.mrb[0].mxu0 %v1544
    %v1583 = vpop.f32.mrb[0].mxu0
    %v1584 = vadd.f32 0.0, %v1583
    %v1585 = vpop.f32.mrb[0].mxu0
    %v1586 = vpop.f32.mrb[0].mxu0
    %v1587 = vpop.f32.mrb[0].mxu0
    %1588 = vdwg.mxu0
    %1590 = vrot.lane.b32.xlu0 %v1539, 96
    %v1591 = vpop.permute.xlu0 %1590
    %v1593 = vsel %vm204, %v1537, 0
    %v1596 = vsel %vm204, %v1591, 0
    %1598 = vmatprep.subr.bf16.mxu0 0
    %1599 = vmatpush1.bf16.xpose.msra.mxu0 %v1596
    %1600 = vmatprep.subr.bf16.mxu0 0
    %1601 = vmatpush1.bf16.xpose.msra.mxu0 0
    %1602 = vmatprep.subr.bf16.mxu0 0
    %1603 = vmatpush1.bf16.xpose.msra.mxu0 0
    %1604 = vmatprep.subr.bf16.mxu0 0
    %1605 = vmatpush1.bf16.xpose.msra.mxu0 0
    %1606 = vmatprep.subr.bf16.mxu0 0
    %1607 = vmatpush1.bf16.xpose.msra.mxu0 0
    %1608 = vmatprep.subr.bf16.mxu0 0
    %1609 = vmatpush1.bf16.xpose.msra.mxu0 0
    %1610 = vmatprep.subr.bf16.mxu0 0
    %1611 = vmatpush1.bf16.xpose.msra.mxu0 0
    %1612 = vmatprep.subr.bf16.mxu0 0
    %1613 = vmatpush1.bf16.xpose.msra.mxu0 0
    %1614 = vmatprep.subr.bf16.mxu0 0
    %1615 = vmatpush1.bf16.xpose.msra.mxu0 0
    %1616 = vmatprep.subr.bf16.mxu0 0
    %1617 = vmatpush1.bf16.xpose.msra.mxu0 0
    %1618 = vmatprep.subr.bf16.mxu0 0
    %1619 = vmatpush1.bf16.xpose.msra.mxu0 0
    %1620 = vmatprep.subr.bf16.mxu0 0
    %1621 = vmatpush1.bf16.xpose.msra.mxu0 0
    %1622 = vmatprep.subr.bf16.mxu0 0
    %1623 = vmatpush1.bf16.xpose.msra.mxu0 0
    %1624 = vmatprep.subr.bf16.mxu0 0
    %1625 = vmatpush1.bf16.xpose.msra.mxu0 0
    %1626 = vmatprep.subr.bf16.mxu0 0
    %1627 = vmatpush1.bf16.xpose.msra.mxu0 0
    %1628 = vmatprep.subr.bf16.mxu0 0
    %1629 = vmatpush1.bf16.xpose.msra.mxu0 0
    %1630 = vmatprep.mubr.bf16.mxu0 0
    %1631 = vmatmul.mubr.bf16.gmra.mrb[0].mxu0 %v1593
    %v1632 = vpop.f32.mrb[0].mxu0
    %v1633 = vadd.f32 0.0, %v1632
    %v1634 = vpop.f32.mrb[0].mxu0
    %v1635 = vpop.f32.mrb[0].mxu0
    %v1636 = vpop.f32.mrb[0].mxu0
    %1637 = vdwg.mxu0
    %1639 = vrot.lane.b32.xlu0 %v1536, 120
    %v1640 = vpop.permute.xlu0 %1639
    %1641 = vrot.lane.b32.xlu0 %v1538, 88
    %v1642 = vpop.permute.xlu0 %1641
    %v1644 = vsel %vm204, %v1640, 0
    %v1647 = vsel %vm204, %v1642, 0
    %1649 = vmatprep.subr.bf16.mxu0 0
    %1650 = vmatpush1.bf16.xpose.msra.mxu0 %v1647
    %1651 = vmatprep.subr.bf16.mxu0 0
    %1652 = vmatpush1.bf16.xpose.msra.mxu0 0
    %1653 = vmatprep.subr.bf16.mxu0 0
    %1654 = vmatpush1.bf16.xpose.msra.mxu0 0
    %1655 = vmatprep.subr.bf16.mxu0 0
    %1656 = vmatpush1.bf16.xpose.msra.mxu0 0
    %1657 = vmatprep.subr.bf16.mxu0 0
    %1658 = vmatpush1.bf16.xpose.msra.mxu0 0
    %1659 = vmatprep.subr.bf16.mxu0 0
    %1660 = vmatpush1.bf16.xpose.msra.mxu0 0
    %1661 = vmatprep.subr.bf16.mxu0 0
    %1662 = vmatpush1.bf16.xpose.msra.mxu0 0
    %1663 = vmatprep.subr.bf16.mxu0 0
    %1664 = vmatpush1.bf16.xpose.msra.mxu0 0
    %1665 = vmatprep.subr.bf16.mxu0 0
    %1666 = vmatpush1.bf16.xpose.msra.mxu0 0
    %1667 = vmatprep.subr.bf16.mxu0 0
    %1668 = vmatpush1.bf16.xpose.msra.mxu0 0
    %1669 = vmatprep.subr.bf16.mxu0 0
    %1670 = vmatpush1.bf16.xpose.msra.mxu0 0
    %1671 = vmatprep.subr.bf16.mxu0 0
    %1672 = vmatpush1.bf16.xpose.msra.mxu0 0
    %1673 = vmatprep.subr.bf16.mxu0 0
    %1674 = vmatpush1.bf16.xpose.msra.mxu0 0
    %1675 = vmatprep.subr.bf16.mxu0 0
    %1676 = vmatpush1.bf16.xpose.msra.mxu0 0
    %1677 = vmatprep.subr.bf16.mxu0 0
    %1678 = vmatpush1.bf16.xpose.msra.mxu0 0
    %1679 = vmatprep.subr.bf16.mxu0 0
    %1680 = vmatpush1.bf16.xpose.msra.mxu0 0
    %1681 = vmatprep.mubr.bf16.mxu0 0
    %1682 = vmatmul.mubr.bf16.gmra.mrb[0].mxu0 %v1644
    %v1683 = vpop.f32.mrb[0].mxu0
    %v1684 = vadd.f32 0.0, %v1683
    %v1685 = vpop.f32.mrb[0].mxu0
    %v1686 = vpop.f32.mrb[0].mxu0
    %v1687 = vpop.f32.mrb[0].mxu0
    %1688 = vdwg.mxu0
    %1690 = vrot.lane.b32.xlu0 %v1537, 120
    %v1691 = vpop.permute.xlu0 %1690
    %1692 = vrot.lane.b32.xlu0 %v1539, 88
    %v1693 = vpop.permute.xlu0 %1692
    %v1695 = vsel %vm204, %v1691, 0
    %v1698 = vsel %vm204, %v1693, 0
    %1700 = vmatprep.subr.bf16.mxu0 0
    %1701 = vmatpush1.bf16.xpose.msra.mxu0 %v1698
    %1702 = vmatprep.subr.bf16.mxu0 0
    %1703 = vmatpush1.bf16.xpose.msra.mxu0 0
    %1704 = vmatprep.subr.bf16.mxu0 0
    %1705 = vmatpush1.bf16.xpose.msra.mxu0 0
    %1706 = vmatprep.subr.bf16.mxu0 0
    %1707 = vmatpush1.bf16.xpose.msra.mxu0 0
    %1708 = vmatprep.subr.bf16.mxu0 0
    %1709 = vmatpush1.bf16.xpose.msra.mxu0 0
    %1710 = vmatprep.subr.bf16.mxu0 0
    %1711 = vmatpush1.bf16.xpose.msra.mxu0 0
    %1712 = vmatprep.subr.bf16.mxu0 0
    %1713 = vmatpush1.bf16.xpose.msra.mxu0 0
    %1714 = vmatprep.subr.bf16.mxu0 0
    %1715 = vmatpush1.bf16.xpose.msra.mxu0 0
    %1716 = vmatprep.subr.bf16.mxu0 0
    %1717 = vmatpush1.bf16.xpose.msra.mxu0 0
    %1718 = vmatprep.subr.bf16.mxu0 0
    %1719 = vmatpush1.bf16.xpose.msra.mxu0 0
    %1720 = vmatprep.subr.bf16.mxu0 0
    %1721 = vmatpush1.bf16.xpose.msra.mxu0 0
    %1722 = vmatprep.subr.bf16.mxu0 0
    %1723 = vmatpush1.bf16.xpose.msra.mxu0 0
    %1724 = vmatprep.subr.bf16.mxu0 0
    %1725 = vmatpush1.bf16.xpose.msra.mxu0 0
    %1726 = vmatprep.subr.bf16.mxu0 0
    %1727 = vmatpush1.bf16.xpose.msra.mxu0 0
    %1728 = vmatprep.subr.bf16.mxu0 0
    %1729 = vmatpush1.bf16.xpose.msra.mxu0 0
    %1730 = vmatprep.subr.bf16.mxu0 0
    %1731 = vmatpush1.bf16.xpose.msra.mxu0 0
    %1732 = vmatprep.mubr.bf16.mxu0 0
    %1733 = vmatmul.mubr.bf16.gmra.mrb[0].mxu0 %v1695
    %v1734 = vpop.f32.mrb[0].mxu0
    %v1735 = vadd.f32 0.0, %v1734
    %v1736 = vpop.f32.mrb[0].mxu0
    %v1737 = vpop.f32.mrb[0].mxu0
    %v1738 = vpop.f32.mrb[0].mxu0
    %1739 = vdwg.mxu0
    %1740 = vrot.lane.b32.xlu0 %v1536, 112
    %v1741 = vpop.permute.xlu0 %1740
    %1742 = vrot.lane.b32.xlu0 %v1538, 80
    %v1743 = vpop.permute.xlu0 %1742
    %v1745 = vsel %vm204, %v1741, 0
    %v1748 = vsel %vm204, %v1743, 0
    %1750 = vmatprep.subr.bf16.mxu0 0
    %1751 = vmatpush1.bf16.xpose.msra.mxu0 %v1748
    %1752 = vmatprep.subr.bf16.mxu0 0
    %1753 = vmatpush1.bf16.xpose.msra.mxu0 0
    %1754 = vmatprep.subr.bf16.mxu0 0
    %1755 = vmatpush1.bf16.xpose.msra.mxu0 0
    %1756 = vmatprep.subr.bf16.mxu0 0
    %1757 = vmatpush1.bf16.xpose.msra.mxu0 0
    %1758 = vmatprep.subr.bf16.mxu0 0
    %1759 = vmatpush1.bf16.xpose.msra.mxu0 0
    %1760 = vmatprep.subr.bf16.mxu0 0
    %1761 = vmatpush1.bf16.xpose.msra.mxu0 0
    %1762 = vmatprep.subr.bf16.mxu0 0
    %1763 = vmatpush1.bf16.xpose.msra.mxu0 0
    %1764 = vmatprep.subr.bf16.mxu0 0
    %1765 = vmatpush1.bf16.xpose.msra.mxu0 0
    %1766 = vmatprep.subr.bf16.mxu0 0
    %1767 = vmatpush1.bf16.xpose.msra.mxu0 0
    %1768 = vmatprep.subr.bf16.mxu0 0
    %1769 = vmatpush1.bf16.xpose.msra.mxu0 0
    %1770 = vmatprep.subr.bf16.mxu0 0
    %1771 = vmatpush1.bf16.xpose.msra.mxu0 0
    %1772 = vmatprep.subr.bf16.mxu0 0
    %1773 = vmatpush1.bf16.xpose.msra.mxu0 0
    %1774 = vmatprep.subr.bf16.mxu0 0
    %1775 = vmatpush1.bf16.xpose.msra.mxu0 0
    %1776 = vmatprep.subr.bf16.mxu0 0
    %1777 = vmatpush1.bf16.xpose.msra.mxu0 0
    %1778 = vmatprep.subr.bf16.mxu0 0
    %1779 = vmatpush1.bf16.xpose.msra.mxu0 0
    %1780 = vmatprep.subr.bf16.mxu0 0
    %1781 = vmatpush1.bf16.xpose.msra.mxu0 0
    %1782 = vmatprep.mubr.bf16.mxu0 0
    %1783 = vmatmul.mubr.bf16.gmra.mrb[0].mxu0 %v1745
    %v1784 = vpop.f32.mrb[0].mxu0
    %v1785 = vadd.f32 0.0, %v1784
    %v1786 = vpop.f32.mrb[0].mxu0
    %v1787 = vpop.f32.mrb[0].mxu0
    %v1788 = vpop.f32.mrb[0].mxu0
    %1789 = vdwg.mxu0
    %1790 = vrot.lane.b32.xlu0 %v1537, 112
    %v1791 = vpop.permute.xlu0 %1790
    %1792 = vrot.lane.b32.xlu0 %v1539, 80
    %v1793 = vpop.permute.xlu0 %1792
    %v1795 = vsel %vm204, %v1791, 0
    %v1798 = vsel %vm204, %v1793, 0
    %1800 = vmatprep.subr.bf16.mxu0 0
    %1801 = vmatpush1.bf16.xpose.msra.mxu0 %v1798
    %1802 = vmatprep.subr.bf16.mxu0 0
    %1803 = vmatpush1.bf16.xpose.msra.mxu0 0
    %1804 = vmatprep.subr.bf16.mxu0 0
    %1805 = vmatpush1.bf16.xpose.msra.mxu0 0
    %1806 = vmatprep.subr.bf16.mxu0 0
    %1807 = vmatpush1.bf16.xpose.msra.mxu0 0
    %1808 = vmatprep.subr.bf16.mxu0 0
    %1809 = vmatpush1.bf16.xpose.msra.mxu0 0
    %1810 = vmatprep.subr.bf16.mxu0 0
    %1811 = vmatpush1.bf16.xpose.msra.mxu0 0
    %1812 = vmatprep.subr.bf16.mxu0 0
    %1813 = vmatpush1.bf16.xpose.msra.mxu0 0
    %1814 = vmatprep.subr.bf16.mxu0 0
    %1815 = vmatpush1.bf16.xpose.msra.mxu0 0
    %1816 = vmatprep.subr.bf16.mxu0 0
    %1817 = vmatpush1.bf16.xpose.msra.mxu0 0
    %1818 = vmatprep.subr.bf16.mxu0 0
    %1819 = vmatpush1.bf16.xpose.msra.mxu0 0
    %1820 = vmatprep.subr.bf16.mxu0 0
    %1821 = vmatpush1.bf16.xpose.msra.mxu0 0
    %1822 = vmatprep.subr.bf16.mxu0 0
    %1823 = vmatpush1.bf16.xpose.msra.mxu0 0
    %1824 = vmatprep.subr.bf16.mxu0 0
    %1825 = vmatpush1.bf16.xpose.msra.mxu0 0
    %1826 = vmatprep.subr.bf16.mxu0 0
    %1827 = vmatpush1.bf16.xpose.msra.mxu0 0
    %1828 = vmatprep.subr.bf16.mxu0 0
    %1829 = vmatpush1.bf16.xpose.msra.mxu0 0
    %1830 = vmatprep.subr.bf16.mxu0 0
    %1831 = vmatpush1.bf16.xpose.msra.mxu0 0
    %1832 = vmatprep.mubr.bf16.mxu0 0
    %1833 = vmatmul.mubr.bf16.gmra.mrb[0].mxu0 %v1795
    %v1834 = vpop.f32.mrb[0].mxu0
    %v1835 = vadd.f32 0.0, %v1834
    %v1836 = vpop.f32.mrb[0].mxu0
    %v1837 = vpop.f32.mrb[0].mxu0
    %v1838 = vpop.f32.mrb[0].mxu0
    %1839 = vdwg.mxu0
    %1840 = vrot.lane.b32.xlu0 %v1536, 104
    %v1841 = vpop.permute.xlu0 %1840
    %1842 = vrot.lane.b32.xlu0 %v1538, 72
    %v1843 = vpop.permute.xlu0 %1842
    %v1845 = vsel %vm204, %v1841, 0
    %v1848 = vsel %vm204, %v1843, 0
    %1850 = vmatprep.subr.bf16.mxu0 0
    %1851 = vmatpush1.bf16.xpose.msra.mxu0 %v1848
    %1852 = vmatprep.subr.bf16.mxu0 0
    %1853 = vmatpush1.bf16.xpose.msra.mxu0 0
    %1854 = vmatprep.subr.bf16.mxu0 0
    %1855 = vmatpush1.bf16.xpose.msra.mxu0 0
    %1856 = vmatprep.subr.bf16.mxu0 0
    %1857 = vmatpush1.bf16.xpose.msra.mxu0 0
    %1858 = vmatprep.subr.bf16.mxu0 0
    %1859 = vmatpush1.bf16.xpose.msra.mxu0 0
    %1860 = vmatprep.subr.bf16.mxu0 0
    %1861 = vmatpush1.bf16.xpose.msra.mxu0 0
    %1862 = vmatprep.subr.bf16.mxu0 0
    %1863 = vmatpush1.bf16.xpose.msra.mxu0 0
    %1864 = vmatprep.subr.bf16.mxu0 0
    %1865 = vmatpush1.bf16.xpose.msra.mxu0 0
    %1866 = vmatprep.subr.bf16.mxu0 0
    %1867 = vmatpush1.bf16.xpose.msra.mxu0 0
    %1868 = vmatprep.subr.bf16.mxu0 0
    %1869 = vmatpush1.bf16.xpose.msra.mxu0 0
    %1870 = vmatprep.subr.bf16.mxu0 0
    %1871 = vmatpush1.bf16.xpose.msra.mxu0 0
    %1872 = vmatprep.subr.bf16.mxu0 0
    %1873 = vmatpush1.bf16.xpose.msra.mxu0 0
    %1874 = vmatprep.subr.bf16.mxu0 0
    %1875 = vmatpush1.bf16.xpose.msra.mxu0 0
    %1876 = vmatprep.subr.bf16.mxu0 0
    %1877 = vmatpush1.bf16.xpose.msra.mxu0 0
    %1878 = vmatprep.subr.bf16.mxu0 0
    %1879 = vmatpush1.bf16.xpose.msra.mxu0 0
    %1880 = vmatprep.subr.bf16.mxu0 0
    %1881 = vmatpush1.bf16.xpose.msra.mxu0 0
    %1882 = vmatprep.mubr.bf16.mxu0 0
    %1883 = vmatmul.mubr.bf16.gmra.mrb[0].mxu0 %v1845
    %v1884 = vpop.f32.mrb[0].mxu0
    %v1885 = vadd.f32 0.0, %v1884
    %v1886 = vpop.f32.mrb[0].mxu0
    %v1887 = vpop.f32.mrb[0].mxu0
    %v1888 = vpop.f32.mrb[0].mxu0
    %1889 = vdwg.mxu0
    %1890 = vrot.lane.b32.xlu0 %v1537, 104
    %v1891 = vpop.permute.xlu0 %1890
    %1892 = vrot.lane.b32.xlu0 %v1539, 72
    %v1893 = vpop.permute.xlu0 %1892
    %v1895 = vsel %vm204, %v1891, 0
    %v1898 = vsel %vm204, %v1893, 0
    %1900 = vmatprep.subr.bf16.mxu0 0
    %1901 = vmatpush1.bf16.xpose.msra.mxu0 %v1898
    %1902 = vmatprep.subr.bf16.mxu0 0
    %1903 = vmatpush1.bf16.xpose.msra.mxu0 0
    %1904 = vmatprep.subr.bf16.mxu0 0
    %1905 = vmatpush1.bf16.xpose.msra.mxu0 0
    %1906 = vmatprep.subr.bf16.mxu0 0
    %1907 = vmatpush1.bf16.xpose.msra.mxu0 0
    %1908 = vmatprep.subr.bf16.mxu0 0
    %1909 = vmatpush1.bf16.xpose.msra.mxu0 0
    %1910 = vmatprep.subr.bf16.mxu0 0
    %1911 = vmatpush1.bf16.xpose.msra.mxu0 0
    %1912 = vmatprep.subr.bf16.mxu0 0
    %1913 = vmatpush1.bf16.xpose.msra.mxu0 0
    %1914 = vmatprep.subr.bf16.mxu0 0
    %1915 = vmatpush1.bf16.xpose.msra.mxu0 0
    %1916 = vmatprep.subr.bf16.mxu0 0
    %1917 = vmatpush1.bf16.xpose.msra.mxu0 0
    %1918 = vmatprep.subr.bf16.mxu0 0
    %1919 = vmatpush1.bf16.xpose.msra.mxu0 0
    %1920 = vmatprep.subr.bf16.mxu0 0
    %1921 = vmatpush1.bf16.xpose.msra.mxu0 0
    %1922 = vmatprep.subr.bf16.mxu0 0
    %1923 = vmatpush1.bf16.xpose.msra.mxu0 0
    %1924 = vmatprep.subr.bf16.mxu0 0
    %1925 = vmatpush1.bf16.xpose.msra.mxu0 0
    %1926 = vmatprep.subr.bf16.mxu0 0
    %1927 = vmatpush1.bf16.xpose.msra.mxu0 0
    %1928 = vmatprep.subr.bf16.mxu0 0
    %1929 = vmatpush1.bf16.xpose.msra.mxu0 0
    %1930 = vmatprep.subr.bf16.mxu0 0
    %1931 = vmatpush1.bf16.xpose.msra.mxu0 0
    %1932 = vmatprep.mubr.bf16.mxu0 0
    %1933 = vmatmul.mubr.bf16.gmra.mrb[0].mxu0 %v1895
    %v1934 = vpop.f32.mrb[0].mxu0
    %v1935 = vadd.f32 0.0, %v1934
    %v1936 = vpop.f32.mrb[0].mxu0
    %v1937 = vpop.f32.mrb[0].mxu0
    %v1938 = vpop.f32.mrb[0].mxu0
    %1939 = vdwg.mxu0
    %v1940 = vadd.f32 %v1584, %v605
    %v1941 = vadd.f32 %v1684, %v605
    %v1942 = vadd.f32 %v1785, %v605
    %v1943 = vadd.f32 %v1885, %v605
    %v1944 = vadd.f32 %v1633, %v609
    %v1945 = vadd.f32 %v1735, %v609
    %v1946 = vadd.f32 %v1835, %v609
    %v1947 = vadd.f32 %v1935, %v609
    %v1948 = vsel %vm204, %v1940, -inf
    %1949 = vmax.xlane.f32.xlu0 %v1948
    %v1950 = vpop.xlane.xlu0 %1949
    %v1951 = vsel %vm204, %v1941, -inf
    %1952 = vmax.xlane.f32.xlu0 %v1951
    %v1953 = vpop.xlane.xlu0 %1952
    %v1954 = vsel %vm204, %v1942, -inf
    %1955 = vmax.xlane.f32.xlu0 %v1954
    %v1956 = vpop.xlane.xlu0 %1955
    %v1957 = vsel %vm204, %v1943, -inf
    %1958 = vmax.xlane.f32.xlu0 %v1957
    %v1959 = vpop.xlane.xlu0 %1958
    %v1960 = vsel %vm204, %v1944, -inf
    %1961 = vmax.xlane.f32.xlu0 %v1960
    %v1962 = vpop.xlane.xlu0 %1961
    %v1963 = vsel %vm204, %v1945, -inf
    %1964 = vmax.xlane.f32.xlu0 %v1963
    %v1965 = vpop.xlane.xlu0 %1964
    %v1966 = vsel %vm204, %v1946, -inf
    %1967 = vmax.xlane.f32.xlu0 %v1966
    %v1968 = vpop.xlane.xlu0 %1967
    %v1969 = vsel %vm204, %v1947, -inf
    %1970 = vmax.xlane.f32.xlu0 %v1969
    %v1971 = vpop.xlane.xlu0 %1970
    %v1972 = vsub.f32 %v1940, %v1950
    %v1973 = vsub.f32 %v1941, %v1953
    %v1974 = vsub.f32 %v1942, %v1956
    %v1975 = vsub.f32 %v1943, %v1959
    %v1976 = vsub.f32 %v1944, %v1962
    %v1977 = vsub.f32 %v1945, %v1965
    %v1978 = vsub.f32 %v1946, %v1968
    %v1979 = vsub.f32 %v1947, %v1971
    %v1980 = vmul.f32 %v1972, 1.442695
    %v1981 = vpow.pop %v1980
    %v1982 = vmul.f32 %v1973, 1.442695
    %v1983 = vpow.pop %v1982
    %v1984 = vmul.f32 %v1974, 1.442695
    %v1985 = vpow.pop %v1984
    %v1986 = vmul.f32 %v1975, 1.442695
    %v1987 = vpow.pop %v1986
    %v1988 = vmul.f32 %v1976, 1.442695
    %v1989 = vpow.pop %v1988
    %v1990 = vmul.f32 %v1977, 1.442695
    %v1991 = vpow.pop %v1990
    %v1992 = vmul.f32 %v1978, 1.442695
    %v1993 = vpow.pop %v1992
    %v1994 = vmul.f32 %v1979, 1.442695
    %v1995 = vpow.pop %v1994
    %v1996 = vsel %vm204, %v1981, 0.0
    %1997 = vadd.xlane.f32.xlu0 %v1996
    %v1998 = vpop.xlane.xlu0 %1997
    %v1999 = vsel %vm204, %v1983, 0.0
    %2000 = vadd.xlane.f32.xlu0 %v1999
    %v2001 = vpop.xlane.xlu0 %2000
    %v2002 = vsel %vm204, %v1985, 0.0
    %2003 = vadd.xlane.f32.xlu0 %v2002
    %v2004 = vpop.xlane.xlu0 %2003
    %v2005 = vsel %vm204, %v1987, 0.0
    %2006 = vadd.xlane.f32.xlu0 %v2005
    %v2007 = vpop.xlane.xlu0 %2006
    %v2008 = vsel %vm204, %v1989, 0.0
    %2009 = vadd.xlane.f32.xlu0 %v2008
    %v2010 = vpop.xlane.xlu0 %2009
    %v2011 = vsel %vm204, %v1991, 0.0
    %2012 = vadd.xlane.f32.xlu0 %v2011
    %v2013 = vpop.xlane.xlu0 %2012
    %v2014 = vsel %vm204, %v1993, 0.0
    %2015 = vadd.xlane.f32.xlu0 %v2014
    %v2016 = vpop.xlane.xlu0 %2015
    %v2017 = vsel %vm204, %v1995, 0.0
    %2018 = vadd.xlane.f32.xlu0 %v2017
    %v2019 = vpop.xlane.xlu0 %2018
    %v2020 = vrcp.pop %v1998
    %v2021 = vrcp.pop %v2001
    %v2022 = vrcp.pop %v2004
    %v2023 = vrcp.pop %v2007
    %v2024 = vrcp.pop %v2010
    %v2025 = vrcp.pop %v2013
    %v2026 = vrcp.pop %v2016
    %v2027 = vrcp.pop %v2019
    %v2028 = vmul.f32 %v1981, %v2020
    %v2029 = vmul.f32 %v1983, %v2021
    %v2030 = vmul.f32 %v1985, %v2022
    %v2031 = vmul.f32 %v1987, %v2023
    %v2032 = vmul.f32 %v1989, %v2024
    %v2033 = vmul.f32 %v1991, %v2025
    %v2034 = vmul.f32 %v1993, %v2026
    %v2035 = vmul.f32 %v1995, %v2027
    %v2036 = vpack.c.bf16 %v2028, %v2028
    %v2037 = vpack.c.bf16 %v2029, %v2029
    %v2038 = vpack.c.bf16 %v2030, %v2030
    %v2039 = vpack.c.bf16 %v2031, %v2031
    %v2040 = vpack.c.bf16 %v2032, %v2032
    %v2041 = vpack.c.bf16 %v2033, %v2033
    %v2042 = vpack.c.bf16 %v2034, %v2034
    %v2043 = vpack.c.bf16 %v2035, %v2035
    %2044 = vrot.lane.b32.xlu0 %v1538, 64
    %v2045 = vpop.permute.xlu0 %2044
    %v2047 = vsel %vm204, %v2036, 0
    %v2050 = vsel %vm721, %v2045, 0
    %2052 = vmatprep.subr.bf16.mxu0 0
    %2053 = vmatpush1.bf16.msra.mxu0 %v2050
    %2054 = vmatprep.subr.bf16.mxu0 0
    %2055 = vmatpush1.bf16.msra.mxu0 0
    %2056 = vmatprep.subr.bf16.mxu0 0
    %2057 = vmatpush1.bf16.msra.mxu0 0
    %2058 = vmatprep.subr.bf16.mxu0 0
    %2059 = vmatpush1.bf16.msra.mxu0 0
    %2060 = vmatprep.subr.bf16.mxu0 0
    %2061 = vmatpush1.bf16.msra.mxu0 0
    %2062 = vmatprep.subr.bf16.mxu0 0
    %2063 = vmatpush1.bf16.msra.mxu0 0
    %2064 = vmatprep.subr.bf16.mxu0 0
    %2065 = vmatpush1.bf16.msra.mxu0 0
    %2066 = vmatprep.subr.bf16.mxu0 0
    %2067 = vmatpush1.bf16.msra.mxu0 0
    %2068 = vmatprep.subr.bf16.mxu0 0
    %2069 = vmatpush1.bf16.msra.mxu0 0
    %2070 = vmatprep.subr.bf16.mxu0 0
    %2071 = vmatpush1.bf16.msra.mxu0 0
    %2072 = vmatprep.subr.bf16.mxu0 0
    %2073 = vmatpush1.bf16.msra.mxu0 0
    %2074 = vmatprep.subr.bf16.mxu0 0
    %2075 = vmatpush1.bf16.msra.mxu0 0
    %2076 = vmatprep.subr.bf16.mxu0 0
    %2077 = vmatpush1.bf16.msra.mxu0 0
    %2078 = vmatprep.subr.bf16.mxu0 0
    %2079 = vmatpush1.bf16.msra.mxu0 0
    %2080 = vmatprep.subr.bf16.mxu0 0
    %2081 = vmatpush1.bf16.msra.mxu0 0
    %2082 = vmatprep.subr.bf16.mxu0 0
    %2083 = vmatpush1.bf16.msra.mxu0 0
    %2084 = vmatprep.mubr.bf16.mxu0 0
    %2085 = vmatmul.mubr.bf16.gmra.mrb[0].mxu0 %v2047
    %v2086 = vpop.f32.mrb[0].mxu0
    %v2087 = vadd.f32 0.0, %v2086
    %v2088 = vpop.f32.mrb[0].mxu0
    %v2089 = vpop.f32.mrb[0].mxu0
    %v2090 = vpop.f32.mrb[0].mxu0
    %2091 = vdwg.mxu0
    %2092 = vrot.lane.b32.xlu0 %v1539, 64
    %v2093 = vpop.permute.xlu0 %2092
    %v2095 = vsel %vm204, %v2040, 0
    %v2098 = vsel %vm721, %v2093, 0
    %2100 = vmatprep.subr.bf16.mxu0 0
    %2101 = vmatpush1.bf16.msra.mxu0 %v2098
    %2102 = vmatprep.subr.bf16.mxu0 0
    %2103 = vmatpush1.bf16.msra.mxu0 0
    %2104 = vmatprep.subr.bf16.mxu0 0
    %2105 = vmatpush1.bf16.msra.mxu0 0
    %2106 = vmatprep.subr.bf16.mxu0 0
    %2107 = vmatpush1.bf16.msra.mxu0 0
    %2108 = vmatprep.subr.bf16.mxu0 0
    %2109 = vmatpush1.bf16.msra.mxu0 0
    %2110 = vmatprep.subr.bf16.mxu0 0
    %2111 = vmatpush1.bf16.msra.mxu0 0
    %2112 = vmatprep.subr.bf16.mxu0 0
    %2113 = vmatpush1.bf16.msra.mxu0 0
    %2114 = vmatprep.subr.bf16.mxu0 0
    %2115 = vmatpush1.bf16.msra.mxu0 0
    %2116 = vmatprep.subr.bf16.mxu0 0
    %2117 = vmatpush1.bf16.msra.mxu0 0
    %2118 = vmatprep.subr.bf16.mxu0 0
    %2119 = vmatpush1.bf16.msra.mxu0 0
    %2120 = vmatprep.subr.bf16.mxu0 0
    %2121 = vmatpush1.bf16.msra.mxu0 0
    %2122 = vmatprep.subr.bf16.mxu0 0
    %2123 = vmatpush1.bf16.msra.mxu0 0
    %2124 = vmatprep.subr.bf16.mxu0 0
    %2125 = vmatpush1.bf16.msra.mxu0 0
    %2126 = vmatprep.subr.bf16.mxu0 0
    %2127 = vmatpush1.bf16.msra.mxu0 0
    %2128 = vmatprep.subr.bf16.mxu0 0
    %2129 = vmatpush1.bf16.msra.mxu0 0
    %2130 = vmatprep.subr.bf16.mxu0 0
    %2131 = vmatpush1.bf16.msra.mxu0 0
    %2132 = vmatprep.mubr.bf16.mxu0 0
    %2133 = vmatmul.mubr.bf16.gmra.mrb[0].mxu0 %v2095
    %v2134 = vpop.f32.mrb[0].mxu0
    %v2135 = vadd.f32 0.0, %v2134
    %v2136 = vpop.f32.mrb[0].mxu0
    %v2137 = vpop.f32.mrb[0].mxu0
    %v2138 = vpop.f32.mrb[0].mxu0
    %2139 = vdwg.mxu0
    %2140 = vrot.lane.b32.xlu0 %v1538, 56
    %v2141 = vpop.permute.xlu0 %2140
    %v2143 = vsel %vm204, %v2037, 0
    %v2146 = vsel %vm721, %v2141, 0
    %2148 = vmatprep.subr.bf16.mxu0 0
    %2149 = vmatpush1.bf16.msra.mxu0 %v2146
    %2150 = vmatprep.subr.bf16.mxu0 0
    %2151 = vmatpush1.bf16.msra.mxu0 0
    %2152 = vmatprep.subr.bf16.mxu0 0
    %2153 = vmatpush1.bf16.msra.mxu0 0
    %2154 = vmatprep.subr.bf16.mxu0 0
    %2155 = vmatpush1.bf16.msra.mxu0 0
    %2156 = vmatprep.subr.bf16.mxu0 0
    %2157 = vmatpush1.bf16.msra.mxu0 0
    %2158 = vmatprep.subr.bf16.mxu0 0
    %2159 = vmatpush1.bf16.msra.mxu0 0
    %2160 = vmatprep.subr.bf16.mxu0 0
    %2161 = vmatpush1.bf16.msra.mxu0 0
    %2162 = vmatprep.subr.bf16.mxu0 0
    %2163 = vmatpush1.bf16.msra.mxu0 0
    %2164 = vmatprep.subr.bf16.mxu0 0
    %2165 = vmatpush1.bf16.msra.mxu0 0
    %2166 = vmatprep.subr.bf16.mxu0 0
    %2167 = vmatpush1.bf16.msra.mxu0 0
    %2168 = vmatprep.subr.bf16.mxu0 0
    %2169 = vmatpush1.bf16.msra.mxu0 0
    %2170 = vmatprep.subr.bf16.mxu0 0
    %2171 = vmatpush1.bf16.msra.mxu0 0
    %2172 = vmatprep.subr.bf16.mxu0 0
    %2173 = vmatpush1.bf16.msra.mxu0 0
    %2174 = vmatprep.subr.bf16.mxu0 0
    %2175 = vmatpush1.bf16.msra.mxu0 0
    %2176 = vmatprep.subr.bf16.mxu0 0
    %2177 = vmatpush1.bf16.msra.mxu0 0
    %2178 = vmatprep.subr.bf16.mxu0 0
    %2179 = vmatpush1.bf16.msra.mxu0 0
    %2180 = vmatprep.mubr.bf16.mxu0 0
    %2181 = vmatmul.mubr.bf16.gmra.mrb[0].mxu0 %v2143
    %v2182 = vpop.f32.mrb[0].mxu0
    %v2183 = vadd.f32 0.0, %v2182
    %v2184 = vpop.f32.mrb[0].mxu0
    %v2185 = vpop.f32.mrb[0].mxu0
    %v2186 = vpop.f32.mrb[0].mxu0
    %2187 = vdwg.mxu0
    %2188 = vrot.lane.b32.xlu0 %v1539, 56
    %v2189 = vpop.permute.xlu0 %2188
    %v2191 = vsel %vm204, %v2041, 0
    %v2194 = vsel %vm721, %v2189, 0
    %2196 = vmatprep.subr.bf16.mxu0 0
    %2197 = vmatpush1.bf16.msra.mxu0 %v2194
    %2198 = vmatprep.subr.bf16.mxu0 0
    %2199 = vmatpush1.bf16.msra.mxu0 0
    %2200 = vmatprep.subr.bf16.mxu0 0
    %2201 = vmatpush1.bf16.msra.mxu0 0
    %2202 = vmatprep.subr.bf16.mxu0 0
    %2203 = vmatpush1.bf16.msra.mxu0 0
    %2204 = vmatprep.subr.bf16.mxu0 0
    %2205 = vmatpush1.bf16.msra.mxu0 0
    %2206 = vmatprep.subr.bf16.mxu0 0
    %2207 = vmatpush1.bf16.msra.mxu0 0
    %2208 = vmatprep.subr.bf16.mxu0 0
    %2209 = vmatpush1.bf16.msra.mxu0 0
    %2210 = vmatprep.subr.bf16.mxu0 0
    %2211 = vmatpush1.bf16.msra.mxu0 0
    %2212 = vmatprep.subr.bf16.mxu0 0
    %2213 = vmatpush1.bf16.msra.mxu0 0
    %2214 = vmatprep.subr.bf16.mxu0 0
    %2215 = vmatpush1.bf16.msra.mxu0 0
    %2216 = vmatprep.subr.bf16.mxu0 0
    %2217 = vmatpush1.bf16.msra.mxu0 0
    %2218 = vmatprep.subr.bf16.mxu0 0
    %2219 = vmatpush1.bf16.msra.mxu0 0
    %2220 = vmatprep.subr.bf16.mxu0 0
    %2221 = vmatpush1.bf16.msra.mxu0 0
    %2222 = vmatprep.subr.bf16.mxu0 0
    %2223 = vmatpush1.bf16.msra.mxu0 0
    %2224 = vmatprep.subr.bf16.mxu0 0
    %2225 = vmatpush1.bf16.msra.mxu0 0
    %2226 = vmatprep.subr.bf16.mxu0 0
    %2227 = vmatpush1.bf16.msra.mxu0 0
    %2228 = vmatprep.mubr.bf16.mxu0 0
    %2229 = vmatmul.mubr.bf16.gmra.mrb[0].mxu0 %v2191
    %v2230 = vpop.f32.mrb[0].mxu0
    %v2231 = vadd.f32 0.0, %v2230
    %v2232 = vpop.f32.mrb[0].mxu0
    %v2233 = vpop.f32.mrb[0].mxu0
    %v2234 = vpop.f32.mrb[0].mxu0
    %2235 = vdwg.mxu0
    %2236 = vrot.lane.b32.xlu0 %v1538, 48
    %v2237 = vpop.permute.xlu0 %2236
    %v2239 = vsel %vm204, %v2038, 0
    %v2242 = vsel %vm721, %v2237, 0
    %2244 = vmatprep.subr.bf16.mxu0 0
    %2245 = vmatpush1.bf16.msra.mxu0 %v2242
    %2246 = vmatprep.subr.bf16.mxu0 0
    %2247 = vmatpush1.bf16.msra.mxu0 0
    %2248 = vmatprep.subr.bf16.mxu0 0
    %2249 = vmatpush1.bf16.msra.mxu0 0
    %2250 = vmatprep.subr.bf16.mxu0 0
    %2251 = vmatpush1.bf16.msra.mxu0 0
    %2252 = vmatprep.subr.bf16.mxu0 0
    %2253 = vmatpush1.bf16.msra.mxu0 0
    %2254 = vmatprep.subr.bf16.mxu0 0
    %2255 = vmatpush1.bf16.msra.mxu0 0
    %2256 = vmatprep.subr.bf16.mxu0 0
    %2257 = vmatpush1.bf16.msra.mxu0 0
    %2258 = vmatprep.subr.bf16.mxu0 0
    %2259 = vmatpush1.bf16.msra.mxu0 0
    %2260 = vmatprep.subr.bf16.mxu0 0
    %2261 = vmatpush1.bf16.msra.mxu0 0
    %2262 = vmatprep.subr.bf16.mxu0 0
    %2263 = vmatpush1.bf16.msra.mxu0 0
    %2264 = vmatprep.subr.bf16.mxu0 0
    %2265 = vmatpush1.bf16.msra.mxu0 0
    %2266 = vmatprep.subr.bf16.mxu0 0
    %2267 = vmatpush1.bf16.msra.mxu0 0
    %2268 = vmatprep.subr.bf16.mxu0 0
    %2269 = vmatpush1.bf16.msra.mxu0 0
    %2270 = vmatprep.subr.bf16.mxu0 0
    %2271 = vmatpush1.bf16.msra.mxu0 0
    %2272 = vmatprep.subr.bf16.mxu0 0
    %2273 = vmatpush1.bf16.msra.mxu0 0
    %2274 = vmatprep.subr.bf16.mxu0 0
    %2275 = vmatpush1.bf16.msra.mxu0 0
    %2276 = vmatprep.mubr.bf16.mxu0 0
    %2277 = vmatmul.mubr.bf16.gmra.mrb[0].mxu0 %v2239
    %v2278 = vpop.f32.mrb[0].mxu0
    %v2279 = vadd.f32 0.0, %v2278
    %v2280 = vpop.f32.mrb[0].mxu0
    %v2281 = vpop.f32.mrb[0].mxu0
    %v2282 = vpop.f32.mrb[0].mxu0
    %2283 = vdwg.mxu0
    %2284 = vrot.lane.b32.xlu0 %v1539, 48
    %v2285 = vpop.permute.xlu0 %2284
    %v2287 = vsel %vm204, %v2042, 0
    %v2290 = vsel %vm721, %v2285, 0
    %2292 = vmatprep.subr.bf16.mxu0 0
    %2293 = vmatpush1.bf16.msra.mxu0 %v2290
    %2294 = vmatprep.subr.bf16.mxu0 0
    %2295 = vmatpush1.bf16.msra.mxu0 0
    %2296 = vmatprep.subr.bf16.mxu0 0
    %2297 = vmatpush1.bf16.msra.mxu0 0
    %2298 = vmatprep.subr.bf16.mxu0 0
    %2299 = vmatpush1.bf16.msra.mxu0 0
    %2300 = vmatprep.subr.bf16.mxu0 0
    %2301 = vmatpush1.bf16.msra.mxu0 0
    %2302 = vmatprep.subr.bf16.mxu0 0
    %2303 = vmatpush1.bf16.msra.mxu0 0
    %2304 = vmatprep.subr.bf16.mxu0 0
    %2305 = vmatpush1.bf16.msra.mxu0 0
    %2306 = vmatprep.subr.bf16.mxu0 0
    %2307 = vmatpush1.bf16.msra.mxu0 0
    %2308 = vmatprep.subr.bf16.mxu0 0
    %2309 = vmatpush1.bf16.msra.mxu0 0
    %2310 = vmatprep.subr.bf16.mxu0 0
    %2311 = vmatpush1.bf16.msra.mxu0 0
    %2312 = vmatprep.subr.bf16.mxu0 0
    %2313 = vmatpush1.bf16.msra.mxu0 0
    %2314 = vmatprep.subr.bf16.mxu0 0
    %2315 = vmatpush1.bf16.msra.mxu0 0
    %2316 = vmatprep.subr.bf16.mxu0 0
    %2317 = vmatpush1.bf16.msra.mxu0 0
    %2318 = vmatprep.subr.bf16.mxu0 0
    %2319 = vmatpush1.bf16.msra.mxu0 0
    %2320 = vmatprep.subr.bf16.mxu0 0
    %2321 = vmatpush1.bf16.msra.mxu0 0
    %2322 = vmatprep.subr.bf16.mxu0 0
    %2323 = vmatpush1.bf16.msra.mxu0 0
    %2324 = vmatprep.mubr.bf16.mxu0 0
    %2325 = vmatmul.mubr.bf16.gmra.mrb[0].mxu0 %v2287
    %v2326 = vpop.f32.mrb[0].mxu0
    %v2327 = vadd.f32 0.0, %v2326
    %v2328 = vpop.f32.mrb[0].mxu0
    %v2329 = vpop.f32.mrb[0].mxu0
    %v2330 = vpop.f32.mrb[0].mxu0
    %2331 = vdwg.mxu0
    %2332 = vrot.lane.b32.xlu0 %v1538, 40
    %v2333 = vpop.permute.xlu0 %2332
    %v2335 = vsel %vm204, %v2039, 0
    %v2338 = vsel %vm721, %v2333, 0
    %2340 = vmatprep.subr.bf16.mxu0 0
    %2341 = vmatpush1.bf16.msra.mxu0 %v2338
    %2342 = vmatprep.subr.bf16.mxu0 0
    %2343 = vmatpush1.bf16.msra.mxu0 0
    %2344 = vmatprep.subr.bf16.mxu0 0
    %2345 = vmatpush1.bf16.msra.mxu0 0
    %2346 = vmatprep.subr.bf16.mxu0 0
    %2347 = vmatpush1.bf16.msra.mxu0 0
    %2348 = vmatprep.subr.bf16.mxu0 0
    %2349 = vmatpush1.bf16.msra.mxu0 0
    %2350 = vmatprep.subr.bf16.mxu0 0
    %2351 = vmatpush1.bf16.msra.mxu0 0
    %2352 = vmatprep.subr.bf16.mxu0 0
    %2353 = vmatpush1.bf16.msra.mxu0 0
    %2354 = vmatprep.subr.bf16.mxu0 0
    %2355 = vmatpush1.bf16.msra.mxu0 0
    %2356 = vmatprep.subr.bf16.mxu0 0
    %2357 = vmatpush1.bf16.msra.mxu0 0
    %2358 = vmatprep.subr.bf16.mxu0 0
    %2359 = vmatpush1.bf16.msra.mxu0 0
    %2360 = vmatprep.subr.bf16.mxu0 0
    %2361 = vmatpush1.bf16.msra.mxu0 0
    %2362 = vmatprep.subr.bf16.mxu0 0
    %2363 = vmatpush1.bf16.msra.mxu0 0
    %2364 = vmatprep.subr.bf16.mxu0 0
    %2365 = vmatpush1.bf16.msra.mxu0 0
    %2366 = vmatprep.subr.bf16.mxu0 0
    %2367 = vmatpush1.bf16.msra.mxu0 0
    %2368 = vmatprep.subr.bf16.mxu0 0
    %2369 = vmatpush1.bf16.msra.mxu0 0
    %2370 = vmatprep.subr.bf16.mxu0 0
    %2371 = vmatpush1.bf16.msra.mxu0 0
    %2372 = vmatprep.mubr.bf16.mxu0 0
    %2373 = vmatmul.mubr.bf16.gmra.mrb[0].mxu0 %v2335
    %v2374 = vpop.f32.mrb[0].mxu0
    %v2375 = vadd.f32 0.0, %v2374
    %v2376 = vpop.f32.mrb[0].mxu0
    %v2377 = vpop.f32.mrb[0].mxu0
    %v2378 = vpop.f32.mrb[0].mxu0
    %2379 = vdwg.mxu0
    %2380 = vrot.lane.b32.xlu0 %v1539, 40
    %v2381 = vpop.permute.xlu0 %2380
    %v2383 = vsel %vm204, %v2043, 0
    %v2386 = vsel %vm721, %v2381, 0
    %2388 = vmatprep.subr.bf16.mxu0 0
    %2389 = vmatpush1.bf16.msra.mxu0 %v2386
    %2390 = vmatprep.subr.bf16.mxu0 0
    %2391 = vmatpush1.bf16.msra.mxu0 0
    %2392 = vmatprep.subr.bf16.mxu0 0
    %2393 = vmatpush1.bf16.msra.mxu0 0
    %2394 = vmatprep.subr.bf16.mxu0 0
    %2395 = vmatpush1.bf16.msra.mxu0 0
    %2396 = vmatprep.subr.bf16.mxu0 0
    %2397 = vmatpush1.bf16.msra.mxu0 0
    %2398 = vmatprep.subr.bf16.mxu0 0
    %2399 = vmatpush1.bf16.msra.mxu0 0
    %2400 = vmatprep.subr.bf16.mxu0 0
    %2401 = vmatpush1.bf16.msra.mxu0 0
    %2402 = vmatprep.subr.bf16.mxu0 0
    %2403 = vmatpush1.bf16.msra.mxu0 0
    %2404 = vmatprep.subr.bf16.mxu0 0
    %2405 = vmatpush1.bf16.msra.mxu0 0
    %2406 = vmatprep.subr.bf16.mxu0 0
    %2407 = vmatpush1.bf16.msra.mxu0 0
    %2408 = vmatprep.subr.bf16.mxu0 0
    %2409 = vmatpush1.bf16.msra.mxu0 0
    %2410 = vmatprep.subr.bf16.mxu0 0
    %2411 = vmatpush1.bf16.msra.mxu0 0
    %2412 = vmatprep.subr.bf16.mxu0 0
    %2413 = vmatpush1.bf16.msra.mxu0 0
    %2414 = vmatprep.subr.bf16.mxu0 0
    %2415 = vmatpush1.bf16.msra.mxu0 0
    %2416 = vmatprep.subr.bf16.mxu0 0
    %2417 = vmatpush1.bf16.msra.mxu0 0
    %2418 = vmatprep.subr.bf16.mxu0 0
    %2419 = vmatpush1.bf16.msra.mxu0 0
    %2420 = vmatprep.mubr.bf16.mxu0 0
    %2421 = vmatmul.mubr.bf16.gmra.mrb[0].mxu0 %v2383
    %v2422 = vpop.f32.mrb[0].mxu0
    %v2423 = vadd.f32 0.0, %v2422
    %v2424 = vpop.f32.mrb[0].mxu0
    %v2425 = vpop.f32.mrb[0].mxu0
    %v2426 = vpop.f32.mrb[0].mxu0
    %2427 = vdwg.mxu0
    %2430 = vrot.lane.b32.xlu0 %v2183, 8
    %v2431 = vpop.permute.xlu0 %2430
    %2432 = vrot.lane.b32.xlu0 %v2231, 8
    %v2433 = vpop.permute.xlu0 %2432
    %2438 = vrot.lane.b32.xlu0 %v2279, 16
    %v2439 = vpop.permute.xlu0 %2438
    %2440 = vrot.lane.b32.xlu0 %v2327, 16
    %v2441 = vpop.permute.xlu0 %2440
    %2446 = vrot.lane.b32.xlu0 %v2375, 24
    %v2447 = vpop.permute.xlu0 %2446
    %2448 = vrot.lane.b32.xlu0 %v2423, 24
    %v2449 = vpop.permute.xlu0 %2448
    %v2452 = vsel %vm204, %v2087, %v2431
    %v2453 = vsel %vm204, %v2135, %v2433
    %v2454 = vsel %vm1127, %v2452, %v2439
    %v2455 = vsel %vm1127, %v2453, %v2441
    %v2456 = vsel %vm1130, %v2454, %v2447
    %v2457 = vsel %vm1130, %v2455, %v2449
    %v2458 = vpack.c.bf16 %v2457, %v2456
    %s2459 = scalar_lea.vmem %s6, 16
    %v2460 = vld [vmem:[%s2459] sm:$0xf]
    %v2461 = vld [vmem:[%s2459 + $0x4] sm:$0xf]
    %v2462 = vld [vmem:[%s2459 + $0x8] sm:$0xf]
    %v2463 = vld [vmem:[%s2459 + $0xc] sm:$0xf]
    %s2464 = scalar_lea.vmem %s7, 1
    %v2465 = vld [vmem:[%s2464] sm:$0x1]
    %v2467 = vlaneseq
    %v2468 = vshrl.u32 %v2467, 7
    %v2469 = vsub.s32 0, %v2468
    %v2470 = vrot.slane %v2465, %v2469
    %v2476 = vunpack.c.l.b16 %v2460
    %v2477 = vunpack.c.l.b16 %v2461
    %v2478 = vunpack.c.l.b16 %v2462
    %v2479 = vunpack.c.l.b16 %v2463
    %v2480 = vpack.c.b16 %v2477, %v2476
    %v2481 = vpack.c.b16 %v2479, %v2478
    %v2485 = vsel %vm59, %v2458, 0
    %2487 = vmatprep.subr.bf16.mxu0 0
    %2488 = vmatpush1.bf16.msra.mxu0 %v2480
    %2489 = vmatprep.subr.bf16.mxu0 0
    %2490 = vmatpush1.bf16.msra.mxu0 %v2481
    %2491 = vmatprep.subr.bf16.mxu0 0
    %2492 = vmatpush1.bf16.msra.mxu0 0
    %2493 = vmatprep.subr.bf16.mxu0 0
    %2494 = vmatpush1.bf16.msra.mxu0 0
    %2495 = vmatprep.subr.bf16.mxu0 0
    %2496 = vmatpush1.bf16.msra.mxu0 0
    %2497 = vmatprep.subr.bf16.mxu0 0
    %2498 = vmatpush1.bf16.msra.mxu0 0
    %2499 = vmatprep.subr.bf16.mxu0 0
    %2500 = vmatpush1.bf16.msra.mxu0 0
    %2501 = vmatprep.subr.bf16.mxu0 0
    %2502 = vmatpush1.bf16.msra.mxu0 0
    %2503 = vmatprep.subr.bf16.mxu0 0
    %2504 = vmatpush1.bf16.msra.mxu0 0
    %2505 = vmatprep.subr.bf16.mxu0 0
    %2506 = vmatpush1.bf16.msra.mxu0 0
    %2507 = vmatprep.subr.bf16.mxu0 0
    %2508 = vmatpush1.bf16.msra.mxu0 0
    %2509 = vmatprep.subr.bf16.mxu0 0
    %2510 = vmatpush1.bf16.msra.mxu0 0
    %2511 = vmatprep.subr.bf16.mxu0 0
    %2512 = vmatpush1.bf16.msra.mxu0 0
    %2513 = vmatprep.subr.bf16.mxu0 0
    %2514 = vmatpush1.bf16.msra.mxu0 0
    %2515 = vmatprep.subr.bf16.mxu0 0
    %2516 = vmatpush1.bf16.msra.mxu0 0
    %2517 = vmatprep.subr.bf16.mxu0 0
    %2518 = vmatpush1.bf16.msra.mxu0 0
    %2519 = vmatprep.mubr.bf16.mxu0 0
    %2520 = vmatmul.mubr.bf16.gmra.mrb[0].mxu0 %v2485
    %v2521 = vpop.f32.mrb[0].mxu0
    %v2522 = vadd.f32 %v2470, %v2521
    %v2523 = vpop.f32.mrb[0].mxu0
    %v2524 = vpop.f32.mrb[0].mxu0
    %v2525 = vadd.f32 %v2470, %v2524
    %v2526 = vpop.f32.mrb[0].mxu0
    %2527 = vdwg.mxu0
    %v2528 = vadd.f32 %v1462, %v2522
    %v2529 = vadd.f32 %v1463, %v2525
    %s2530 = scalar_lea.vmem %s8, 1
    %v2531 = vld [vmem:[%s2530] sm:$0x1]
    %s2532 = scalar_lea.vmem %s9, 1
    %v2533 = vld [vmem:[%s2532] sm:$0x1]
    %v2534 = vsel %vm59, %v2528, 0.0
    %2535 = vadd.xlane.f32.xlu0 %v2534
    %v2536 = vpop.xlane.xlu0 %2535
    %v2537 = vsel %vm59, %v2529, 0.0
    %2538 = vadd.xlane.f32.xlu0 %v2537
    %v2539 = vpop.xlane.xlu0 %2538
    %v2540 = vmul.f32 %v2536, %v66
    %v2541 = vmul.f32 %v2539, %v66
    %v2542 = vsub.f32 %v2528, %v2540
    %v2543 = vsub.f32 %v2529, %v2541
    %v2544 = vmul.f32 %v2542, %v2542
    %v2545 = vmul.f32 %v2543, %v2543
    %v2546 = vsel %vm59, %v2544, 0.0
    %2547 = vadd.xlane.f32.xlu0 %v2546
    %v2548 = vpop.xlane.xlu0 %2547
    %v2549 = vsel %vm59, %v2545, 0.0
    %2550 = vadd.xlane.f32.xlu0 %v2549
    %v2551 = vpop.xlane.xlu0 %2550
    %v2552 = vmul.f32 %v2548, %v66
    %v2553 = vmul.f32 %v2551, %v66
    %v2554 = vadd.f32 %v2552, 1e-12
    %v2555 = vadd.f32 %v2553, 1e-12
    %v2556 = vrsqrt.pop %v2554
    %v2557 = vrsqrt.pop %v2555
    %v2558 = vmul.f32 %v2542, %v2556
    %v2559 = vmul.f32 %v2543, %v2557
    %v2561 = vlaneseq
    %v2562 = vshrl.u32 %v2561, 7
    %v2563 = vsub.s32 0, %v2562
    %v2564 = vrot.slane %v2531, %v2563
    %v2566 = vmul.f32 %v2558, %v2564
    %v2567 = vmul.f32 %v2559, %v2564
    %v2569 = vlaneseq
    %v2570 = vshrl.u32 %v2569, 7
    %v2571 = vsub.s32 0, %v2570
    %v2572 = vrot.slane %v2533, %v2571
    %v2574 = vadd.f32 %v2566, %v2572
    %v2575 = vadd.f32 %v2567, %v2572
    %v2576 = vpack.c.bf16 %v2575, %v2574
    %s2577 = scalar_lea.vmem %s10, 16
    %v2578 = vld [vmem:[%s2577] sm:$0xf]
    %v2579 = vld [vmem:[%s2577 + $0x4] sm:$0xf]
    %v2580 = vld [vmem:[%s2577 + $0x8] sm:$0xf]
    %v2581 = vld [vmem:[%s2577 + $0xc] sm:$0xf]
    %s2582 = scalar_lea.vmem %s11, 1
    %v2583 = vld [vmem:[%s2582] sm:$0x1]
    %v2585 = vlaneseq
    %v2586 = vshrl.u32 %v2585, 7
    %v2587 = vsub.s32 0, %v2586
    %v2588 = vrot.slane %v2583, %v2587
    %v2594 = vunpack.c.l.b16 %v2578
    %v2595 = vunpack.c.l.b16 %v2579
    %v2596 = vunpack.c.l.b16 %v2580
    %v2597 = vunpack.c.l.b16 %v2581
    %v2598 = vpack.c.b16 %v2595, %v2594
    %v2599 = vpack.c.b16 %v2597, %v2596
    %v2603 = vsel %vm59, %v2576, 0
    %2605 = vmatprep.subr.bf16.mxu0 0
    %2606 = vmatpush1.bf16.msra.mxu0 %v2598
    %2607 = vmatprep.subr.bf16.mxu0 0
    %2608 = vmatpush1.bf16.msra.mxu0 %v2599
    %2609 = vmatprep.subr.bf16.mxu0 0
    %2610 = vmatpush1.bf16.msra.mxu0 0
    %2611 = vmatprep.subr.bf16.mxu0 0
    %2612 = vmatpush1.bf16.msra.mxu0 0
    %2613 = vmatprep.subr.bf16.mxu0 0
    %2614 = vmatpush1.bf16.msra.mxu0 0
    %2615 = vmatprep.subr.bf16.mxu0 0
    %2616 = vmatpush1.bf16.msra.mxu0 0
    %2617 = vmatprep.subr.bf16.mxu0 0
    %2618 = vmatpush1.bf16.msra.mxu0 0
    %2619 = vmatprep.subr.bf16.mxu0 0
    %2620 = vmatpush1.bf16.msra.mxu0 0
    %2621 = vmatprep.subr.bf16.mxu0 0
    %2622 = vmatpush1.bf16.msra.mxu0 0
    %2623 = vmatprep.subr.bf16.mxu0 0
    %2624 = vmatpush1.bf16.msra.mxu0 0
    %2625 = vmatprep.subr.bf16.mxu0 0
    %2626 = vmatpush1.bf16.msra.mxu0 0
    %2627 = vmatprep.subr.bf16.mxu0 0
    %2628 = vmatpush1.bf16.msra.mxu0 0
    %2629 = vmatprep.subr.bf16.mxu0 0
    %2630 = vmatpush1.bf16.msra.mxu0 0
    %2631 = vmatprep.subr.bf16.mxu0 0
    %2632 = vmatpush1.bf16.msra.mxu0 0
    %2633 = vmatprep.subr.bf16.mxu0 0
    %2634 = vmatpush1.bf16.msra.mxu0 0
    %2635 = vmatprep.subr.bf16.mxu0 0
    %2636 = vmatpush1.bf16.msra.mxu0 0
    %2637 = vmatprep.mubr.bf16.mxu0 0
    %2638 = vmatmul.mubr.bf16.gmra.mrb[0].mxu0 %v2603
    %v2639 = vpop.f32.mrb[0].mxu0
    %v2640 = vadd.f32 %v2588, %v2639
    %v2641 = vpop.f32.mrb[0].mxu0
    %v2642 = vpop.f32.mrb[0].mxu0
    %v2643 = vadd.f32 %v2588, %v2642
    %v2644 = vpop.f32.mrb[0].mxu0
    %2645 = vdwg.mxu0
    %v2646 = vmul.f32 %v2640, %v2640
    %v2647 = vmul.f32 %v2643, %v2643
    %v2648 = vmul.f32 %v2640, %v2646
    %v2649 = vmul.f32 %v2643, %v2647
    %v2650 = vmul.f32 %v2648, 0.044715
    %v2651 = vmul.f32 %v2649, 0.044715
    %v2652 = vadd.f32 %v2640, %v2650
    %v2653 = vadd.f32 %v2643, %v2651
    %v2654 = vmul.f32 %v2652, 0.7978846
    %v2655 = vmul.f32 %v2653, 0.7978846
    %v2656 = vtanh.pop %v2654
    %v2657 = vtanh.pop %v2655
    %v2658 = vadd.f32 %v2656, 1.0
    %v2659 = vadd.f32 %v2657, 1.0
    %v2660 = vmul.f32 %v2658, 0.5
    %v2661 = vmul.f32 %v2659, 0.5
    %v2662 = vmul.f32 %v2640, %v2660
    %v2663 = vmul.f32 %v2643, %v2661
    %v2664 = vpack.c.bf16 %v2663, %v2662
    %s2665 = scalar_lea.vmem %s12, 32
    %v2666 = vld [vmem:[%s2665] sm:$0xf]
    %v2667 = vld [vmem:[%s2665 + $0x4] sm:$0xf]
    %v2668 = vld [vmem:[%s2665 + $0x8] sm:$0xf]
    %v2669 = vld [vmem:[%s2665 + $0xc] sm:$0xf]
    %v2670 = vld [vmem:[%s2665 + $0x10] sm:$0xf]
    %v2671 = vld [vmem:[%s2665 + $0x14] sm:$0xf]
    %v2672 = vld [vmem:[%s2665 + $0x18] sm:$0xf]
    %v2673 = vld [vmem:[%s2665 + $0x1c] sm:$0xf]
    %s2674 = scalar_lea.vmem %s13, 1
    %v2675 = vld [vmem:[%s2674] sm:$0x1]
    %v2677 = vlaneseq
    %v2678 = vshrl.u32 %v2677, 7
    %v2679 = vsub.s32 0, %v2678
    %v2680 = vrot.slane %v2675, %v2679
    %v2690 = vunpack.c.l.b16 %v2666
    %v2691 = vunpack.c.l.b16 %v2667
    %v2692 = vunpack.c.l.b16 %v2668
    %v2693 = vunpack.c.l.b16 %v2669
    %v2694 = vunpack.c.l.b16 %v2670
    %v2695 = vunpack.c.l.b16 %v2671
    %v2696 = vunpack.c.l.b16 %v2672
    %v2697 = vunpack.c.l.b16 %v2673
    %v2698 = vpack.c.b16 %v2691, %v2690
    %v2699 = vpack.c.b16 %v2693, %v2692
    %v2700 = vpack.c.b16 %v2695, %v2694
    %v2701 = vpack.c.b16 %v2697, %v2696
    %v2707 = vsel %vm1373, %v2664, 0
    %2709 = vmatprep.subr.bf16.mxu0 0
    %2710 = vmatpush1.bf16.msra.mxu0 %v2698
    %2711 = vmatprep.subr.bf16.mxu0 0
    %2712 = vmatpush1.bf16.msra.mxu0 %v2699
    %2713 = vmatprep.subr.bf16.mxu0 0
    %2714 = vmatpush1.bf16.msra.mxu0 %v2700
    %2715 = vmatprep.subr.bf16.mxu0 0
    %2716 = vmatpush1.bf16.msra.mxu0 %v2701
    %2717 = vmatprep.subr.bf16.mxu0 0
    %2718 = vmatpush1.bf16.msra.mxu0 0
    %2719 = vmatprep.subr.bf16.mxu0 0
    %2720 = vmatpush1.bf16.msra.mxu0 0
    %2721 = vmatprep.subr.bf16.mxu0 0
    %2722 = vmatpush1.bf16.msra.mxu0 0
    %2723 = vmatprep.subr.bf16.mxu0 0
    %2724 = vmatpush1.bf16.msra.mxu0 0
    %2725 = vmatprep.subr.bf16.mxu0 0
    %2726 = vmatpush1.bf16.msra.mxu0 0
    %2727 = vmatprep.subr.bf16.mxu0 0
    %2728 = vmatpush1.bf16.msra.mxu0 0
    %2729 = vmatprep.subr.bf16.mxu0 0
    %2730 = vmatpush1.bf16.msra.mxu0 0
    %2731 = vmatprep.subr.bf16.mxu0 0
    %2732 = vmatpush1.bf16.msra.mxu0 0
    %2733 = vmatprep.subr.bf16.mxu0 0
    %2734 = vmatpush1.bf16.msra.mxu0 0
    %2735 = vmatprep.subr.bf16.mxu0 0
    %2736 = vmatpush1.bf16.msra.mxu0 0
    %2737 = vmatprep.subr.bf16.mxu0 0
    %2738 = vmatpush1.bf16.msra.mxu0 0
    %2739 = vmatprep.subr.bf16.mxu0 0
    %2740 = vmatpush1.bf16.msra.mxu0 0
    %2741 = vmatprep.mubr.bf16.mxu0 0
    %2742 = vmatmul.mubr.bf16.gmra.mrb[0].mxu0 %v2707
    %v2743 = vpop.f32.mrb[0].mxu0
    %v2744 = vadd.f32 %v2680, %v2743
    %v2745 = vpop.f32.mrb[0].mxu0
    %v2746 = vpop.f32.mrb[0].mxu0
    %v2747 = vadd.f32 %v2680, %v2746
    %v2748 = vpop.f32.mrb[0].mxu0
    %2749 = vdwg.mxu0
    %v2750 = vadd.f32 %v2574, %v2744
    %v2751 = vadd.f32 %v2575, %v2747
    %s2752 = scalar_lea.vmem %s14, 1
    %v2753 = vld [vmem:[%s2752] sm:$0x1]
    %s2754 = scalar_lea.vmem %s15, 1
    %v2755 = vld [vmem:[%s2754] sm:$0x1]
    %v2756 = vsel %vm59, %v2750, 0.0
    %2757 = vadd.xlane.f32.xlu0 %v2756
    %v2758 = vpop.xlane.xlu0 %2757
    %v2759 = vsel %vm59, %v2751, 0.0
    %2760 = vadd.xlane.f32.xlu0 %v2759
    %v2761 = vpop.xlane.xlu0 %2760
    %v2762 = vmul.f32 %v2758, %v66
    %v2763 = vmul.f32 %v2761, %v66
    %v2764 = vsub.f32 %v2750, %v2762
    %v2765 = vsub.f32 %v2751, %v2763
    %v2766 = vmul.f32 %v2764, %v2764
    %v2767 = vmul.f32 %v2765, %v2765
    %v2768 = vsel %vm59, %v2766, 0.0
    %2769 = vadd.xlane.f32.xlu0 %v2768
    %v2770 = vpop.xlane.xlu0 %2769
    %v2771 = vsel %vm59, %v2767, 0.0
    %2772 = vadd.xlane.f32.xlu0 %v2771
    %v2773 = vpop.xlane.xlu0 %2772
    %v2774 = vmul.f32 %v2770, %v66
    %v2775 = vmul.f32 %v2773, %v66
    %v2776 = vadd.f32 %v2774, 1e-12
    %v2777 = vadd.f32 %v2775, 1e-12
    %v2778 = vrsqrt.pop %v2776
    %v2779 = vrsqrt.pop %v2777
    %v2780 = vmul.f32 %v2764, %v2778
    %v2781 = vmul.f32 %v2765, %v2779
    %v2783 = vlaneseq
    %v2784 = vshrl.u32 %v2783, 7
    %v2785 = vsub.s32 0, %v2784
    %v2786 = vrot.slane %v2753, %v2785
    %v2788 = vmul.f32 %v2780, %v2786
    %v2789 = vmul.f32 %v2781, %v2786
    %v2791 = vlaneseq
    %v2792 = vshrl.u32 %v2791, 7
    %v2793 = vsub.s32 0, %v2792
    %v2794 = vrot.slane %v2755, %v2793
    %v2796 = vadd.f32 %v2788, %v2794
    %v2797 = vadd.f32 %v2789, %v2794
    %2798 = vst.msk [vmem:[#allocation2] sm:$0xff] %vm59, %v2796
    %2799 = vst.msk [vmem:[#allocation2 + $0x8] sm:$0xff] %vm59, %v2797
    // Predicated region
    $region66: #{bert_forward.1} parent=1 // pred_check
      _
    $region67: #{bert_forward.1} parent=1 // pred_check_branch
      %2801 = sbr.rel (0) target = $region69
    $region68: #{bert_forward.1} parent=1 // pred_region
      %s2803 = ssub.s32 256, 256
      %2804 = vsyncadd [#allocation3], %s2803
      %s2805 = sshll.u32 [#allocation2], 4
      %s2806 = int_to_ptr.vmem [resolvable:$true] %s2805
      %2811 = dma.vmem_to_hbm [thread:$0]  %s2806, 256, %s16, [#allocation3], 128, 128, 8
    $region69: #{bert_forward.1} parent=1 // pred_fallthru
      _
    // Predicated region
    $region70: #{bert_forward.1} parent=1 // pred_check
      _
    $region71: #{bert_forward.1} parent=1 // pred_check_branch
      %2813 = sbr.rel (0) target = $region73
    $region72: #{bert_forward.1} parent=1 // pred_region
      %2814 = dma.done [#allocation3], 256
    $region73: #{bert_forward.1} parent=1 // pred_fallthru
      _
    %2815 = vsyncpa [#allocation3], 1

</llo_original>
